<compile_context>
chip_gen: v6e
topology: v6e:2x2x1
jax: 0.10.0
libtpu: 0.0.40
codegen_flags: <defaults>
</compile_context>

<pallas_src>
import functools

import numpy as np
import jax
import jax.numpy as jnp
from jax.experimental import pallas as pl
from jax.experimental.pallas import tpu as pltpu


# ----------------------------------------------------------------------------
# Pallas kernel: fused QKV projection + multi-head attention + output projection
# ----------------------------------------------------------------------------
def _attention_kernel(x_ref, w1_ref, b1_ref, w2_ref, b2_ref, o_ref, *,
                      num_heads, head_dim, block_b, seq_len):
    # x_ref : (Bt, c, L)   NCHW-layout block (channels on sublanes, tokens on lanes)
    # w1_ref: (3c, c)      permuted proj1 weights, rows = [q_h0..q_hH | k.. | v..], q pre-scaled
    # b1_ref: (3c, 1)      permuted proj1 bias (column vector, q pre-scaled)
    # w2_ref: (c, c)       permuted proj2 weights (rows are head-major z features)
    # b2_ref: (1, c)
    # o_ref : (Bt, c, L)   output in channel-major layout (reshapes to NCHW for free)
    H, hd, Bt, L = num_heads, head_dim, block_b, seq_len
    c = H * hd
    cdt = x_ref.dtype

    # Loop-invariant weight loads hoisted out of the batch/head loops.
    w1t = w1_ref[...]                                   # (3c, c)
    b1c = b1_ref[...].astype(jnp.float32)               # (3c, 1)
    w2 = w2_ref[...]                                    # (c, c)
    b2r = b2_ref[...].astype(jnp.float32)               # (1, c)

    for i in range(Bt):                                  # small static unroll (Bt <= 4)
        xi = x_ref[i]                                    # (c, L) - no input transpose needed

        # Fused QKV projection, feature-major: (3c, c) @ (c, L) -> (3c, L).
        qkv_t = jnp.dot(w1t, xi, preferred_element_type=jnp.float32)
        qkv_t = (qkv_t + b1c).astype(cdt)                # (3c, L)

        # Full-width f32 accumulator for the fused per-head output projection.
        acc = jnp.zeros((L, c), dtype=jnp.float32)

        for h in range(H):                               # static unroll, H small
            # Per-head q/k/v are aligned *sublane* slices (no lane relayout).
            qh = qkv_t[h * hd:(h + 1) * hd, :]                     # (hd, L)
            kh = qkv_t[c + h * hd:c + (h + 1) * hd, :]             # (hd, L)
            vh = qkv_t[2 * c + h * hd:2 * c + (h + 1) * hd, :]     # (hd, L)

            # scores: 1/sqrt(hd) already folded into the q rows of w1t.
            qh_t = qh.T                                            # (L, hd) small XLU transpose
            s = jnp.dot(qh_t, kh, preferred_element_type=jnp.float32)   # (L, L) f32
            s = s - jnp.max(s, axis=-1, keepdims=True)
            p = jnp.exp(s)                                         # unnormalized probs (f32)
            denom = jnp.sum(p, axis=-1, keepdims=True)
            r = pl.reciprocal(denom, approx=True)                  # EUP vrcp
            r = r * (2.0 - denom * r)                              # one Newton refinement

            # PV on the unnormalized probs; normalize the (L, hd) result afterwards.
            o = jax.lax.dot_general(p.astype(cdt), vh,
                                    (((1,), (1,)), ((), ())),
                                    preferred_element_type=jnp.float32)  # (L, hd)
            o = (o * r).astype(cdt)

            # Fused output projection for this head (full c-wide f32 accumulate,
            # replaces the old z scratch + masked 8-lane stores + read-back).
            acc = acc + jnp.dot(o, w2[h * hd:(h + 1) * hd, :],
                                preferred_element_type=jnp.float32)

        out_i = acc + b2r                                          # (L, c) f32
        # Store channel-major; lane-dense whenever L >= 128.
        o_ref[i] = out_i.T.astype(o_ref.dtype)                     # (c, L)


# ----------------------------------------------------------------------------
# One-time parameter preparation (hoisted out of the per-call wrapper)
# ----------------------------------------------------------------------------
def prepare_attention_params(params, num_heads):
    """Permute + pre-scale the PyTorch-layout weights once; reuse for every forward call."""
    W1, b1, W2, b2 = params          # W1 (3c, c), b1 (3c,), W2 (c, c), b2 (c,)
    c = W2.shape[0]
    hd = c // num_heads

    # proj1: original output feature index = ci*H*3 + hi*3 + ki  (einops '(C H K)').
    # Reorder rows so the kernel sees [q_head0 | ... | q_headH-1 | k ... | v ...].
    kk, hi, ci = np.meshgrid(np.arange(3), np.arange(num_heads), np.arange(hd),
                             indexing="ij")
    perm1 = (ci * num_heads * 3 + hi * 3 + kk).reshape(-1)         # (3c,)
    w1t = W1[perm1, :]                                             # (3c, c)
    b1c = b1[perm1]

    # Fold the 1/sqrt(head_dim) attention scale into the Q rows / Q bias entries.
    scale = 1.0 / np.sqrt(hd)
    row_scale = np.concatenate([np.full((c,), scale, np.float32),
                                np.ones((2 * c,), np.float32)])
    w1t = w1t * jnp.asarray(row_scale, dtype=w1t.dtype)[:, None]
    b1c = (b1c * jnp.asarray(row_scale, dtype=b1c.dtype)).reshape(3 * c, 1)

    # proj2: original input feature index = ci*H + h (einops '(C H)').  The kernel
    # accumulates head h with rows h*hd..(h+1)*hd of w2p, so permute W2^T's rows.
    hi2, ci2 = np.meshgrid(np.arange(num_heads), np.arange(hd), indexing="ij")
    perm2 = (ci2 * num_heads + hi2).reshape(-1)                    # (c,)
    w2p = jnp.transpose(W2)[perm2, :]                              # (c, c)
    b2r = b2.reshape(1, c)
    return w1t, b1c, w2p, b2r


def _largest_divisor_at_most(n, cap):
    for d in range(min(n, cap), 0, -1):
        if n % d == 0:
            return d
    return 1


def _pick_block_b(b, L, c):
    # Rough live f32 bytes per batch element inside the kernel (qkv + scores/probs + acc/out).
    per_elem = 4 * (3 * L * c + 2 * L * L + 4 * L * c)
    budget = 8 * 1024 * 1024            # conservative: fits v7x's 64 MiB VMEM with headroom
    cap = max(1, budget // per_elem)
    cap = min(cap, 4)                   # vreg / unroll pressure cap
    if b >= 2:
        cap = min(cap, max(1, b // 2))  # >= 2 parallel grid steps so both v7x TCs get work
    # TODO(synk): prime/odd batch sizes degrade to bt=1 (perf cliff, not a correctness bug).
    return _largest_divisor_at_most(b, cap)


# ----------------------------------------------------------------------------
# Wrapper: pallas_call
# ----------------------------------------------------------------------------
def attention_forward(x, prepared_params, num_heads, dropout_prob=0.0):
    # TODO(synk): dropout not implemented in the kernel (deterministic); assumed 0.0.
    del dropout_prob
    w1t, b1c, w2p, b2r = prepared_params

    b, c, H_sp, W_sp = x.shape
    L = H_sp * W_sp
    hd = c // num_heads

    x3 = x.reshape(b, c, L)             # free: NCHW spatial collapse, no transpose / HBM pass

    bt = _pick_block_b(b, L, c)
    kernel = functools.partial(_attention_kernel, num_heads=num_heads,
                               head_dim=hd, block_b=bt, seq_len=L)

    flops = b * (2 * L * c * 3 * c + 4 * L * L * c + 2 * L * c * c)
    transcendentals = b * num_heads * L * L
    bytes_accessed = (2 * x3.size * x3.dtype.itemsize
                      + sum(int(p.size) * p.dtype.itemsize for p in prepared_params))
    cost = pl.CostEstimate(flops=int(flops),
                           transcendentals=int(transcendentals),
                           bytes_accessed=int(bytes_accessed))

    out = pl.pallas_call(
        kernel,
        out_shape=jax.ShapeDtypeStruct((b, c, L), x.dtype),
        grid_spec=pltpu.PrefetchScalarGridSpec(
            num_scalar_prefetch=0,
            grid=(b // bt,),
            in_specs=[
                pl.BlockSpec((bt, c, L), lambda i: (i, 0, 0)),
                pl.BlockSpec((3 * c, c), lambda i: (0, 0)),
                pl.BlockSpec((3 * c, 1), lambda i: (0, 0)),
                pl.BlockSpec((c, c), lambda i: (0, 0)),
                pl.BlockSpec((1, c), lambda i: (0, 0)),
            ],
            out_specs=pl.BlockSpec((bt, c, L), lambda i: (i, 0, 0)),
        ),
        compiler_params=pltpu.CompilerParams(
            dimension_semantics=("parallel",),
            vmem_limit_bytes=32 * 1024 * 1024),
        cost_estimate=cost,
    )(x3, w1t, b1c, w2p, b2r)

    return out.reshape(b, c, H_sp, W_sp)                           # free reshape back to NCHW


# ----------------------------------------------------------------------------
# Pure-JAX reference reproducing the exact PyTorch/einops semantics
# ----------------------------------------------------------------------------
def attention_reference(x, params, num_heads):
    b, c, H_sp, W_sp = x.shape
    W1, b1, W2, b2 = params
    L = H_sp * W_sp
    hd = c // num_heads

    xl = jnp.transpose(x, (0, 2, 3, 1)).reshape(b, L, c)
    y = xl @ W1.T + b1                                             # (b, L, 3c)
    y = y.reshape(b, L, hd, num_heads, 3)                          # '(C H K)'
    y = jnp.transpose(y, (4, 0, 3, 1, 2))                          # K b H L C
    q, k, v = y[0], y[1], y[2]

    s = jnp.einsum("bhlc,bhmc->bhlm", q, k) / np.sqrt(hd)
    p = jax.nn.softmax(s, axis=-1)
    o = jnp.einsum("bhlm,bhmc->bhlc", p, v)                        # b H L C

    o = jnp.transpose(o, (0, 2, 3, 1))                             # b L C H
    o = o.reshape(b, H_sp, W_sp, hd * num_heads)                   # '(C H)'
    o = o @ W2.T + b2
    return jnp.transpose(o, (0, 3, 1, 2))


if __name__ == "__main__":
    batch, channels, h, w = 2, 32, 16, 16
    num_heads = 4
    dropout_prob = 0.0

    key = jax.random.PRNGKey(0)
    kx, k1, k2, k3, k4 = jax.random.split(key, 5)

    x = jax.random.normal(kx, (batch, channels, h, w), dtype=jnp.float32)
    W1 = jax.random.normal(k1, (channels * 3, channels), dtype=jnp.float32) * 0.05
    b1 = jax.random.normal(k2, (channels * 3,), dtype=jnp.float32) * 0.05
    W2 = jax.random.normal(k3, (channels, channels), dtype=jnp.float32) * 0.05
    b2 = jax.random.normal(k4, (channels,), dtype=jnp.float32) * 0.05
    params = (W1, b1, W2, b2)

    # Hoisted, one-time weight permutation + scale folding.
    prepared = jax.tree_util.tree_map(jax.block_until_ready,
                                      prepare_attention_params(params, num_heads))

    out = attention_forward(x, prepared, num_heads, dropout_prob)
    out = jax.block_until_ready(out)

    ref = jax.block_until_ready(attention_reference(x, params, num_heads))
    assert out.shape == (batch, channels, h, w)
    np.testing.assert_allclose(np.asarray(out), np.asarray(ref),
                               rtol=1e-4, atol=1e-4)
    print("KERNEL_OK")
</pallas_src>

<mosaic_0001>
module attributes {stable_mosaic.version = 11 : i64} {
  func.func @_attention_kernel(%arg0: i32, %arg1: memref<1x32x256xf32, #tpu.memory_space<vmem>>, %arg2: memref<96x32xf32, #tpu.memory_space<vmem>>, %arg3: memref<96x1xf32, #tpu.memory_space<vmem>>, %arg4: memref<32x32xf32, #tpu.memory_space<vmem>>, %arg5: memref<1x32xf32, #tpu.memory_space<vmem>>, %arg6: memref<1x32x256xf32, #tpu.memory_space<vmem>>) attributes {dimension_semantics = [#tpu.dimension_semantics<parallel>], iteration_bounds = array<i64: 2>, scalar_prefetch = 0 : i64, scratch_operands = 0 : i64, tpu.core_type = #tpu.core_type<tc>, window_params = [{transform_indices = @transform_0, window_bounds = array<i64: 1, 32, 256>}, {pipeline_mode = #tpu.pipeline_mode<synchronous>, transform_indices = @transform_1, window_bounds = array<i64: 96, 32>}, {pipeline_mode = #tpu.pipeline_mode<synchronous>, transform_indices = @transform_2, window_bounds = array<i64: 96, 1>}, {pipeline_mode = #tpu.pipeline_mode<synchronous>, transform_indices = @transform_3, window_bounds = array<i64: 32, 32>}, {pipeline_mode = #tpu.pipeline_mode<synchronous>, transform_indices = @transform_4, window_bounds = array<i64: 1, 32>}, {transform_indices = @transform_5, window_bounds = array<i64: 1, 32, 256>}]} {
    %c0 = arith.constant 0 : index
    %c0_0 = arith.constant 0 : index
    %0 = vector.load %arg2[%c0, %c0_0] : memref<96x32xf32, #tpu.memory_space<vmem>>, vector<96x32xf32>
    %c0_1 = arith.constant 0 : index
    %c0_2 = arith.constant 0 : index
    %1 = vector.load %arg3[%c0_1, %c0_2] : memref<96x1xf32, #tpu.memory_space<vmem>>, vector<96x1xf32>
    %c0_3 = arith.constant 0 : index
    %c0_4 = arith.constant 0 : index
    %2 = vector.load %arg4[%c0_3, %c0_4] : memref<32x32xf32, #tpu.memory_space<vmem>>, vector<32x32xf32>
    %c0_5 = arith.constant 0 : index
    %c0_6 = arith.constant 0 : index
    %3 = vector.load %arg5[%c0_5, %c0_6] : memref<1x32xf32, #tpu.memory_space<vmem>>, vector<1x32xf32>
    %c0_7 = arith.constant 0 : index
    %c0_8 = arith.constant 0 : index
    %c0_9 = arith.constant 0 : index
    %4 = vector.load %arg1[%c0_7, %c0_8, %c0_9] : memref<1x32x256xf32, #tpu.memory_space<vmem>>, vector<1x32x256xf32>
    %5 = vector.shape_cast %4 : vector<1x32x256xf32> to vector<32x256xf32>
    %cst = arith.constant dense<0.000000e+00> : vector<96x256xf32>
    %6 = tpu.matmul %0, %5, %cst {dimension_numbers = #tpu.dot_dimension_numbers<[1], [0], [0], [1], [0, 0, 1, 1], [], []>} : vector<96x32xf32>, vector<32x256xf32>, vector<96x256xf32> -> vector<96x256xf32>
    %7 = vector.broadcast %1 : vector<96x1xf32> to vector<96x256xf32>
    %8 = arith.addf %6, %7 : vector<96x256xf32>
    %cst_10 = arith.constant 0.000000e+00 : f32
    %9 = vector.broadcast %cst_10 : f32 to vector<256x32xf32>
    %10 = vector.extract_strided_slice %8 {offsets = [0, 0], sizes = [8, 256], strides = [1, 1]} : vector<96x256xf32> to vector<8x256xf32>
    %11 = vector.extract_strided_slice %8 {offsets = [32, 0], sizes = [8, 256], strides = [1, 1]} : vector<96x256xf32> to vector<8x256xf32>
    %12 = vector.extract_strided_slice %8 {offsets = [64, 0], sizes = [8, 256], strides = [1, 1]} : vector<96x256xf32> to vector<8x256xf32>
    %13 = tpu.transpose %10, [1, 0] : vector<8x256xf32> -> vector<256x8xf32>
    %cst_11 = arith.constant dense<0.000000e+00> : vector<256x256xf32>
    %14 = tpu.matmul %13, %11, %cst_11 {dimension_numbers = #tpu.dot_dimension_numbers<[1], [0], [0], [1], [0, 0, 1, 1], [], []>} : vector<256x8xf32>, vector<8x256xf32>, vector<256x256xf32> -> vector<256x256xf32>
    %cst_12 = arith.constant dense<0xFF800000> : vector<256xf32>
    %15 = vector.multi_reduction <maximumf>, %14, %cst_12 [1] : vector<256x256xf32> to vector<256xf32>
    %16 = vector.shape_cast %15 : vector<256xf32> to vector<256x1xf32>
    %17 = vector.broadcast %16 : vector<256x1xf32> to vector<256x256xf32>
    %18 = arith.subf %14, %17 : vector<256x256xf32>
    %19 = math.exp %18 : vector<256x256xf32>
    %cst_13 = arith.constant dense<0.000000e+00> : vector<256xf32>
    %20 = vector.multi_reduction <add>, %19, %cst_13 [1] : vector<256x256xf32> to vector<256xf32>
    %21 = vector.shape_cast %20 : vector<256xf32> to vector<256x1xf32>
    %22 = tpu.reciprocal %21 {approx = true} : vector<256x1xf32> -> vector<256x1xf32>
    %23 = arith.mulf %21, %22 : vector<256x1xf32>
    %cst_14 = arith.constant 2.000000e+00 : f32
    %24 = vector.broadcast %cst_14 : f32 to vector<256x1xf32>
    %25 = arith.subf %24, %23 : vector<256x1xf32>
    %26 = arith.mulf %22, %25 : vector<256x1xf32>
    %cst_15 = arith.constant dense<0.000000e+00> : vector<256x8xf32>
    %27 = tpu.matmul %19, %12, %cst_15 {dimension_numbers = #tpu.dot_dimension_numbers<[1], [1], [0], [0], [0, 0, 1, 0], [], []>} : vector<256x256xf32>, vector<8x256xf32>, vector<256x8xf32> -> vector<256x8xf32>
    %28 = vector.broadcast %26 : vector<256x1xf32> to vector<256x8xf32>
    %29 = arith.mulf %27, %28 : vector<256x8xf32>
    %30 = vector.extract_strided_slice %2 {offsets = [0, 0], sizes = [8, 32], strides = [1, 1]} : vector<32x32xf32> to vector<8x32xf32>
    %cst_16 = arith.constant dense<0.000000e+00> : vector<256x32xf32>
    %31 = tpu.matmul %29, %30, %cst_16 {dimension_numbers = #tpu.dot_dimension_numbers<[1], [0], [0], [1], [0, 0, 1, 1], [], []>} : vector<256x8xf32>, vector<8x32xf32>, vector<256x32xf32> -> vector<256x32xf32>
    %32 = arith.addf %9, %31 : vector<256x32xf32>
    %33 = vector.extract_strided_slice %8 {offsets = [8, 0], sizes = [8, 256], strides = [1, 1]} : vector<96x256xf32> to vector<8x256xf32>
    %34 = vector.extract_strided_slice %8 {offsets = [40, 0], sizes = [8, 256], strides = [1, 1]} : vector<96x256xf32> to vector<8x256xf32>
    %35 = vector.extract_strided_slice %8 {offsets = [72, 0], sizes = [8, 256], strides = [1, 1]} : vector<96x256xf32> to vector<8x256xf32>
    %36 = tpu.transpose %33, [1, 0] : vector<8x256xf32> -> vector<256x8xf32>
    %cst_17 = arith.constant dense<0.000000e+00> : vector<256x256xf32>
    %37 = tpu.matmul %36, %34, %cst_17 {dimension_numbers = #tpu.dot_dimension_numbers<[1], [0], [0], [1], [0, 0, 1, 1], [], []>} : vector<256x8xf32>, vector<8x256xf32>, vector<256x256xf32> -> vector<256x256xf32>
    %cst_18 = arith.constant dense<0xFF800000> : vector<256xf32>
    %38 = vector.multi_reduction <maximumf>, %37, %cst_18 [1] : vector<256x256xf32> to vector<256xf32>
    %39 = vector.shape_cast %38 : vector<256xf32> to vector<256x1xf32>
    %40 = vector.broadcast %39 : vector<256x1xf32> to vector<256x256xf32>
    %41 = arith.subf %37, %40 : vector<256x256xf32>
    %42 = math.exp %41 : vector<256x256xf32>
    %cst_19 = arith.constant dense<0.000000e+00> : vector<256xf32>
    %43 = vector.multi_reduction <add>, %42, %cst_19 [1] : vector<256x256xf32> to vector<256xf32>
    %44 = vector.shape_cast %43 : vector<256xf32> to vector<256x1xf32>
    %45 = tpu.reciprocal %44 {approx = true} : vector<256x1xf32> -> vector<256x1xf32>
    %46 = arith.mulf %44, %45 : vector<256x1xf32>
    %cst_20 = arith.constant 2.000000e+00 : f32
    %47 = vector.broadcast %cst_20 : f32 to vector<256x1xf32>
    %48 = arith.subf %47, %46 : vector<256x1xf32>
    %49 = arith.mulf %45, %48 : vector<256x1xf32>
    %cst_21 = arith.constant dense<0.000000e+00> : vector<256x8xf32>
    %50 = tpu.matmul %42, %35, %cst_21 {dimension_numbers = #tpu.dot_dimension_numbers<[1], [1], [0], [0], [0, 0, 1, 0], [], []>} : vector<256x256xf32>, vector<8x256xf32>, vector<256x8xf32> -> vector<256x8xf32>
    %51 = vector.broadcast %49 : vector<256x1xf32> to vector<256x8xf32>
    %52 = arith.mulf %50, %51 : vector<256x8xf32>
    %53 = vector.extract_strided_slice %2 {offsets = [8, 0], sizes = [8, 32], strides = [1, 1]} : vector<32x32xf32> to vector<8x32xf32>
    %cst_22 = arith.constant dense<0.000000e+00> : vector<256x32xf32>
    %54 = tpu.matmul %52, %53, %cst_22 {dimension_numbers = #tpu.dot_dimension_numbers<[1], [0], [0], [1], [0, 0, 1, 1], [], []>} : vector<256x8xf32>, vector<8x32xf32>, vector<256x32xf32> -> vector<256x32xf32>
    %55 = arith.addf %32, %54 : vector<256x32xf32>
    %56 = vector.extract_strided_slice %8 {offsets = [16, 0], sizes = [8, 256], strides = [1, 1]} : vector<96x256xf32> to vector<8x256xf32>
    %57 = vector.extract_strided_slice %8 {offsets = [48, 0], sizes = [8, 256], strides = [1, 1]} : vector<96x256xf32> to vector<8x256xf32>
    %58 = vector.extract_strided_slice %8 {offsets = [80, 0], sizes = [8, 256], strides = [1, 1]} : vector<96x256xf32> to vector<8x256xf32>
    %59 = tpu.transpose %56, [1, 0] : vector<8x256xf32> -> vector<256x8xf32>
    %cst_23 = arith.constant dense<0.000000e+00> : vector<256x256xf32>
    %60 = tpu.matmul %59, %57, %cst_23 {dimension_numbers = #tpu.dot_dimension_numbers<[1], [0], [0], [1], [0, 0, 1, 1], [], []>} : vector<256x8xf32>, vector<8x256xf32>, vector<256x256xf32> -> vector<256x256xf32>
    %cst_24 = arith.constant dense<0xFF800000> : vector<256xf32>
    %61 = vector.multi_reduction <maximumf>, %60, %cst_24 [1] : vector<256x256xf32> to vector<256xf32>
    %62 = vector.shape_cast %61 : vector<256xf32> to vector<256x1xf32>
    %63 = vector.broadcast %62 : vector<256x1xf32> to vector<256x256xf32>
    %64 = arith.subf %60, %63 : vector<256x256xf32>
    %65 = math.exp %64 : vector<256x256xf32>
    %cst_25 = arith.constant dense<0.000000e+00> : vector<256xf32>
    %66 = vector.multi_reduction <add>, %65, %cst_25 [1] : vector<256x256xf32> to vector<256xf32>
    %67 = vector.shape_cast %66 : vector<256xf32> to vector<256x1xf32>
    %68 = tpu.reciprocal %67 {approx = true} : vector<256x1xf32> -> vector<256x1xf32>
    %69 = arith.mulf %67, %68 : vector<256x1xf32>
    %cst_26 = arith.constant 2.000000e+00 : f32
    %70 = vector.broadcast %cst_26 : f32 to vector<256x1xf32>
    %71 = arith.subf %70, %69 : vector<256x1xf32>
    %72 = arith.mulf %68, %71 : vector<256x1xf32>
    %cst_27 = arith.constant dense<0.000000e+00> : vector<256x8xf32>
    %73 = tpu.matmul %65, %58, %cst_27 {dimension_numbers = #tpu.dot_dimension_numbers<[1], [1], [0], [0], [0, 0, 1, 0], [], []>} : vector<256x256xf32>, vector<8x256xf32>, vector<256x8xf32> -> vector<256x8xf32>
    %74 = vector.broadcast %72 : vector<256x1xf32> to vector<256x8xf32>
    %75 = arith.mulf %73, %74 : vector<256x8xf32>
    %76 = vector.extract_strided_slice %2 {offsets = [16, 0], sizes = [8, 32], strides = [1, 1]} : vector<32x32xf32> to vector<8x32xf32>
    %cst_28 = arith.constant dense<0.000000e+00> : vector<256x32xf32>
    %77 = tpu.matmul %75, %76, %cst_28 {dimension_numbers = #tpu.dot_dimension_numbers<[1], [0], [0], [1], [0, 0, 1, 1], [], []>} : vector<256x8xf32>, vector<8x32xf32>, vector<256x32xf32> -> vector<256x32xf32>
    %78 = arith.addf %55, %77 : vector<256x32xf32>
    %79 = vector.extract_strided_slice %8 {offsets = [24, 0], sizes = [8, 256], strides = [1, 1]} : vector<96x256xf32> to vector<8x256xf32>
    %80 = vector.extract_strided_slice %8 {offsets = [56, 0], sizes = [8, 256], strides = [1, 1]} : vector<96x256xf32> to vector<8x256xf32>
    %81 = vector.extract_strided_slice %8 {offsets = [88, 0], sizes = [8, 256], strides = [1, 1]} : vector<96x256xf32> to vector<8x256xf32>
    %82 = tpu.transpose %79, [1, 0] : vector<8x256xf32> -> vector<256x8xf32>
    %cst_29 = arith.constant dense<0.000000e+00> : vector<256x256xf32>
    %83 = tpu.matmul %82, %80, %cst_29 {dimension_numbers = #tpu.dot_dimension_numbers<[1], [0], [0], [1], [0, 0, 1, 1], [], []>} : vector<256x8xf32>, vector<8x256xf32>, vector<256x256xf32> -> vector<256x256xf32>
    %cst_30 = arith.constant dense<0xFF800000> : vector<256xf32>
    %84 = vector.multi_reduction <maximumf>, %83, %cst_30 [1] : vector<256x256xf32> to vector<256xf32>
    %85 = vector.shape_cast %84 : vector<256xf32> to vector<256x1xf32>
    %86 = vector.broadcast %85 : vector<256x1xf32> to vector<256x256xf32>
    %87 = arith.subf %83, %86 : vector<256x256xf32>
    %88 = math.exp %87 : vector<256x256xf32>
    %cst_31 = arith.constant dense<0.000000e+00> : vector<256xf32>
    %89 = vector.multi_reduction <add>, %88, %cst_31 [1] : vector<256x256xf32> to vector<256xf32>
    %90 = vector.shape_cast %89 : vector<256xf32> to vector<256x1xf32>
    %91 = tpu.reciprocal %90 {approx = true} : vector<256x1xf32> -> vector<256x1xf32>
    %92 = arith.mulf %90, %91 : vector<256x1xf32>
    %cst_32 = arith.constant 2.000000e+00 : f32
    %93 = vector.broadcast %cst_32 : f32 to vector<256x1xf32>
    %94 = arith.subf %93, %92 : vector<256x1xf32>
    %95 = arith.mulf %91, %94 : vector<256x1xf32>
    %cst_33 = arith.constant dense<0.000000e+00> : vector<256x8xf32>
    %96 = tpu.matmul %88, %81, %cst_33 {dimension_numbers = #tpu.dot_dimension_numbers<[1], [1], [0], [0], [0, 0, 1, 0], [], []>} : vector<256x256xf32>, vector<8x256xf32>, vector<256x8xf32> -> vector<256x8xf32>
    %97 = vector.broadcast %95 : vector<256x1xf32> to vector<256x8xf32>
    %98 = arith.mulf %96, %97 : vector<256x8xf32>
    %99 = vector.extract_strided_slice %2 {offsets = [24, 0], sizes = [8, 32], strides = [1, 1]} : vector<32x32xf32> to vector<8x32xf32>
    %cst_34 = arith.constant dense<0.000000e+00> : vector<256x32xf32>
    %100 = tpu.matmul %98, %99, %cst_34 {dimension_numbers = #tpu.dot_dimension_numbers<[1], [0], [0], [1], [0, 0, 1, 1], [], []>} : vector<256x8xf32>, vector<8x32xf32>, vector<256x32xf32> -> vector<256x32xf32>
    %101 = arith.addf %78, %100 : vector<256x32xf32>
    %102 = vector.broadcast %3 : vector<1x32xf32> to vector<256x32xf32>
    %103 = arith.addf %101, %102 : vector<256x32xf32>
    %104 = tpu.transpose %103, [1, 0] : vector<256x32xf32> -> vector<32x256xf32>
    %c0_35 = arith.constant 0 : index
    %c0_36 = arith.constant 0 : index
    %c0_37 = arith.constant 0 : index
    %105 = vector.load %arg6[%c0_35, %c0_36, %c0_37] : memref<1x32x256xf32, #tpu.memory_space<vmem>>, vector<1x32x256xf32>
    %106 = vector.shape_cast %105 : vector<1x32x256xf32> to vector<32x256xf32>
    %107 = vector.shape_cast %104 : vector<32x256xf32> to vector<1x32x256xf32>
    tpu.vector_store %arg6[%c0_35, %c0_36, %c0_37], %107 {strides = array<i32>} : memref<1x32x256xf32, #tpu.memory_space<vmem>>, vector<1x32x256xf32>,
    return
  }
  func.func @transform_0(%arg0: i32) -> (i32, i32, i32) {
    %c0_i32 = arith.constant 0 : i32
    %c0_i32_0 = arith.constant 0 : i32
    %c0_i32_1 = arith.constant 0 : i32
    return %arg0, %c0_i32, %c0_i32_0 : i32, i32, i32
  }
  func.func @transform_1(%arg0: i32) -> (i32, i32) {
    %c0_i32 = arith.constant 0 : i32
    %c0_i32_0 = arith.constant 0 : i32
    %c0_i32_1 = arith.constant 0 : i32
    return %c0_i32, %c0_i32_0 : i32, i32
  }
  func.func @transform_2(%arg0: i32) -> (i32, i32) {
    %c0_i32 = arith.constant 0 : i32
    %c0_i32_0 = arith.constant 0 : i32
    %c0_i32_1 = arith.constant 0 : i32
    return %c0_i32, %c0_i32_0 : i32, i32
  }
  func.func @transform_3(%arg0: i32) -> (i32, i32) {
    %c0_i32 = arith.constant 0 : i32
    %c0_i32_0 = arith.constant 0 : i32
    %c0_i32_1 = arith.constant 0 : i32
    return %c0_i32, %c0_i32_0 : i32, i32
  }
  func.func @transform_4(%arg0: i32) -> (i32, i32) {
    %c0_i32 = arith.constant 0 : i32
    %c0_i32_0 = arith.constant 0 : i32
    %c0_i32_1 = arith.constant 0 : i32
    return %c0_i32, %c0_i32_0 : i32, i32
  }
  func.func @transform_5(%arg0: i32) -> (i32, i32, i32) {
    %c0_i32 = arith.constant 0 : i32
    %c0_i32_0 = arith.constant 0 : i32
    %c0_i32_1 = arith.constant 0 : i32
    return %arg0, %c0_i32, %c0_i32_0 : i32, i32, i32
  }
}

</mosaic_0001>

<llo_original>
// kernel: tpu_custom_call.1
$region0: #{tpu_custom_call.1}
  #allocation0 [shape = 'u32[]', space=smem, size = 0x4, offset = 0x4, fixed_abs, tag = 'smem constant byte address 0x4 - core index']
  #allocation1 [shape = 'u32[144,128]{1,0:T(1,128)}', space=vmem, size = 0x12000, scoped, tag = 'internal scratch']
  %s0 = inlined_call_operand.vmem [shape: f32[2,32,256], index: 0, kind: input, shape index: {}]
  %s1 = inlined_call_operand.vmem [shape: f32[96,32], index: 1, kind: input, shape index: {}]
  %s2 = inlined_call_operand.vmem [shape: f32[96,1], index: 2, kind: input, shape index: {}]
  %s3 = inlined_call_operand.vmem [shape: f32[32,32], index: 3, kind: input, shape index: {}]
  %s4 = inlined_call_operand.vmem [shape: f32[1,32], index: 4, kind: input, shape index: {}]
  %s5 = inlined_call_operand.hbm [shape: f32[2,32,256], index: 5, kind: output, shape index: {}]
  %s6 = sld [smem:[#allocation0]]
  $region53: #{tpu_custom_call.1} parent=0
    _
  %s8 = ssub.s32 1, %s6
  %s9 = scalar_select 0, %s8, %s6
  $region1: #{tpu_custom_call.1} parent=0
    #allocation2 [shape = 'u8[65536]{0}', space=vmem, size = 0x10000, scoped, tag = 'output window, operand 0']
    #allocation3 [shape = 's32[2]{0}', space=sflag, size = 0x8, scoped, tag = 'scoped memory for tpu_custom_call.1']
    %10 = vsyncpa [#allocation3], 0
    %s11 = scalar_lea.sflag [#allocation3], 1
    %12 = vsyncpa %s11, 0
    loop: start=0, step=1, limit=4
    $region2: #{tpu_custom_call.1} parent=1 // loop_pre_header
      _
    $region3: #{tpu_custom_call.1} parent=1 // loop_header
      %s14 = sphi 0, %s18
      %p15 = scmp.ge.s32.totalorder %s14, 4
      %s24 = sphi 0, %s26
      %s27 = sphi 0, %s24
      %s28 = sphi 0, %s27
      %s44 = sphi 0, %s28
      %s48 = sphi 0, %s48
      %s50 = sphi 0, %s48
      %s51 = sphi 0, %s50
      %s65 = sphi 0, %s51
      %s69 = sphi 0, %s69
      %s71 = sphi 0, %s69
      %s72 = sphi 0, %s71
      %s86 = sphi 0, %s72
      %s90 = sphi 0, %s90
      %s92 = sphi 0, %s90
      %s93 = sphi 0, %s92
      %s107 = sphi 0, %s93
      %s111 = sphi 0, %s111
      %s113 = sphi 0, %s111
      %s114 = sphi 0, %s113
      %s128 = sphi 0, %s114
      %s134 = sphi 0, %s136
      %s137 = sphi 0, %s134
      %s138 = sphi 0, %s137
      %s154 = sphi 0, %s138
    $region4: #{tpu_custom_call.1} parent=1 // loop_header_branch
      %17 = sbr.rel (%p15) target = $region8
    $region5: #{tpu_custom_call.1} parent=1 // loop_body
      %s19 = ssub.s32 %s14, 1
      %s20 = ssub.s32 %s14, 2
      %s21 = sadd.s32 %s14, 1
      %s22 = ssub.s32 %s14, %s21
      %p23 = scmp.eq.s32.totalorder %s22, 0
      %s25 = sadd.s32 %s24, 1
      %s26 = scalar_select %p23, %s24, %s25
      %p29 = pneg %p23
      %p30 = scmp.eq.s32.totalorder %s14, 1
      %p31 = por %p29, %p30
      %p32 = scmp.ne.s32.totalorder %s24, %s27
      %p33 = scmp.eq.s32.totalorder %s14, 0
      %p34 = por %p32, %p33
      %p35 = scmp.ne.s32.totalorder %s24, %s27
      %p36 = scmp.eq.s32.totalorder %s19, 1
      %p37 = por %p35, %p36
      %p38 = scmp.ne.s32.totalorder %s27, %s28
      %p39 = scmp.eq.s32.totalorder %s19, 0
      %p40 = por %p38, %p39
      %p41 = scmp.ne.s32.totalorder %s27, %s28
      %p42 = scmp.eq.s32.totalorder %s20, 1
      %p43 = por %p41, %p42
      %p45 = scmp.ne.s32.totalorder %s28, %s44
      %p46 = scmp.eq.s32.totalorder %s20, 0
      %p47 = por %p45, %p46
      %s49 = sadd.s32 %s48, 1
      %p52 = scmp.eq.s32.totalorder %s14, 1
      %p53 = scmp.ne.s32.totalorder %s48, %s50
      %p54 = scmp.eq.s32.totalorder %s14, 0
      %p55 = por %p53, %p54
      %p56 = scmp.ne.s32.totalorder %s48, %s50
      %p57 = scmp.eq.s32.totalorder %s19, 1
      %p58 = por %p56, %p57
      %p59 = scmp.ne.s32.totalorder %s50, %s51
      %p60 = scmp.eq.s32.totalorder %s19, 0
      %p61 = por %p59, %p60
      %p62 = scmp.ne.s32.totalorder %s50, %s51
      %p63 = scmp.eq.s32.totalorder %s20, 1
      %p64 = por %p62, %p63
      %p66 = scmp.ne.s32.totalorder %s51, %s65
      %p67 = scmp.eq.s32.totalorder %s20, 0
      %p68 = por %p66, %p67
      %s70 = sadd.s32 %s69, 1
      %p73 = scmp.eq.s32.totalorder %s14, 1
      %p74 = scmp.ne.s32.totalorder %s69, %s71
      %p75 = scmp.eq.s32.totalorder %s14, 0
      %p76 = por %p74, %p75
      %p77 = scmp.ne.s32.totalorder %s69, %s71
      %p78 = scmp.eq.s32.totalorder %s19, 1
      %p79 = por %p77, %p78
      %p80 = scmp.ne.s32.totalorder %s71, %s72
      %p81 = scmp.eq.s32.totalorder %s19, 0
      %p82 = por %p80, %p81
      %p83 = scmp.ne.s32.totalorder %s71, %s72
      %p84 = scmp.eq.s32.totalorder %s20, 1
      %p85 = por %p83, %p84
      %p87 = scmp.ne.s32.totalorder %s72, %s86
      %p88 = scmp.eq.s32.totalorder %s20, 0
      %p89 = por %p87, %p88
      %s91 = sadd.s32 %s90, 1
      %p94 = scmp.eq.s32.totalorder %s14, 1
      %p95 = scmp.ne.s32.totalorder %s90, %s92
      %p96 = scmp.eq.s32.totalorder %s14, 0
      %p97 = por %p95, %p96
      %p98 = scmp.ne.s32.totalorder %s90, %s92
      %p99 = scmp.eq.s32.totalorder %s19, 1
      %p100 = por %p98, %p99
      %p101 = scmp.ne.s32.totalorder %s92, %s93
      %p102 = scmp.eq.s32.totalorder %s19, 0
      %p103 = por %p101, %p102
      %p104 = scmp.ne.s32.totalorder %s92, %s93
      %p105 = scmp.eq.s32.totalorder %s20, 1
      %p106 = por %p104, %p105
      %p108 = scmp.ne.s32.totalorder %s93, %s107
      %p109 = scmp.eq.s32.totalorder %s20, 0
      %p110 = por %p108, %p109
      %s112 = sadd.s32 %s111, 1
      %p115 = scmp.eq.s32.totalorder %s14, 1
      %p116 = scmp.ne.s32.totalorder %s111, %s113
      %p117 = scmp.eq.s32.totalorder %s14, 0
      %p118 = por %p116, %p117
      %p119 = scmp.ne.s32.totalorder %s111, %s113
      %p120 = scmp.eq.s32.totalorder %s19, 1
      %p121 = por %p119, %p120
      %p122 = scmp.ne.s32.totalorder %s113, %s114
      %p123 = scmp.eq.s32.totalorder %s19, 0
      %p124 = por %p122, %p123
      %p125 = scmp.ne.s32.totalorder %s113, %s114
      %p126 = scmp.eq.s32.totalorder %s20, 1
      %p127 = por %p125, %p126
      %p129 = scmp.ne.s32.totalorder %s114, %s128
      %p130 = scmp.eq.s32.totalorder %s20, 0
      %p131 = por %p129, %p130
      %s132 = ssub.s32 %s14, %s21
      %p133 = scmp.eq.s32.totalorder %s132, 0
      %s135 = sadd.s32 %s134, 1
      %s136 = scalar_select %p133, %s134, %s135
      %p139 = pneg %p133
      %p140 = scmp.eq.s32.totalorder %s14, 1
      %p141 = por %p139, %p140
      %p142 = scmp.ne.s32.totalorder %s134, %s137
      %p143 = scmp.eq.s32.totalorder %s14, 0
      %p144 = por %p142, %p143
      %p145 = scmp.ne.s32.totalorder %s134, %s137
      %p146 = scmp.eq.s32.totalorder %s19, 1
      %p147 = por %p145, %p146
      %p148 = scmp.ne.s32.totalorder %s137, %s138
      %p149 = scmp.eq.s32.totalorder %s19, 0
      %p150 = por %p148, %p149
      %p151 = scmp.ne.s32.totalorder %s137, %s138
      %p152 = scmp.eq.s32.totalorder %s20, 1
      %p153 = por %p151, %p152
      %p155 = scmp.ne.s32.totalorder %s138, %s154
      %p156 = scmp.eq.s32.totalorder %s20, 0
      %p157 = por %p155, %p156
      %p158 = scmp.le.s32.totalorder 1, %s14
      %p159 = scmp.lt.s32.totalorder %s14, 3
      %p160 = pnand %p158, %p159
      %p161 = pneg %p160
      // Predicated region
      $region9: #{tpu_custom_call.1} parent=5 // pred_check
        _
      $region10: #{tpu_custom_call.1} parent=5 // pred_check_branch
        %163 = sbr.rel (%p160) target = $region12
      $region11: #{tpu_custom_call.1} parent=5 // pred_region
        %s164 = ssub.s32 %s14, 1
        // Predicated region
        $region13: #{tpu_custom_call.1} parent=11 // pred_check
          %p165 = pneg %p61
        $region14: #{tpu_custom_call.1} parent=11 // pred_check_branch
          %167 = sbr.rel (%p165) target = $region16
        $region15: #{tpu_custom_call.1} parent=11 // pred_region
          _
        $region16: #{tpu_custom_call.1} parent=11 // pred_fallthru
          _
        // Predicated region
        $region17: #{tpu_custom_call.1} parent=11 // pred_check
          %p168 = pneg %p82
        $region18: #{tpu_custom_call.1} parent=11 // pred_check_branch
          %170 = sbr.rel (%p168) target = $region20
        $region19: #{tpu_custom_call.1} parent=11 // pred_region
          _
        $region20: #{tpu_custom_call.1} parent=11 // pred_fallthru
          _
        // Predicated region
        $region21: #{tpu_custom_call.1} parent=11 // pred_check
          %p171 = pneg %p103
        $region22: #{tpu_custom_call.1} parent=11 // pred_check_branch
          %173 = sbr.rel (%p171) target = $region24
        $region23: #{tpu_custom_call.1} parent=11 // pred_region
          _
        $region24: #{tpu_custom_call.1} parent=11 // pred_fallthru
          _
        // Predicated region
        $region25: #{tpu_custom_call.1} parent=11 // pred_check
          %p174 = pneg %p124
        $region26: #{tpu_custom_call.1} parent=11 // pred_check_branch
          %176 = sbr.rel (%p174) target = $region28
        $region27: #{tpu_custom_call.1} parent=11 // pred_region
          _
        $region28: #{tpu_custom_call.1} parent=11 // pred_fallthru
          _
      $region12: #{tpu_custom_call.1} parent=5 // pred_fallthru
        _
      %p177 = scmp.lt.s32.totalorder %s14, 2
      // Predicated region
      $region29: #{tpu_custom_call.1} parent=5 // pred_check
        %p178 = pneg %p177
      $region30: #{tpu_custom_call.1} parent=5 // pred_check_branch
        %180 = sbr.rel (%p178) target = $region32
      $region31: #{tpu_custom_call.1} parent=5 // pred_region
        // Predicated region
        $region33: #{tpu_custom_call.1} parent=31 // pred_check
          %p181 = pneg %p34
        $region34: #{tpu_custom_call.1} parent=31 // pred_check_branch
          %183 = sbr.rel (%p181) target = $region36
        $region35: #{tpu_custom_call.1} parent=31 // pred_region
          %p184 = scmp.lt.s32.totalorder %s14, 1
          %s185 = scalar_select %p184, %s14, 1
          %s186 = smul.addr %s185, 8
          %s187 = smul.addr %s186, 8
          %s188 = scalar_lea.vmem %s0, %s187
        $region36: #{tpu_custom_call.1} parent=31 // pred_fallthru
          _
      $region32: #{tpu_custom_call.1} parent=5 // pred_fallthru
        _
      %p189 = scmp.le.s32.totalorder 1, %s14
      %p190 = scmp.lt.s32.totalorder %s14, 3
      %p191 = pnand %p189, %p190
      %p192 = pneg %p191
      // Predicated region
      $region37: #{tpu_custom_call.1} parent=5 // pred_check
        _
      $region38: #{tpu_custom_call.1} parent=5 // pred_check_branch
        %194 = sbr.rel (%p191) target = $region40
      $region39: #{tpu_custom_call.1} parent=5 // pred_region
        %s195 = ssub.s32 %s14, 1
        %p196 = scmp.lt.s32.totalorder %s19, 1
        %s197 = scalar_select %p196, %s19, 1
        %s198 = smul.addr %s197, 8
        %s199 = smul.addr %s198, 8
        %s200 = scalar_lea.vmem %s0, %s199
        %p201 = pneg %p40
        %p202 = pneg %p37
        %p203 = pneg %p61
        %p204 = pneg %p58
        %p205 = pneg %p82
        %p206 = pneg %p79
        %p207 = pneg %p103
        %p208 = pneg %p100
        %p209 = pneg %p124
        %p210 = pneg %p121
        %p211 = pneg %p150
        %p212 = pneg %p147
        %s213 = sand.u32 %s137, 1
        %s214 = scalar_lea.sflag [#allocation3], %s213
        %s215 = sand.u32 %s137, 1
        %s216 = smul.addr %s215, 64
        %s217 = scalar_lea.vmem [#allocation2], %s216
        %p218 = scmp.lt.s32.totalorder %s19, 1
        %s219 = scalar_select %p218, %s19, 1
        %s220 = smul.addr %s219, 8
        %s221 = smul.addr %s220, 8
        %s222 = scalar_lea.vmem %s0, %s221
        %v223 = vld [vmem:[%s1] sm:$0xff]
        %v224 = vld [vmem:[%s1 + $0x8] sm:$0xff]
        %v225 = vld [vmem:[%s1 + $0x10] sm:$0xff]
        %v226 = vld [vmem:[%s1 + $0x18] sm:$0xff]
        %v227 = vld [vmem:[%s1 + $0x20] sm:$0xff]
        %v228 = vld [vmem:[%s1 + $0x28] sm:$0xff]
        %v229 = vld [vmem:[%s1 + $0x30] sm:$0xff]
        %v230 = vld [vmem:[%s1 + $0x38] sm:$0xff]
        %v231 = vld [vmem:[%s1 + $0x40] sm:$0xff]
        %v232 = vld [vmem:[%s1 + $0x48] sm:$0xff]
        %v233 = vld [vmem:[%s1 + $0x50] sm:$0xff]
        %v234 = vld [vmem:[%s1 + $0x58] sm:$0xff]
        %v235 = vld [vmem:[%s2] sm:$0xff]
        %v236 = vld [vmem:[%s2 + $0x8] sm:$0xff]
        %v237 = vld [vmem:[%s2 + $0x10] sm:$0xff]
        %v238 = vld [vmem:[%s2 + $0x18] sm:$0xff]
        %v239 = vld [vmem:[%s2 + $0x20] sm:$0xff]
        %v240 = vld [vmem:[%s2 + $0x28] sm:$0xff]
        %v241 = vld [vmem:[%s2 + $0x30] sm:$0xff]
        %v242 = vld [vmem:[%s2 + $0x38] sm:$0xff]
        %v243 = vld [vmem:[%s2 + $0x40] sm:$0xff]
        %v244 = vld [vmem:[%s2 + $0x48] sm:$0xff]
        %v245 = vld [vmem:[%s2 + $0x50] sm:$0xff]
        %v246 = vld [vmem:[%s2 + $0x58] sm:$0xff]
        %v247 = vld [vmem:[%s3] sm:$0xff]
        %v248 = vld [vmem:[%s3 + $0x8] sm:$0xff]
        %v249 = vld [vmem:[%s3 + $0x10] sm:$0xff]
        %v250 = vld [vmem:[%s3 + $0x18] sm:$0xff]
        %v251 = vld [vmem:[%s4] sm:$0x1]
        %v252 = vld [vmem:[%s222] sm:$0xff]
        %v253 = vld [vmem:[%s222 + $0x8] sm:$0xff]
        %v254 = vld [vmem:[%s222 + $0x10] sm:$0xff]
        %v255 = vld [vmem:[%s222 + $0x18] sm:$0xff]
        %v256 = vld [vmem:[%s222 + $0x20] sm:$0xff]
        %v257 = vld [vmem:[%s222 + $0x28] sm:$0xff]
        %v258 = vld [vmem:[%s222 + $0x30] sm:$0xff]
        %v259 = vld [vmem:[%s222 + $0x38] sm:$0xff]
        %261 = vset.pattern.permute.xlu0 0
        %262 = vperm.xlu0 %261, %v235
        %v263 = vpop.permute.xlu0 %262
        %266 = vset.pattern.permute.xlu0 0
        %267 = vperm.xlu0 %266, %v236
        %v268 = vpop.permute.xlu0 %267
        %271 = vset.pattern.permute.xlu0 0
        %272 = vperm.xlu0 %271, %v237
        %v273 = vpop.permute.xlu0 %272
        %276 = vset.pattern.permute.xlu0 0
        %277 = vperm.xlu0 %276, %v238
        %v278 = vpop.permute.xlu0 %277
        %281 = vset.pattern.permute.xlu0 0
        %282 = vperm.xlu0 %281, %v239
        %v283 = vpop.permute.xlu0 %282
        %286 = vset.pattern.permute.xlu0 0
        %287 = vperm.xlu0 %286, %v240
        %v288 = vpop.permute.xlu0 %287
        %291 = vset.pattern.permute.xlu0 0
        %292 = vperm.xlu0 %291, %v241
        %v293 = vpop.permute.xlu0 %292
        %296 = vset.pattern.permute.xlu0 0
        %297 = vperm.xlu0 %296, %v242
        %v298 = vpop.permute.xlu0 %297
        %301 = vset.pattern.permute.xlu0 0
        %302 = vperm.xlu0 %301, %v243
        %v303 = vpop.permute.xlu0 %302
        %306 = vset.pattern.permute.xlu0 0
        %307 = vperm.xlu0 %306, %v244
        %v308 = vpop.permute.xlu0 %307
        %311 = vset.pattern.permute.xlu0 0
        %312 = vperm.xlu0 %311, %v245
        %v313 = vpop.permute.xlu0 %312
        %316 = vset.pattern.permute.xlu0 0
        %317 = vperm.xlu0 %316, %v246
        %v318 = vpop.permute.xlu0 %317
        %vm320 = vcmask 261120
        %v322 = vsel %vm320, %v223, 0
        %v325 = vsel %vm320, %v224, 0
        %v328 = vsel %vm320, %v225, 0
        %v331 = vsel %vm320, %v226, 0
        %v334 = vsel %vm320, %v227, 0
        %v337 = vsel %vm320, %v228, 0
        %v340 = vsel %vm320, %v229, 0
        %v343 = vsel %vm320, %v230, 0
        %v346 = vsel %vm320, %v231, 0
        %v349 = vsel %vm320, %v232, 0
        %v352 = vsel %vm320, %v233, 0
        %v355 = vsel %vm320, %v234, 0
        %357 = vmatprep.subr.mxu0 0.0
        %358 = vmatpush1.msra.mxu0 0.0
        %359 = vmatprep.subr.mxu0 0.0
        %360 = vmatpush1.msra.mxu0 0.0
        %361 = vmatprep.subr.mxu0 0.0
        %362 = vmatpush1.msra.mxu0 0.0
        %363 = vmatprep.subr.mxu0 0.0
        %364 = vmatpush1.msra.mxu0 0.0
        %365 = vmatprep.subr.mxu0 0.0
        %366 = vmatpush1.msra.mxu0 0.0
        %367 = vmatprep.subr.mxu0 0.0
        %368 = vmatpush1.msra.mxu0 0.0
        %369 = vmatprep.subr.mxu0 0.0
        %370 = vmatpush1.msra.mxu0 0.0
        %371 = vmatprep.subr.mxu0 0.0
        %372 = vmatpush1.msra.mxu0 0.0
        %373 = vmatprep.subr.mxu0 0.0
        %374 = vmatpush1.msra.mxu0 0.0
        %375 = vmatprep.subr.mxu0 0.0
        %376 = vmatpush1.msra.mxu0 0.0
        %377 = vmatprep.subr.mxu0 0.0
        %378 = vmatpush1.msra.mxu0 0.0
        %379 = vmatprep.subr.mxu0 0.0
        %380 = vmatpush1.msra.mxu0 0.0
        %381 = vmatprep.subr.mxu0 %v259
        %382 = vmatpush1.msra.mxu0 %v258
        %383 = vmatprep.subr.mxu0 %v257
        %384 = vmatpush1.msra.mxu0 %v256
        %385 = vmatprep.subr.mxu0 %v255
        %386 = vmatpush1.msra.mxu0 %v254
        %387 = vmatprep.subr.mxu0 %v253
        %388 = vmatpush1.msra.mxu0 %v252
        %389 = vmatprep.subr.mxu0 0.0
        %390 = vmatpush2.msra.mxu0 0.0
        %391 = vmatprep.subr.mxu0 0.0
        %392 = vmatpush2.msra.mxu0 0.0
        %393 = vmatprep.subr.mxu0 0.0
        %394 = vmatpush2.msra.mxu0 0.0
        %395 = vmatprep.subr.mxu0 0.0
        %396 = vmatpush2.msra.mxu0 0.0
        %397 = vmatprep.subr.mxu0 0.0
        %398 = vmatpush2.msra.mxu0 0.0
        %399 = vmatprep.subr.mxu0 0.0
        %400 = vmatpush2.msra.mxu0 0.0
        %401 = vmatprep.subr.mxu0 0.0
        %402 = vmatpush2.msra.mxu0 0.0
        %403 = vmatprep.subr.mxu0 0.0
        %404 = vmatpush2.msra.mxu0 0.0
        %405 = vmatprep.subr.mxu0 0.0
        %406 = vmatpush2.msra.mxu0 0.0
        %407 = vmatprep.subr.mxu0 0.0
        %408 = vmatpush2.msra.mxu0 0.0
        %409 = vmatprep.subr.mxu0 0.0
        %410 = vmatpush2.msra.mxu0 0.0
        %411 = vmatprep.subr.mxu0 0.0
        %412 = vmatpush2.msra.mxu0 0.0
        %413 = vmatprep.subr.mxu0 0.0
        %414 = vmatpush2.msra.mxu0 0.0
        %415 = vmatprep.subr.mxu0 0.0
        %416 = vmatpush2.msra.mxu0 0.0
        %417 = vmatprep.subr.mxu0 0.0
        %418 = vmatpush2.msra.mxu0 0.0
        %419 = vmatprep.subr.mxu0 0.0
        %420 = vmatpush2.msra.mxu0 0.0
        %421 = vmatprep.mubr.f32.mxu0 0.0
        %422 = vmatmul.mubr.f32.gmra.mxu0 %v322
        %v423 = vpop.f32.mrf.mxu0
        %v424 = vadd.f32 %v263, %v423
        %v425 = vpop.f32.mrf.mxu0
        %v426 = vadd.f32 %v263, %v425
        %427 = vmatprep.mubr.f32.mxu0 0.0
        %428 = vmatmul.mubr.f32.gmra.mxu0 %v325
        %v429 = vpop.f32.mrf.mxu0
        %v430 = vadd.f32 %v268, %v429
        %v431 = vpop.f32.mrf.mxu0
        %v432 = vadd.f32 %v268, %v431
        %433 = vmatprep.mubr.f32.mxu0 0.0
        %434 = vmatmul.mubr.f32.gmra.mxu0 %v328
        %v435 = vpop.f32.mrf.mxu0
        %v436 = vadd.f32 %v273, %v435
        %v437 = vpop.f32.mrf.mxu0
        %v438 = vadd.f32 %v273, %v437
        %439 = vmatprep.mubr.f32.mxu0 0.0
        %440 = vmatmul.mubr.f32.gmra.mxu0 %v331
        %v441 = vpop.f32.mrf.mxu0
        %v442 = vadd.f32 %v278, %v441
        %v443 = vpop.f32.mrf.mxu0
        %v444 = vadd.f32 %v278, %v443
        %445 = vmatprep.mubr.f32.mxu0 0.0
        %446 = vmatmul.mubr.f32.gmra.mxu0 %v334
        %v447 = vpop.f32.mrf.mxu0
        %v448 = vadd.f32 %v283, %v447
        %v449 = vpop.f32.mrf.mxu0
        %v450 = vadd.f32 %v283, %v449
        %451 = vmatprep.mubr.f32.mxu0 0.0
        %452 = vmatmul.mubr.f32.gmra.mxu0 %v337
        %v453 = vpop.f32.mrf.mxu0
        %v454 = vadd.f32 %v288, %v453
        %v455 = vpop.f32.mrf.mxu0
        %v456 = vadd.f32 %v288, %v455
        %457 = vmatprep.mubr.f32.mxu0 0.0
        %458 = vmatmul.mubr.f32.gmra.mxu0 %v340
        %v459 = vpop.f32.mrf.mxu0
        %v460 = vadd.f32 %v293, %v459
        %v461 = vpop.f32.mrf.mxu0
        %v462 = vadd.f32 %v293, %v461
        %463 = vmatprep.mubr.f32.mxu0 0.0
        %464 = vmatmul.mubr.f32.gmra.mxu0 %v343
        %v465 = vpop.f32.mrf.mxu0
        %v466 = vadd.f32 %v298, %v465
        %v467 = vpop.f32.mrf.mxu0
        %v468 = vadd.f32 %v298, %v467
        %469 = vmatprep.mubr.f32.mxu0 0.0
        %470 = vmatmul.mubr.f32.gmra.mxu0 %v346
        %v471 = vpop.f32.mrf.mxu0
        %v472 = vadd.f32 %v303, %v471
        %v473 = vpop.f32.mrf.mxu0
        %v474 = vadd.f32 %v303, %v473
        %475 = vmatprep.mubr.f32.mxu0 0.0
        %476 = vmatmul.mubr.f32.gmra.mxu0 %v349
        %v477 = vpop.f32.mrf.mxu0
        %v478 = vadd.f32 %v308, %v477
        %v479 = vpop.f32.mrf.mxu0
        %v480 = vadd.f32 %v308, %v479
        %481 = vmatprep.mubr.f32.mxu0 0.0
        %482 = vmatmul.mubr.f32.gmra.mxu0 %v352
        %v483 = vpop.f32.mrf.mxu0
        %v484 = vadd.f32 %v313, %v483
        %v485 = vpop.f32.mrf.mxu0
        %v486 = vadd.f32 %v313, %v485
        %487 = vmatprep.mubr.f32.mxu0 0.0
        %488 = vmatmul.mubr.f32.gmra.mxu0 %v355
        %v489 = vpop.f32.mrf.mxu0
        %v490 = vadd.f32 %v318, %v489
        %v491 = vpop.f32.mrf.mxu0
        %v492 = vadd.f32 %v318, %v491
        %493 = vdwg.mxu0
        %494 = vxpose.xlu0.b32.start [1/16] %v424, 128
        %495 = vxpose.xlu0.b32.cont [2/16] 0.0, 128
        %496 = vxpose.xlu0.b32.cont [3/16] 0.0, 128
        %497 = vxpose.xlu0.b32.cont [4/16] 0.0, 128
        %498 = vxpose.xlu0.b32.cont [5/16] 0.0, 128
        %499 = vxpose.xlu0.b32.cont [6/16] 0.0, 128
        %500 = vxpose.xlu0.b32.cont [7/16] 0.0, 128
        %501 = vxpose.xlu0.b32.cont [8/16] 0.0, 128
        %502 = vxpose.xlu0.b32.cont [9/16] 0.0, 128
        %503 = vxpose.xlu0.b32.cont [10/16] 0.0, 128
        %504 = vxpose.xlu0.b32.cont [11/16] 0.0, 128
        %505 = vxpose.xlu0.b32.cont [12/16] 0.0, 128
        %506 = vxpose.xlu0.b32.cont [13/16] 0.0, 128
        %507 = vxpose.xlu0.b32.cont [14/16] 0.0, 128
        %508 = vxpose.xlu0.b32.cont [15/16] 0.0, 128
        %509 = vxpose.xlu0.b32.end [16/16] 0.0, 128
        %v510 = vpop.trf.xlu0
        %v511 = vpop.trf.xlu0
        %v512 = vpop.trf.xlu0
        %v513 = vpop.trf.xlu0
        %v514 = vpop.trf.xlu0
        %v515 = vpop.trf.xlu0
        %v516 = vpop.trf.xlu0
        %v517 = vpop.trf.xlu0
        %v518 = vpop.trf.xlu0
        %v519 = vpop.trf.xlu0
        %v520 = vpop.trf.xlu0
        %v521 = vpop.trf.xlu0
        %v522 = vpop.trf.xlu0
        %v523 = vpop.trf.xlu0
        %v524 = vpop.trf.xlu0
        %v525 = vpop.trf.xlu0
        %526 = vxpose.xlu0.b32.start [1/16] %v426, 128
        %527 = vxpose.xlu0.b32.cont [2/16] 0.0, 128
        %528 = vxpose.xlu0.b32.cont [3/16] 0.0, 128
        %529 = vxpose.xlu0.b32.cont [4/16] 0.0, 128
        %530 = vxpose.xlu0.b32.cont [5/16] 0.0, 128
        %531 = vxpose.xlu0.b32.cont [6/16] 0.0, 128
        %532 = vxpose.xlu0.b32.cont [7/16] 0.0, 128
        %533 = vxpose.xlu0.b32.cont [8/16] 0.0, 128
        %534 = vxpose.xlu0.b32.cont [9/16] 0.0, 128
        %535 = vxpose.xlu0.b32.cont [10/16] 0.0, 128
        %536 = vxpose.xlu0.b32.cont [11/16] 0.0, 128
        %537 = vxpose.xlu0.b32.cont [12/16] 0.0, 128
        %538 = vxpose.xlu0.b32.cont [13/16] 0.0, 128
        %539 = vxpose.xlu0.b32.cont [14/16] 0.0, 128
        %540 = vxpose.xlu0.b32.cont [15/16] 0.0, 128
        %541 = vxpose.xlu0.b32.end [16/16] 0.0, 128
        %v542 = vpop.trf.xlu0
        %v543 = vpop.trf.xlu0
        %v544 = vpop.trf.xlu0
        %v545 = vpop.trf.xlu0
        %v546 = vpop.trf.xlu0
        %v547 = vpop.trf.xlu0
        %v548 = vpop.trf.xlu0
        %v549 = vpop.trf.xlu0
        %v550 = vpop.trf.xlu0
        %v551 = vpop.trf.xlu0
        %v552 = vpop.trf.xlu0
        %v553 = vpop.trf.xlu0
        %v554 = vpop.trf.xlu0
        %v555 = vpop.trf.xlu0
        %v556 = vpop.trf.xlu0
        %v557 = vpop.trf.xlu0
        %vm558 = vcmask 64512
        %v560 = vsel %vm558, %v510, 0
        %v563 = vsel %vm558, %v511, 0
        %v566 = vsel %vm558, %v512, 0
        %v569 = vsel %vm558, %v513, 0
        %v572 = vsel %vm558, %v514, 0
        %v575 = vsel %vm558, %v515, 0
        %v578 = vsel %vm558, %v516, 0
        %v581 = vsel %vm558, %v517, 0
        %v584 = vsel %vm558, %v518, 0
        %v587 = vsel %vm558, %v519, 0
        %v590 = vsel %vm558, %v520, 0
        %v593 = vsel %vm558, %v521, 0
        %v596 = vsel %vm558, %v522, 0
        %v599 = vsel %vm558, %v523, 0
        %v602 = vsel %vm558, %v524, 0
        %v605 = vsel %vm558, %v525, 0
        %v608 = vsel %vm558, %v542, 0
        %v611 = vsel %vm558, %v543, 0
        %v614 = vsel %vm558, %v544, 0
        %v617 = vsel %vm558, %v545, 0
        %v620 = vsel %vm558, %v546, 0
        %v623 = vsel %vm558, %v547, 0
        %v626 = vsel %vm558, %v548, 0
        %v629 = vsel %vm558, %v549, 0
        %v632 = vsel %vm558, %v550, 0
        %v635 = vsel %vm558, %v551, 0
        %v638 = vsel %vm558, %v552, 0
        %v641 = vsel %vm558, %v553, 0
        %v644 = vsel %vm558, %v554, 0
        %v647 = vsel %vm558, %v555, 0
        %v650 = vsel %vm558, %v556, 0
        %v653 = vsel %vm558, %v557, 0
        %655 = vmatprep.subr.mxu0 0.0
        %656 = vmatpush1.msra.mxu0 0.0
        %657 = vmatprep.subr.mxu0 0.0
        %658 = vmatpush1.msra.mxu0 0.0
        %659 = vmatprep.subr.mxu0 0.0
        %660 = vmatpush1.msra.mxu0 0.0
        %661 = vmatprep.subr.mxu0 0.0
        %662 = vmatpush1.msra.mxu0 0.0
        %663 = vmatprep.subr.mxu0 0.0
        %664 = vmatpush1.msra.mxu0 0.0
        %665 = vmatprep.subr.mxu0 0.0
        %666 = vmatpush1.msra.mxu0 0.0
        %667 = vmatprep.subr.mxu0 0.0
        %668 = vmatpush1.msra.mxu0 0.0
        %669 = vmatprep.subr.mxu0 0.0
        %670 = vmatpush1.msra.mxu0 0.0
        %671 = vmatprep.subr.mxu0 0.0
        %672 = vmatpush1.msra.mxu0 0.0
        %673 = vmatprep.subr.mxu0 0.0
        %674 = vmatpush1.msra.mxu0 0.0
        %675 = vmatprep.subr.mxu0 0.0
        %676 = vmatpush1.msra.mxu0 0.0
        %677 = vmatprep.subr.mxu0 0.0
        %678 = vmatpush1.msra.mxu0 0.0
        %679 = vmatprep.subr.mxu0 0.0
        %680 = vmatpush1.msra.mxu0 0.0
        %681 = vmatprep.subr.mxu0 0.0
        %682 = vmatpush1.msra.mxu0 0.0
        %683 = vmatprep.subr.mxu0 0.0
        %684 = vmatpush1.msra.mxu0 0.0
        %685 = vmatprep.subr.mxu0 %v450
        %686 = vmatpush1.msra.mxu0 %v448
        %687 = vmatprep.subr.mxu0 0.0
        %688 = vmatpush2.msra.mxu0 0.0
        %689 = vmatprep.subr.mxu0 0.0
        %690 = vmatpush2.msra.mxu0 0.0
        %691 = vmatprep.subr.mxu0 0.0
        %692 = vmatpush2.msra.mxu0 0.0
        %693 = vmatprep.subr.mxu0 0.0
        %694 = vmatpush2.msra.mxu0 0.0
        %695 = vmatprep.subr.mxu0 0.0
        %696 = vmatpush2.msra.mxu0 0.0
        %697 = vmatprep.subr.mxu0 0.0
        %698 = vmatpush2.msra.mxu0 0.0
        %699 = vmatprep.subr.mxu0 0.0
        %700 = vmatpush2.msra.mxu0 0.0
        %701 = vmatprep.subr.mxu0 0.0
        %702 = vmatpush2.msra.mxu0 0.0
        %703 = vmatprep.subr.mxu0 0.0
        %704 = vmatpush2.msra.mxu0 0.0
        %705 = vmatprep.subr.mxu0 0.0
        %706 = vmatpush2.msra.mxu0 0.0
        %707 = vmatprep.subr.mxu0 0.0
        %708 = vmatpush2.msra.mxu0 0.0
        %709 = vmatprep.subr.mxu0 0.0
        %710 = vmatpush2.msra.mxu0 0.0
        %711 = vmatprep.subr.mxu0 0.0
        %712 = vmatpush2.msra.mxu0 0.0
        %713 = vmatprep.subr.mxu0 0.0
        %714 = vmatpush2.msra.mxu0 0.0
        %715 = vmatprep.subr.mxu0 0.0
        %716 = vmatpush2.msra.mxu0 0.0
        %717 = vmatprep.subr.mxu0 0.0
        %718 = vmatpush2.msra.mxu0 0.0
        %719 = vmatprep.mubr.f32.mxu0 0.0
        %720 = vmatmul.mubr.f32.gmra.mxu0 %v560
        %v721 = vpop.f32.mrf.mxu0
        %v722 = vadd.f32 0.0, %v721
        %v723 = vpop.f32.mrf.mxu0
        %v724 = vadd.f32 0.0, %v723
        %725 = vmatprep.mubr.f32.mxu0 0.0
        %726 = vmatmul.mubr.f32.gmra.mxu0 %v563
        %v727 = vpop.f32.mrf.mxu0
        %v728 = vadd.f32 0.0, %v727
        %v729 = vpop.f32.mrf.mxu0
        %v730 = vadd.f32 0.0, %v729
        %731 = vmatprep.mubr.f32.mxu0 0.0
        %732 = vmatmul.mubr.f32.gmra.mxu0 %v566
        %v733 = vpop.f32.mrf.mxu0
        %v734 = vadd.f32 0.0, %v733
        %v735 = vpop.f32.mrf.mxu0
        %v736 = vadd.f32 0.0, %v735
        %737 = vmatprep.mubr.f32.mxu0 0.0
        %738 = vmatmul.mubr.f32.gmra.mxu0 %v569
        %v739 = vpop.f32.mrf.mxu0
        %v740 = vadd.f32 0.0, %v739
        %v741 = vpop.f32.mrf.mxu0
        %v742 = vadd.f32 0.0, %v741
        %743 = vmatprep.mubr.f32.mxu0 0.0
        %744 = vmatmul.mubr.f32.gmra.mxu0 %v572
        %v745 = vpop.f32.mrf.mxu0
        %v746 = vadd.f32 0.0, %v745
        %v747 = vpop.f32.mrf.mxu0
        %v748 = vadd.f32 0.0, %v747
        %749 = vmatprep.mubr.f32.mxu0 0.0
        %750 = vmatmul.mubr.f32.gmra.mxu0 %v575
        %v751 = vpop.f32.mrf.mxu0
        %v752 = vadd.f32 0.0, %v751
        %v753 = vpop.f32.mrf.mxu0
        %v754 = vadd.f32 0.0, %v753
        %755 = vmatprep.mubr.f32.mxu0 0.0
        %756 = vmatmul.mubr.f32.gmra.mxu0 %v578
        %v757 = vpop.f32.mrf.mxu0
        %v758 = vadd.f32 0.0, %v757
        %v759 = vpop.f32.mrf.mxu0
        %v760 = vadd.f32 0.0, %v759
        %761 = vmatprep.mubr.f32.mxu0 0.0
        %762 = vmatmul.mubr.f32.gmra.mxu0 %v581
        %v763 = vpop.f32.mrf.mxu0
        %v764 = vadd.f32 0.0, %v763
        %v765 = vpop.f32.mrf.mxu0
        %v766 = vadd.f32 0.0, %v765
        %767 = vmatprep.mubr.f32.mxu0 0.0
        %768 = vmatmul.mubr.f32.gmra.mxu0 %v584
        %v769 = vpop.f32.mrf.mxu0
        %v770 = vadd.f32 0.0, %v769
        %v771 = vpop.f32.mrf.mxu0
        %v772 = vadd.f32 0.0, %v771
        %773 = vmatprep.mubr.f32.mxu0 0.0
        %774 = vmatmul.mubr.f32.gmra.mxu0 %v587
        %v775 = vpop.f32.mrf.mxu0
        %v776 = vadd.f32 0.0, %v775
        %v777 = vpop.f32.mrf.mxu0
        %v778 = vadd.f32 0.0, %v777
        %779 = vmatprep.mubr.f32.mxu0 0.0
        %780 = vmatmul.mubr.f32.gmra.mxu0 %v590
        %v781 = vpop.f32.mrf.mxu0
        %v782 = vadd.f32 0.0, %v781
        %v783 = vpop.f32.mrf.mxu0
        %v784 = vadd.f32 0.0, %v783
        %785 = vmatprep.mubr.f32.mxu0 0.0
        %786 = vmatmul.mubr.f32.gmra.mxu0 %v593
        %v787 = vpop.f32.mrf.mxu0
        %v788 = vadd.f32 0.0, %v787
        %v789 = vpop.f32.mrf.mxu0
        %v790 = vadd.f32 0.0, %v789
        %791 = vmatprep.mubr.f32.mxu0 0.0
        %792 = vmatmul.mubr.f32.gmra.mxu0 %v596
        %v793 = vpop.f32.mrf.mxu0
        %v794 = vadd.f32 0.0, %v793
        %v795 = vpop.f32.mrf.mxu0
        %v796 = vadd.f32 0.0, %v795
        %797 = vmatprep.mubr.f32.mxu0 0.0
        %798 = vmatmul.mubr.f32.gmra.mxu0 %v599
        %v799 = vpop.f32.mrf.mxu0
        %v800 = vadd.f32 0.0, %v799
        %v801 = vpop.f32.mrf.mxu0
        %v802 = vadd.f32 0.0, %v801
        %803 = vmatprep.mubr.f32.mxu0 0.0
        %804 = vmatmul.mubr.f32.gmra.mxu0 %v602
        %v805 = vpop.f32.mrf.mxu0
        %v806 = vadd.f32 0.0, %v805
        %v807 = vpop.f32.mrf.mxu0
        %v808 = vadd.f32 0.0, %v807
        %809 = vmatprep.mubr.f32.mxu0 0.0
        %810 = vmatmul.mubr.f32.gmra.mxu0 %v605
        %v811 = vpop.f32.mrf.mxu0
        %v812 = vadd.f32 0.0, %v811
        %v813 = vpop.f32.mrf.mxu0
        %v814 = vadd.f32 0.0, %v813
        %815 = vmatprep.mubr.f32.mxu0 0.0
        %816 = vmatmul.mubr.f32.gmra.mxu0 %v608
        %v817 = vpop.f32.mrf.mxu0
        %v818 = vadd.f32 0.0, %v817
        %v819 = vpop.f32.mrf.mxu0
        %v820 = vadd.f32 0.0, %v819
        %821 = vmatprep.mubr.f32.mxu0 0.0
        %822 = vmatmul.mubr.f32.gmra.mxu0 %v611
        %v823 = vpop.f32.mrf.mxu0
        %v824 = vadd.f32 0.0, %v823
        %v825 = vpop.f32.mrf.mxu0
        %v826 = vadd.f32 0.0, %v825
        %827 = vmatprep.mubr.f32.mxu0 0.0
        %828 = vmatmul.mubr.f32.gmra.mxu0 %v614
        %v829 = vpop.f32.mrf.mxu0
        %v830 = vadd.f32 0.0, %v829
        %v831 = vpop.f32.mrf.mxu0
        %v832 = vadd.f32 0.0, %v831
        %833 = vmatprep.mubr.f32.mxu0 0.0
        %834 = vmatmul.mubr.f32.gmra.mxu0 %v617
        %v835 = vpop.f32.mrf.mxu0
        %v836 = vadd.f32 0.0, %v835
        %v837 = vpop.f32.mrf.mxu0
        %v838 = vadd.f32 0.0, %v837
        %839 = vmatprep.mubr.f32.mxu0 0.0
        %840 = vmatmul.mubr.f32.gmra.mxu0 %v620
        %v841 = vpop.f32.mrf.mxu0
        %v842 = vadd.f32 0.0, %v841
        %v843 = vpop.f32.mrf.mxu0
        %v844 = vadd.f32 0.0, %v843
        %845 = vmatprep.mubr.f32.mxu0 0.0
        %846 = vmatmul.mubr.f32.gmra.mxu0 %v623
        %v847 = vpop.f32.mrf.mxu0
        %v848 = vadd.f32 0.0, %v847
        %v849 = vpop.f32.mrf.mxu0
        %v850 = vadd.f32 0.0, %v849
        %851 = vmatprep.mubr.f32.mxu0 0.0
        %852 = vmatmul.mubr.f32.gmra.mxu0 %v626
        %v853 = vpop.f32.mrf.mxu0
        %v854 = vadd.f32 0.0, %v853
        %v855 = vpop.f32.mrf.mxu0
        %v856 = vadd.f32 0.0, %v855
        %857 = vmatprep.mubr.f32.mxu0 0.0
        %858 = vmatmul.mubr.f32.gmra.mxu0 %v629
        %v859 = vpop.f32.mrf.mxu0
        %v860 = vadd.f32 0.0, %v859
        %v861 = vpop.f32.mrf.mxu0
        %v862 = vadd.f32 0.0, %v861
        %863 = vmatprep.mubr.f32.mxu0 0.0
        %864 = vmatmul.mubr.f32.gmra.mxu0 %v632
        %v865 = vpop.f32.mrf.mxu0
        %v866 = vadd.f32 0.0, %v865
        %v867 = vpop.f32.mrf.mxu0
        %v868 = vadd.f32 0.0, %v867
        %869 = vmatprep.mubr.f32.mxu0 0.0
        %870 = vmatmul.mubr.f32.gmra.mxu0 %v635
        %v871 = vpop.f32.mrf.mxu0
        %v872 = vadd.f32 0.0, %v871
        %v873 = vpop.f32.mrf.mxu0
        %v874 = vadd.f32 0.0, %v873
        %875 = vmatprep.mubr.f32.mxu0 0.0
        %876 = vmatmul.mubr.f32.gmra.mxu0 %v638
        %v877 = vpop.f32.mrf.mxu0
        %v878 = vadd.f32 0.0, %v877
        %v879 = vpop.f32.mrf.mxu0
        %v880 = vadd.f32 0.0, %v879
        %881 = vmatprep.mubr.f32.mxu0 0.0
        %882 = vmatmul.mubr.f32.gmra.mxu0 %v641
        %v883 = vpop.f32.mrf.mxu0
        %v884 = vadd.f32 0.0, %v883
        %v885 = vpop.f32.mrf.mxu0
        %v886 = vadd.f32 0.0, %v885
        %887 = vmatprep.mubr.f32.mxu0 0.0
        %888 = vmatmul.mubr.f32.gmra.mxu0 %v644
        %v889 = vpop.f32.mrf.mxu0
        %v890 = vadd.f32 0.0, %v889
        %v891 = vpop.f32.mrf.mxu0
        %v892 = vadd.f32 0.0, %v891
        %893 = vmatprep.mubr.f32.mxu0 0.0
        %894 = vmatmul.mubr.f32.gmra.mxu0 %v647
        %v895 = vpop.f32.mrf.mxu0
        %v896 = vadd.f32 0.0, %v895
        %v897 = vpop.f32.mrf.mxu0
        %v898 = vadd.f32 0.0, %v897
        %899 = vmatprep.mubr.f32.mxu0 0.0
        %900 = vmatmul.mubr.f32.gmra.mxu0 %v650
        %v901 = vpop.f32.mrf.mxu0
        %v902 = vadd.f32 0.0, %v901
        %v903 = vpop.f32.mrf.mxu0
        %v904 = vadd.f32 0.0, %v903
        %905 = vmatprep.mubr.f32.mxu0 0.0
        %906 = vmatmul.mubr.f32.gmra.mxu0 %v653
        %v907 = vpop.f32.mrf.mxu0
        %v908 = vadd.f32 0.0, %v907
        %v909 = vpop.f32.mrf.mxu0
        %v910 = vadd.f32 0.0, %v909
        %911 = vdwg.mxu0
        %v912 = vmax.f32 %v722, %v724
        %913 = vmax.xlane.f32.xlu0 %v912
        %v914 = vpop.xlane.xlu0 %913
        %v915 = vmax.f32 %v728, %v730
        %916 = vmax.xlane.f32.xlu0 %v915
        %v917 = vpop.xlane.xlu0 %916
        %v918 = vmax.f32 %v734, %v736
        %919 = vmax.xlane.f32.xlu0 %v918
        %v920 = vpop.xlane.xlu0 %919
        %v921 = vmax.f32 %v740, %v742
        %922 = vmax.xlane.f32.xlu0 %v921
        %v923 = vpop.xlane.xlu0 %922
        %v924 = vmax.f32 %v746, %v748
        %925 = vmax.xlane.f32.xlu0 %v924
        %v926 = vpop.xlane.xlu0 %925
        %v927 = vmax.f32 %v752, %v754
        %928 = vmax.xlane.f32.xlu0 %v927
        %v929 = vpop.xlane.xlu0 %928
        %v930 = vmax.f32 %v758, %v760
        %931 = vmax.xlane.f32.xlu0 %v930
        %v932 = vpop.xlane.xlu0 %931
        %v933 = vmax.f32 %v764, %v766
        %934 = vmax.xlane.f32.xlu0 %v933
        %v935 = vpop.xlane.xlu0 %934
        %v936 = vmax.f32 %v770, %v772
        %937 = vmax.xlane.f32.xlu0 %v936
        %v938 = vpop.xlane.xlu0 %937
        %v939 = vmax.f32 %v776, %v778
        %940 = vmax.xlane.f32.xlu0 %v939
        %v941 = vpop.xlane.xlu0 %940
        %v942 = vmax.f32 %v782, %v784
        %943 = vmax.xlane.f32.xlu0 %v942
        %v944 = vpop.xlane.xlu0 %943
        %v945 = vmax.f32 %v788, %v790
        %946 = vmax.xlane.f32.xlu0 %v945
        %v947 = vpop.xlane.xlu0 %946
        %v948 = vmax.f32 %v794, %v796
        %949 = vmax.xlane.f32.xlu0 %v948
        %v950 = vpop.xlane.xlu0 %949
        %v951 = vmax.f32 %v800, %v802
        %952 = vmax.xlane.f32.xlu0 %v951
        %v953 = vpop.xlane.xlu0 %952
        %v954 = vmax.f32 %v806, %v808
        %955 = vmax.xlane.f32.xlu0 %v954
        %v956 = vpop.xlane.xlu0 %955
        %v957 = vmax.f32 %v812, %v814
        %958 = vmax.xlane.f32.xlu0 %v957
        %v959 = vpop.xlane.xlu0 %958
        %v960 = vmax.f32 %v818, %v820
        %961 = vmax.xlane.f32.xlu0 %v960
        %v962 = vpop.xlane.xlu0 %961
        %v963 = vmax.f32 %v824, %v826
        %964 = vmax.xlane.f32.xlu0 %v963
        %v965 = vpop.xlane.xlu0 %964
        %v966 = vmax.f32 %v830, %v832
        %967 = vmax.xlane.f32.xlu0 %v966
        %v968 = vpop.xlane.xlu0 %967
        %v969 = vmax.f32 %v836, %v838
        %970 = vmax.xlane.f32.xlu0 %v969
        %v971 = vpop.xlane.xlu0 %970
        %v972 = vmax.f32 %v842, %v844
        %973 = vmax.xlane.f32.xlu0 %v972
        %v974 = vpop.xlane.xlu0 %973
        %v975 = vmax.f32 %v848, %v850
        %976 = vmax.xlane.f32.xlu0 %v975
        %v977 = vpop.xlane.xlu0 %976
        %v978 = vmax.f32 %v854, %v856
        %979 = vmax.xlane.f32.xlu0 %v978
        %v980 = vpop.xlane.xlu0 %979
        %v981 = vmax.f32 %v860, %v862
        %982 = vmax.xlane.f32.xlu0 %v981
        %v983 = vpop.xlane.xlu0 %982
        %v984 = vmax.f32 %v866, %v868
        %985 = vmax.xlane.f32.xlu0 %v984
        %v986 = vpop.xlane.xlu0 %985
        %v987 = vmax.f32 %v872, %v874
        %988 = vmax.xlane.f32.xlu0 %v987
        %v989 = vpop.xlane.xlu0 %988
        %v990 = vmax.f32 %v878, %v880
        %991 = vmax.xlane.f32.xlu0 %v990
        %v992 = vpop.xlane.xlu0 %991
        %v993 = vmax.f32 %v884, %v886
        %994 = vmax.xlane.f32.xlu0 %v993
        %v995 = vpop.xlane.xlu0 %994
        %v996 = vmax.f32 %v890, %v892
        %997 = vmax.xlane.f32.xlu0 %v996
        %v998 = vpop.xlane.xlu0 %997
        %v999 = vmax.f32 %v896, %v898
        %1000 = vmax.xlane.f32.xlu0 %v999
        %v1001 = vpop.xlane.xlu0 %1000
        %v1002 = vmax.f32 %v902, %v904
        %1003 = vmax.xlane.f32.xlu0 %v1002
        %v1004 = vpop.xlane.xlu0 %1003
        %v1005 = vmax.f32 %v908, %v910
        %1006 = vmax.xlane.f32.xlu0 %v1005
        %v1007 = vpop.xlane.xlu0 %1006
        %v1008 = vsub.f32 %v722, %v914
        %v1009 = vsub.f32 %v724, %v914
        %v1010 = vsub.f32 %v728, %v917
        %v1011 = vsub.f32 %v730, %v917
        %v1012 = vsub.f32 %v734, %v920
        %v1013 = vsub.f32 %v736, %v920
        %v1014 = vsub.f32 %v740, %v923
        %v1015 = vsub.f32 %v742, %v923
        %v1016 = vsub.f32 %v746, %v926
        %v1017 = vsub.f32 %v748, %v926
        %v1018 = vsub.f32 %v752, %v929
        %v1019 = vsub.f32 %v754, %v929
        %v1020 = vsub.f32 %v758, %v932
        %v1021 = vsub.f32 %v760, %v932
        %v1022 = vsub.f32 %v764, %v935
        %v1023 = vsub.f32 %v766, %v935
        %v1024 = vsub.f32 %v770, %v938
        %v1025 = vsub.f32 %v772, %v938
        %v1026 = vsub.f32 %v776, %v941
        %v1027 = vsub.f32 %v778, %v941
        %v1028 = vsub.f32 %v782, %v944
        %v1029 = vsub.f32 %v784, %v944
        %v1030 = vsub.f32 %v788, %v947
        %v1031 = vsub.f32 %v790, %v947
        %v1032 = vsub.f32 %v794, %v950
        %v1033 = vsub.f32 %v796, %v950
        %v1034 = vsub.f32 %v800, %v953
        %v1035 = vsub.f32 %v802, %v953
        %v1036 = vsub.f32 %v806, %v956
        %v1037 = vsub.f32 %v808, %v956
        %v1038 = vsub.f32 %v812, %v959
        %v1039 = vsub.f32 %v814, %v959
        %v1040 = vsub.f32 %v818, %v962
        %v1041 = vsub.f32 %v820, %v962
        %v1042 = vsub.f32 %v824, %v965
        %v1043 = vsub.f32 %v826, %v965
        %v1044 = vsub.f32 %v830, %v968
        %v1045 = vsub.f32 %v832, %v968
        %v1046 = vsub.f32 %v836, %v971
        %v1047 = vsub.f32 %v838, %v971
        %v1048 = vsub.f32 %v842, %v974
        %v1049 = vsub.f32 %v844, %v974
        %v1050 = vsub.f32 %v848, %v977
        %v1051 = vsub.f32 %v850, %v977
        %v1052 = vsub.f32 %v854, %v980
        %v1053 = vsub.f32 %v856, %v980
        %v1054 = vsub.f32 %v860, %v983
        %v1055 = vsub.f32 %v862, %v983
        %v1056 = vsub.f32 %v866, %v986
        %v1057 = vsub.f32 %v868, %v986
        %v1058 = vsub.f32 %v872, %v989
        %v1059 = vsub.f32 %v874, %v989
        %v1060 = vsub.f32 %v878, %v992
        %v1061 = vsub.f32 %v880, %v992
        %v1062 = vsub.f32 %v884, %v995
        %v1063 = vsub.f32 %v886, %v995
        %v1064 = vsub.f32 %v890, %v998
        %v1065 = vsub.f32 %v892, %v998
        %v1066 = vsub.f32 %v896, %v1001
        %v1067 = vsub.f32 %v898, %v1001
        %v1068 = vsub.f32 %v902, %v1004
        %v1069 = vsub.f32 %v904, %v1004
        %v1070 = vsub.f32 %v908, %v1007
        %v1071 = vsub.f32 %v910, %v1007
        %v1072 = vmul.f32 %v1008, 1.442695
        %v1073 = vpow.pop %v1072
        %v1074 = vmul.f32 %v1009, 1.442695
        %v1075 = vpow.pop %v1074
        %v1076 = vmul.f32 %v1010, 1.442695
        %v1077 = vpow.pop %v1076
        %v1078 = vmul.f32 %v1011, 1.442695
        %v1079 = vpow.pop %v1078
        %v1080 = vmul.f32 %v1012, 1.442695
        %v1081 = vpow.pop %v1080
        %v1082 = vmul.f32 %v1013, 1.442695
        %v1083 = vpow.pop %v1082
        %v1084 = vmul.f32 %v1014, 1.442695
        %v1085 = vpow.pop %v1084
        %v1086 = vmul.f32 %v1015, 1.442695
        %v1087 = vpow.pop %v1086
        %v1088 = vmul.f32 %v1016, 1.442695
        %v1089 = vpow.pop %v1088
        %v1090 = vmul.f32 %v1017, 1.442695
        %v1091 = vpow.pop %v1090
        %v1092 = vmul.f32 %v1018, 1.442695
        %v1093 = vpow.pop %v1092
        %v1094 = vmul.f32 %v1019, 1.442695
        %v1095 = vpow.pop %v1094
        %v1096 = vmul.f32 %v1020, 1.442695
        %v1097 = vpow.pop %v1096
        %v1098 = vmul.f32 %v1021, 1.442695
        %v1099 = vpow.pop %v1098
        %v1100 = vmul.f32 %v1022, 1.442695
        %v1101 = vpow.pop %v1100
        %v1102 = vmul.f32 %v1023, 1.442695
        %v1103 = vpow.pop %v1102
        %v1104 = vmul.f32 %v1024, 1.442695
        %v1105 = vpow.pop %v1104
        %v1106 = vmul.f32 %v1025, 1.442695
        %v1107 = vpow.pop %v1106
        %v1108 = vmul.f32 %v1026, 1.442695
        %v1109 = vpow.pop %v1108
        %v1110 = vmul.f32 %v1027, 1.442695
        %v1111 = vpow.pop %v1110
        %v1112 = vmul.f32 %v1028, 1.442695
        %v1113 = vpow.pop %v1112
        %v1114 = vmul.f32 %v1029, 1.442695
        %v1115 = vpow.pop %v1114
        %v1116 = vmul.f32 %v1030, 1.442695
        %v1117 = vpow.pop %v1116
        %v1118 = vmul.f32 %v1031, 1.442695
        %v1119 = vpow.pop %v1118
        %v1120 = vmul.f32 %v1032, 1.442695
        %v1121 = vpow.pop %v1120
        %v1122 = vmul.f32 %v1033, 1.442695
        %v1123 = vpow.pop %v1122
        %v1124 = vmul.f32 %v1034, 1.442695
        %v1125 = vpow.pop %v1124
        %v1126 = vmul.f32 %v1035, 1.442695
        %v1127 = vpow.pop %v1126
        %v1128 = vmul.f32 %v1036, 1.442695
        %v1129 = vpow.pop %v1128
        %v1130 = vmul.f32 %v1037, 1.442695
        %v1131 = vpow.pop %v1130
        %v1132 = vmul.f32 %v1038, 1.442695
        %v1133 = vpow.pop %v1132
        %v1134 = vmul.f32 %v1039, 1.442695
        %v1135 = vpow.pop %v1134
        %v1136 = vmul.f32 %v1040, 1.442695
        %v1137 = vpow.pop %v1136
        %v1138 = vmul.f32 %v1041, 1.442695
        %v1139 = vpow.pop %v1138
        %v1140 = vmul.f32 %v1042, 1.442695
        %v1141 = vpow.pop %v1140
        %v1142 = vmul.f32 %v1043, 1.442695
        %v1143 = vpow.pop %v1142
        %v1144 = vmul.f32 %v1044, 1.442695
        %v1145 = vpow.pop %v1144
        %v1146 = vmul.f32 %v1045, 1.442695
        %v1147 = vpow.pop %v1146
        %v1148 = vmul.f32 %v1046, 1.442695
        %v1149 = vpow.pop %v1148
        %v1150 = vmul.f32 %v1047, 1.442695
        %v1151 = vpow.pop %v1150
        %v1152 = vmul.f32 %v1048, 1.442695
        %v1153 = vpow.pop %v1152
        %v1154 = vmul.f32 %v1049, 1.442695
        %v1155 = vpow.pop %v1154
        %v1156 = vmul.f32 %v1050, 1.442695
        %v1157 = vpow.pop %v1156
        %v1158 = vmul.f32 %v1051, 1.442695
        %v1159 = vpow.pop %v1158
        %v1160 = vmul.f32 %v1052, 1.442695
        %v1161 = vpow.pop %v1160
        %v1162 = vmul.f32 %v1053, 1.442695
        %v1163 = vpow.pop %v1162
        %v1164 = vmul.f32 %v1054, 1.442695
        %v1165 = vpow.pop %v1164
        %v1166 = vmul.f32 %v1055, 1.442695
        %v1167 = vpow.pop %v1166
        %v1168 = vmul.f32 %v1056, 1.442695
        %v1169 = vpow.pop %v1168
        %v1170 = vmul.f32 %v1057, 1.442695
        %v1171 = vpow.pop %v1170
        %v1172 = vmul.f32 %v1058, 1.442695
        %v1173 = vpow.pop %v1172
        %v1174 = vmul.f32 %v1059, 1.442695
        %v1175 = vpow.pop %v1174
        %v1176 = vmul.f32 %v1060, 1.442695
        %v1177 = vpow.pop %v1176
        %v1178 = vmul.f32 %v1061, 1.442695
        %v1179 = vpow.pop %v1178
        %v1180 = vmul.f32 %v1062, 1.442695
        %v1181 = vpow.pop %v1180
        %v1182 = vmul.f32 %v1063, 1.442695
        %v1183 = vpow.pop %v1182
        %v1184 = vmul.f32 %v1064, 1.442695
        %v1185 = vpow.pop %v1184
        %v1186 = vmul.f32 %v1065, 1.442695
        %v1187 = vpow.pop %v1186
        %v1188 = vmul.f32 %v1066, 1.442695
        %v1189 = vpow.pop %v1188
        %v1190 = vmul.f32 %v1067, 1.442695
        %v1191 = vpow.pop %v1190
        %v1192 = vmul.f32 %v1068, 1.442695
        %v1193 = vpow.pop %v1192
        %v1194 = vmul.f32 %v1069, 1.442695
        %v1195 = vpow.pop %v1194
        %v1196 = vmul.f32 %v1070, 1.442695
        %v1197 = vpow.pop %v1196
        %v1198 = vmul.f32 %v1071, 1.442695
        %v1199 = vpow.pop %v1198
        %v1200 = vadd.f32 %v1073, %v1075
        %1201 = vadd.xlane.f32.xlu0 %v1200
        %v1202 = vpop.xlane.xlu0 %1201
        %v1203 = vadd.f32 %v1077, %v1079
        %1204 = vadd.xlane.f32.xlu0 %v1203
        %v1205 = vpop.xlane.xlu0 %1204
        %v1206 = vadd.f32 %v1081, %v1083
        %1207 = vadd.xlane.f32.xlu0 %v1206
        %v1208 = vpop.xlane.xlu0 %1207
        %v1209 = vadd.f32 %v1085, %v1087
        %1210 = vadd.xlane.f32.xlu0 %v1209
        %v1211 = vpop.xlane.xlu0 %1210
        %v1212 = vadd.f32 %v1089, %v1091
        %1213 = vadd.xlane.f32.xlu0 %v1212
        %v1214 = vpop.xlane.xlu0 %1213
        %v1215 = vadd.f32 %v1093, %v1095
        %1216 = vadd.xlane.f32.xlu0 %v1215
        %v1217 = vpop.xlane.xlu0 %1216
        %v1218 = vadd.f32 %v1097, %v1099
        %1219 = vadd.xlane.f32.xlu0 %v1218
        %v1220 = vpop.xlane.xlu0 %1219
        %v1221 = vadd.f32 %v1101, %v1103
        %1222 = vadd.xlane.f32.xlu0 %v1221
        %v1223 = vpop.xlane.xlu0 %1222
        %v1224 = vadd.f32 %v1105, %v1107
        %1225 = vadd.xlane.f32.xlu0 %v1224
        %v1226 = vpop.xlane.xlu0 %1225
        %v1227 = vadd.f32 %v1109, %v1111
        %1228 = vadd.xlane.f32.xlu0 %v1227
        %v1229 = vpop.xlane.xlu0 %1228
        %v1230 = vadd.f32 %v1113, %v1115
        %1231 = vadd.xlane.f32.xlu0 %v1230
        %v1232 = vpop.xlane.xlu0 %1231
        %v1233 = vadd.f32 %v1117, %v1119
        %1234 = vadd.xlane.f32.xlu0 %v1233
        %v1235 = vpop.xlane.xlu0 %1234
        %v1236 = vadd.f32 %v1121, %v1123
        %1237 = vadd.xlane.f32.xlu0 %v1236
        %v1238 = vpop.xlane.xlu0 %1237
        %v1239 = vadd.f32 %v1125, %v1127
        %1240 = vadd.xlane.f32.xlu0 %v1239
        %v1241 = vpop.xlane.xlu0 %1240
        %v1242 = vadd.f32 %v1129, %v1131
        %1243 = vadd.xlane.f32.xlu0 %v1242
        %v1244 = vpop.xlane.xlu0 %1243
        %v1245 = vadd.f32 %v1133, %v1135
        %1246 = vadd.xlane.f32.xlu0 %v1245
        %v1247 = vpop.xlane.xlu0 %1246
        %v1248 = vadd.f32 %v1137, %v1139
        %1249 = vadd.xlane.f32.xlu0 %v1248
        %v1250 = vpop.xlane.xlu0 %1249
        %v1251 = vadd.f32 %v1141, %v1143
        %1252 = vadd.xlane.f32.xlu0 %v1251
        %v1253 = vpop.xlane.xlu0 %1252
        %v1254 = vadd.f32 %v1145, %v1147
        %1255 = vadd.xlane.f32.xlu0 %v1254
        %v1256 = vpop.xlane.xlu0 %1255
        %v1257 = vadd.f32 %v1149, %v1151
        %1258 = vadd.xlane.f32.xlu0 %v1257
        %v1259 = vpop.xlane.xlu0 %1258
        %v1260 = vadd.f32 %v1153, %v1155
        %1261 = vadd.xlane.f32.xlu0 %v1260
        %v1262 = vpop.xlane.xlu0 %1261
        %v1263 = vadd.f32 %v1157, %v1159
        %1264 = vadd.xlane.f32.xlu0 %v1263
        %v1265 = vpop.xlane.xlu0 %1264
        %v1266 = vadd.f32 %v1161, %v1163
        %1267 = vadd.xlane.f32.xlu0 %v1266
        %v1268 = vpop.xlane.xlu0 %1267
        %v1269 = vadd.f32 %v1165, %v1167
        %1270 = vadd.xlane.f32.xlu0 %v1269
        %v1271 = vpop.xlane.xlu0 %1270
        %v1272 = vadd.f32 %v1169, %v1171
        %1273 = vadd.xlane.f32.xlu0 %v1272
        %v1274 = vpop.xlane.xlu0 %1273
        %v1275 = vadd.f32 %v1173, %v1175
        %1276 = vadd.xlane.f32.xlu0 %v1275
        %v1277 = vpop.xlane.xlu0 %1276
        %v1278 = vadd.f32 %v1177, %v1179
        %1279 = vadd.xlane.f32.xlu0 %v1278
        %v1280 = vpop.xlane.xlu0 %1279
        %v1281 = vadd.f32 %v1181, %v1183
        %1282 = vadd.xlane.f32.xlu0 %v1281
        %v1283 = vpop.xlane.xlu0 %1282
        %v1284 = vadd.f32 %v1185, %v1187
        %1285 = vadd.xlane.f32.xlu0 %v1284
        %v1286 = vpop.xlane.xlu0 %1285
        %v1287 = vadd.f32 %v1189, %v1191
        %1288 = vadd.xlane.f32.xlu0 %v1287
        %v1289 = vpop.xlane.xlu0 %1288
        %v1290 = vadd.f32 %v1193, %v1195
        %1291 = vadd.xlane.f32.xlu0 %v1290
        %v1292 = vpop.xlane.xlu0 %1291
        %v1293 = vadd.f32 %v1197, %v1199
        %1294 = vadd.xlane.f32.xlu0 %v1293
        %v1295 = vpop.xlane.xlu0 %1294
        %v1296 = vrcp.pop %v1202
        %v1297 = vrcp.pop %v1205
        %v1298 = vrcp.pop %v1208
        %v1299 = vrcp.pop %v1211
        %v1300 = vrcp.pop %v1214
        %v1301 = vrcp.pop %v1217
        %v1302 = vrcp.pop %v1220
        %v1303 = vrcp.pop %v1223
        %v1304 = vrcp.pop %v1226
        %v1305 = vrcp.pop %v1229
        %v1306 = vrcp.pop %v1232
        %v1307 = vrcp.pop %v1235
        %v1308 = vrcp.pop %v1238
        %v1309 = vrcp.pop %v1241
        %v1310 = vrcp.pop %v1244
        %v1311 = vrcp.pop %v1247
        %v1312 = vrcp.pop %v1250
        %v1313 = vrcp.pop %v1253
        %v1314 = vrcp.pop %v1256
        %v1315 = vrcp.pop %v1259
        %v1316 = vrcp.pop %v1262
        %v1317 = vrcp.pop %v1265
        %v1318 = vrcp.pop %v1268
        %v1319 = vrcp.pop %v1271
        %v1320 = vrcp.pop %v1274
        %v1321 = vrcp.pop %v1277
        %v1322 = vrcp.pop %v1280
        %v1323 = vrcp.pop %v1283
        %v1324 = vrcp.pop %v1286
        %v1325 = vrcp.pop %v1289
        %v1326 = vrcp.pop %v1292
        %v1327 = vrcp.pop %v1295
        %v1328 = vmul.f32 %v1202, %v1296
        %v1329 = vmul.f32 %v1205, %v1297
        %v1330 = vmul.f32 %v1208, %v1298
        %v1331 = vmul.f32 %v1211, %v1299
        %v1332 = vmul.f32 %v1214, %v1300
        %v1333 = vmul.f32 %v1217, %v1301
        %v1334 = vmul.f32 %v1220, %v1302
        %v1335 = vmul.f32 %v1223, %v1303
        %v1336 = vmul.f32 %v1226, %v1304
        %v1337 = vmul.f32 %v1229, %v1305
        %v1338 = vmul.f32 %v1232, %v1306
        %v1339 = vmul.f32 %v1235, %v1307
        %v1340 = vmul.f32 %v1238, %v1308
        %v1341 = vmul.f32 %v1241, %v1309
        %v1342 = vmul.f32 %v1244, %v1310
        %v1343 = vmul.f32 %v1247, %v1311
        %v1344 = vmul.f32 %v1250, %v1312
        %v1345 = vmul.f32 %v1253, %v1313
        %v1346 = vmul.f32 %v1256, %v1314
        %v1347 = vmul.f32 %v1259, %v1315
        %v1348 = vmul.f32 %v1262, %v1316
        %v1349 = vmul.f32 %v1265, %v1317
        %v1350 = vmul.f32 %v1268, %v1318
        %v1351 = vmul.f32 %v1271, %v1319
        %v1352 = vmul.f32 %v1274, %v1320
        %v1353 = vmul.f32 %v1277, %v1321
        %v1354 = vmul.f32 %v1280, %v1322
        %v1355 = vmul.f32 %v1283, %v1323
        %v1356 = vmul.f32 %v1286, %v1324
        %v1357 = vmul.f32 %v1289, %v1325
        %v1358 = vmul.f32 %v1292, %v1326
        %v1359 = vmul.f32 %v1295, %v1327
        %v1360 = vsub.f32 2.0, %v1328
        %v1361 = vsub.f32 2.0, %v1329
        %v1362 = vsub.f32 2.0, %v1330
        %v1363 = vsub.f32 2.0, %v1331
        %v1364 = vsub.f32 2.0, %v1332
        %v1365 = vsub.f32 2.0, %v1333
        %v1366 = vsub.f32 2.0, %v1334
        %v1367 = vsub.f32 2.0, %v1335
        %v1368 = vsub.f32 2.0, %v1336
        %v1369 = vsub.f32 2.0, %v1337
        %v1370 = vsub.f32 2.0, %v1338
        %v1371 = vsub.f32 2.0, %v1339
        %v1372 = vsub.f32 2.0, %v1340
        %v1373 = vsub.f32 2.0, %v1341
        %v1374 = vsub.f32 2.0, %v1342
        %v1375 = vsub.f32 2.0, %v1343
        %v1376 = vsub.f32 2.0, %v1344
        %v1377 = vsub.f32 2.0, %v1345
        %v1378 = vsub.f32 2.0, %v1346
        %v1379 = vsub.f32 2.0, %v1347
        %v1380 = vsub.f32 2.0, %v1348
        %v1381 = vsub.f32 2.0, %v1349
        %v1382 = vsub.f32 2.0, %v1350
        %v1383 = vsub.f32 2.0, %v1351
        %v1384 = vsub.f32 2.0, %v1352
        %v1385 = vsub.f32 2.0, %v1353
        %v1386 = vsub.f32 2.0, %v1354
        %v1387 = vsub.f32 2.0, %v1355
        %v1388 = vsub.f32 2.0, %v1356
        %v1389 = vsub.f32 2.0, %v1357
        %v1390 = vsub.f32 2.0, %v1358
        %v1391 = vsub.f32 2.0, %v1359
        %v1392 = vmul.f32 %v1296, %v1360
        %v1393 = vmul.f32 %v1297, %v1361
        %v1394 = vmul.f32 %v1298, %v1362
        %v1395 = vmul.f32 %v1299, %v1363
        %v1396 = vmul.f32 %v1300, %v1364
        %v1397 = vmul.f32 %v1301, %v1365
        %v1398 = vmul.f32 %v1302, %v1366
        %v1399 = vmul.f32 %v1303, %v1367
        %v1400 = vmul.f32 %v1304, %v1368
        %v1401 = vmul.f32 %v1305, %v1369
        %v1402 = vmul.f32 %v1306, %v1370
        %v1403 = vmul.f32 %v1307, %v1371
        %v1404 = vmul.f32 %v1308, %v1372
        %v1405 = vmul.f32 %v1309, %v1373
        %v1406 = vmul.f32 %v1310, %v1374
        %v1407 = vmul.f32 %v1311, %v1375
        %v1408 = vmul.f32 %v1312, %v1376
        %v1409 = vmul.f32 %v1313, %v1377
        %v1410 = vmul.f32 %v1314, %v1378
        %v1411 = vmul.f32 %v1315, %v1379
        %v1412 = vmul.f32 %v1316, %v1380
        %v1413 = vmul.f32 %v1317, %v1381
        %v1414 = vmul.f32 %v1318, %v1382
        %v1415 = vmul.f32 %v1319, %v1383
        %v1416 = vmul.f32 %v1320, %v1384
        %v1417 = vmul.f32 %v1321, %v1385
        %v1418 = vmul.f32 %v1322, %v1386
        %v1419 = vmul.f32 %v1323, %v1387
        %v1420 = vmul.f32 %v1324, %v1388
        %v1421 = vmul.f32 %v1325, %v1389
        %v1422 = vmul.f32 %v1326, %v1390
        %v1423 = vmul.f32 %v1327, %v1391
        %1424 = vmatprep.subr.mxu0 0.0
        %1425 = vmatpush1.xpose.msra.mxu0 0.0
        %1426 = vmatprep.subr.mxu0 0.0
        %1427 = vmatpush1.xpose.msra.mxu0 0.0
        %1428 = vmatprep.subr.mxu0 0.0
        %1429 = vmatpush1.xpose.msra.mxu0 0.0
        %1430 = vmatprep.subr.mxu0 0.0
        %1431 = vmatpush1.xpose.msra.mxu0 0.0
        %1432 = vmatprep.subr.mxu0 0.0
        %1433 = vmatpush1.xpose.msra.mxu0 0.0
        %1434 = vmatprep.subr.mxu0 0.0
        %1435 = vmatpush1.xpose.msra.mxu0 0.0
        %1436 = vmatprep.subr.mxu0 0.0
        %1437 = vmatpush1.xpose.msra.mxu0 0.0
        %1438 = vmatprep.subr.mxu0 0.0
        %1439 = vmatpush1.xpose.msra.mxu0 0.0
        %1440 = vmatprep.subr.mxu0 0.0
        %1441 = vmatpush1.xpose.msra.mxu0 0.0
        %1442 = vmatprep.subr.mxu0 0.0
        %1443 = vmatpush1.xpose.msra.mxu0 0.0
        %1444 = vmatprep.subr.mxu0 0.0
        %1445 = vmatpush1.xpose.msra.mxu0 0.0
        %1446 = vmatprep.subr.mxu0 0.0
        %1447 = vmatpush1.xpose.msra.mxu0 0.0
        %1448 = vmatprep.subr.mxu0 0.0
        %1449 = vmatpush1.xpose.msra.mxu0 0.0
        %1450 = vmatprep.subr.mxu0 0.0
        %1451 = vmatpush1.xpose.msra.mxu0 0.0
        %1452 = vmatprep.subr.mxu0 0.0
        %1453 = vmatpush1.xpose.msra.mxu0 0.0
        %1454 = vmatprep.subr.mxu0 %v474
        %1455 = vmatpush1.xpose.msra.mxu0 %v472
        %1456 = vmatprep.subr.mxu0 0.0
        %1457 = vmatpush2.xpose.msra.mxu0 0.0
        %1458 = vmatprep.subr.mxu0 0.0
        %1459 = vmatpush2.xpose.msra.mxu0 0.0
        %1460 = vmatprep.subr.mxu0 0.0
        %1461 = vmatpush2.xpose.msra.mxu0 0.0
        %1462 = vmatprep.subr.mxu0 0.0
        %1463 = vmatpush2.xpose.msra.mxu0 0.0
        %1464 = vmatprep.subr.mxu0 0.0
        %1465 = vmatpush2.xpose.msra.mxu0 0.0
        %1466 = vmatprep.subr.mxu0 0.0
        %1467 = vmatpush2.xpose.msra.mxu0 0.0
        %1468 = vmatprep.subr.mxu0 0.0
        %1469 = vmatpush2.xpose.msra.mxu0 0.0
        %1470 = vmatprep.subr.mxu0 0.0
        %1471 = vmatpush2.xpose.msra.mxu0 0.0
        %1472 = vmatprep.subr.mxu0 0.0
        %1473 = vmatpush2.xpose.msra.mxu0 0.0
        %1474 = vmatprep.subr.mxu0 0.0
        %1475 = vmatpush2.xpose.msra.mxu0 0.0
        %1476 = vmatprep.subr.mxu0 0.0
        %1477 = vmatpush2.xpose.msra.mxu0 0.0
        %1478 = vmatprep.subr.mxu0 0.0
        %1479 = vmatpush2.xpose.msra.mxu0 0.0
        %1480 = vmatprep.subr.mxu0 0.0
        %1481 = vmatpush2.xpose.msra.mxu0 0.0
        %1482 = vmatprep.subr.mxu0 0.0
        %1483 = vmatpush2.xpose.msra.mxu0 0.0
        %1484 = vmatprep.subr.mxu0 0.0
        %1485 = vmatpush2.xpose.msra.mxu0 0.0
        %1486 = vmatprep.subr.mxu0 0.0
        %1487 = vmatpush2.xpose.msra.mxu0 0.0
        %1488 = vmatprep.mubr.f32.mxu0 %v1075
        %1489 = vmatmul.mubr.f32.gmra.mxu0 %v1073
        %v1490 = vpop.f32.mrf.mxu0
        %v1491 = vadd.f32 0.0, %v1490
        %v1492 = vpop.f32.mrf.mxu0
        %1493 = vmatprep.mubr.f32.mxu0 %v1079
        %1494 = vmatmul.mubr.f32.gmra.mxu0 %v1077
        %v1495 = vpop.f32.mrf.mxu0
        %v1496 = vadd.f32 0.0, %v1495
        %v1497 = vpop.f32.mrf.mxu0
        %1498 = vmatprep.mubr.f32.mxu0 %v1083
        %1499 = vmatmul.mubr.f32.gmra.mxu0 %v1081
        %v1500 = vpop.f32.mrf.mxu0
        %v1501 = vadd.f32 0.0, %v1500
        %v1502 = vpop.f32.mrf.mxu0
        %1503 = vmatprep.mubr.f32.mxu0 %v1087
        %1504 = vmatmul.mubr.f32.gmra.mxu0 %v1085
        %v1505 = vpop.f32.mrf.mxu0
        %v1506 = vadd.f32 0.0, %v1505
        %v1507 = vpop.f32.mrf.mxu0
        %1508 = vmatprep.mubr.f32.mxu0 %v1091
        %1509 = vmatmul.mubr.f32.gmra.mxu0 %v1089
        %v1510 = vpop.f32.mrf.mxu0
        %v1511 = vadd.f32 0.0, %v1510
        %v1512 = vpop.f32.mrf.mxu0
        %1513 = vmatprep.mubr.f32.mxu0 %v1095
        %1514 = vmatmul.mubr.f32.gmra.mxu0 %v1093
        %v1515 = vpop.f32.mrf.mxu0
        %v1516 = vadd.f32 0.0, %v1515
        %v1517 = vpop.f32.mrf.mxu0
        %1518 = vmatprep.mubr.f32.mxu0 %v1099
        %1519 = vmatmul.mubr.f32.gmra.mxu0 %v1097
        %v1520 = vpop.f32.mrf.mxu0
        %v1521 = vadd.f32 0.0, %v1520
        %v1522 = vpop.f32.mrf.mxu0
        %1523 = vmatprep.mubr.f32.mxu0 %v1103
        %1524 = vmatmul.mubr.f32.gmra.mxu0 %v1101
        %v1525 = vpop.f32.mrf.mxu0
        %v1526 = vadd.f32 0.0, %v1525
        %v1527 = vpop.f32.mrf.mxu0
        %1528 = vmatprep.mubr.f32.mxu0 %v1107
        %1529 = vmatmul.mubr.f32.gmra.mxu0 %v1105
        %v1530 = vpop.f32.mrf.mxu0
        %v1531 = vadd.f32 0.0, %v1530
        %v1532 = vpop.f32.mrf.mxu0
        %1533 = vmatprep.mubr.f32.mxu0 %v1111
        %1534 = vmatmul.mubr.f32.gmra.mxu0 %v1109
        %v1535 = vpop.f32.mrf.mxu0
        %v1536 = vadd.f32 0.0, %v1535
        %v1537 = vpop.f32.mrf.mxu0
        %1538 = vmatprep.mubr.f32.mxu0 %v1115
        %1539 = vmatmul.mubr.f32.gmra.mxu0 %v1113
        %v1540 = vpop.f32.mrf.mxu0
        %v1541 = vadd.f32 0.0, %v1540
        %v1542 = vpop.f32.mrf.mxu0
        %1543 = vmatprep.mubr.f32.mxu0 %v1119
        %1544 = vmatmul.mubr.f32.gmra.mxu0 %v1117
        %v1545 = vpop.f32.mrf.mxu0
        %v1546 = vadd.f32 0.0, %v1545
        %v1547 = vpop.f32.mrf.mxu0
        %1548 = vmatprep.mubr.f32.mxu0 %v1123
        %1549 = vmatmul.mubr.f32.gmra.mxu0 %v1121
        %v1550 = vpop.f32.mrf.mxu0
        %v1551 = vadd.f32 0.0, %v1550
        %v1552 = vpop.f32.mrf.mxu0
        %1553 = vmatprep.mubr.f32.mxu0 %v1127
        %1554 = vmatmul.mubr.f32.gmra.mxu0 %v1125
        %v1555 = vpop.f32.mrf.mxu0
        %v1556 = vadd.f32 0.0, %v1555
        %v1557 = vpop.f32.mrf.mxu0
        %1558 = vmatprep.mubr.f32.mxu0 %v1131
        %1559 = vmatmul.mubr.f32.gmra.mxu0 %v1129
        %v1560 = vpop.f32.mrf.mxu0
        %v1561 = vadd.f32 0.0, %v1560
        %v1562 = vpop.f32.mrf.mxu0
        %1563 = vmatprep.mubr.f32.mxu0 %v1135
        %1564 = vmatmul.mubr.f32.gmra.mxu0 %v1133
        %v1565 = vpop.f32.mrf.mxu0
        %v1566 = vadd.f32 0.0, %v1565
        %v1567 = vpop.f32.mrf.mxu0
        %1568 = vmatprep.mubr.f32.mxu0 %v1139
        %1569 = vmatmul.mubr.f32.gmra.mxu0 %v1137
        %v1570 = vpop.f32.mrf.mxu0
        %v1571 = vadd.f32 0.0, %v1570
        %v1572 = vpop.f32.mrf.mxu0
        %1573 = vmatprep.mubr.f32.mxu0 %v1143
        %1574 = vmatmul.mubr.f32.gmra.mxu0 %v1141
        %v1575 = vpop.f32.mrf.mxu0
        %v1576 = vadd.f32 0.0, %v1575
        %v1577 = vpop.f32.mrf.mxu0
        %1578 = vmatprep.mubr.f32.mxu0 %v1147
        %1579 = vmatmul.mubr.f32.gmra.mxu0 %v1145
        %v1580 = vpop.f32.mrf.mxu0
        %v1581 = vadd.f32 0.0, %v1580
        %v1582 = vpop.f32.mrf.mxu0
        %1583 = vmatprep.mubr.f32.mxu0 %v1151
        %1584 = vmatmul.mubr.f32.gmra.mxu0 %v1149
        %v1585 = vpop.f32.mrf.mxu0
        %v1586 = vadd.f32 0.0, %v1585
        %v1587 = vpop.f32.mrf.mxu0
        %1588 = vmatprep.mubr.f32.mxu0 %v1155
        %1589 = vmatmul.mubr.f32.gmra.mxu0 %v1153
        %v1590 = vpop.f32.mrf.mxu0
        %v1591 = vadd.f32 0.0, %v1590
        %v1592 = vpop.f32.mrf.mxu0
        %1593 = vmatprep.mubr.f32.mxu0 %v1159
        %1594 = vmatmul.mubr.f32.gmra.mxu0 %v1157
        %v1595 = vpop.f32.mrf.mxu0
        %v1596 = vadd.f32 0.0, %v1595
        %v1597 = vpop.f32.mrf.mxu0
        %1598 = vmatprep.mubr.f32.mxu0 %v1163
        %1599 = vmatmul.mubr.f32.gmra.mxu0 %v1161
        %v1600 = vpop.f32.mrf.mxu0
        %v1601 = vadd.f32 0.0, %v1600
        %v1602 = vpop.f32.mrf.mxu0
        %1603 = vmatprep.mubr.f32.mxu0 %v1167
        %1604 = vmatmul.mubr.f32.gmra.mxu0 %v1165
        %v1605 = vpop.f32.mrf.mxu0
        %v1606 = vadd.f32 0.0, %v1605
        %v1607 = vpop.f32.mrf.mxu0
        %1608 = vmatprep.mubr.f32.mxu0 %v1171
        %1609 = vmatmul.mubr.f32.gmra.mxu0 %v1169
        %v1610 = vpop.f32.mrf.mxu0
        %v1611 = vadd.f32 0.0, %v1610
        %v1612 = vpop.f32.mrf.mxu0
        %1613 = vmatprep.mubr.f32.mxu0 %v1175
        %1614 = vmatmul.mubr.f32.gmra.mxu0 %v1173
        %v1615 = vpop.f32.mrf.mxu0
        %v1616 = vadd.f32 0.0, %v1615
        %v1617 = vpop.f32.mrf.mxu0
        %1618 = vmatprep.mubr.f32.mxu0 %v1179
        %1619 = vmatmul.mubr.f32.gmra.mxu0 %v1177
        %v1620 = vpop.f32.mrf.mxu0
        %v1621 = vadd.f32 0.0, %v1620
        %v1622 = vpop.f32.mrf.mxu0
        %1623 = vmatprep.mubr.f32.mxu0 %v1183
        %1624 = vmatmul.mubr.f32.gmra.mxu0 %v1181
        %v1625 = vpop.f32.mrf.mxu0
        %v1626 = vadd.f32 0.0, %v1625
        %v1627 = vpop.f32.mrf.mxu0
        %1628 = vmatprep.mubr.f32.mxu0 %v1187
        %1629 = vmatmul.mubr.f32.gmra.mxu0 %v1185
        %v1630 = vpop.f32.mrf.mxu0
        %v1631 = vadd.f32 0.0, %v1630
        %v1632 = vpop.f32.mrf.mxu0
        %1633 = vmatprep.mubr.f32.mxu0 %v1191
        %1634 = vmatmul.mubr.f32.gmra.mxu0 %v1189
        %v1635 = vpop.f32.mrf.mxu0
        %v1636 = vadd.f32 0.0, %v1635
        %v1637 = vpop.f32.mrf.mxu0
        %1638 = vmatprep.mubr.f32.mxu0 %v1195
        %1639 = vmatmul.mubr.f32.gmra.mxu0 %v1193
        %v1640 = vpop.f32.mrf.mxu0
        %v1641 = vadd.f32 0.0, %v1640
        %v1642 = vpop.f32.mrf.mxu0
        %1643 = vmatprep.mubr.f32.mxu0 %v1199
        %1644 = vmatmul.mubr.f32.gmra.mxu0 %v1197
        %v1645 = vpop.f32.mrf.mxu0
        %v1646 = vadd.f32 0.0, %v1645
        %v1647 = vpop.f32.mrf.mxu0
        %1648 = vdwg.mxu0
        %v1649 = vmul.f32 %v1491, %v1392
        %v1650 = vmul.f32 %v1496, %v1393
        %v1651 = vmul.f32 %v1501, %v1394
        %v1652 = vmul.f32 %v1506, %v1395
        %v1653 = vmul.f32 %v1511, %v1396
        %v1654 = vmul.f32 %v1516, %v1397
        %v1655 = vmul.f32 %v1521, %v1398
        %v1656 = vmul.f32 %v1526, %v1399
        %v1657 = vmul.f32 %v1531, %v1400
        %v1658 = vmul.f32 %v1536, %v1401
        %v1659 = vmul.f32 %v1541, %v1402
        %v1660 = vmul.f32 %v1546, %v1403
        %v1661 = vmul.f32 %v1551, %v1404
        %v1662 = vmul.f32 %v1556, %v1405
        %v1663 = vmul.f32 %v1561, %v1406
        %v1664 = vmul.f32 %v1566, %v1407
        %v1665 = vmul.f32 %v1571, %v1408
        %v1666 = vmul.f32 %v1576, %v1409
        %v1667 = vmul.f32 %v1581, %v1410
        %v1668 = vmul.f32 %v1586, %v1411
        %v1669 = vmul.f32 %v1591, %v1412
        %v1670 = vmul.f32 %v1596, %v1413
        %v1671 = vmul.f32 %v1601, %v1414
        %v1672 = vmul.f32 %v1606, %v1415
        %v1673 = vmul.f32 %v1611, %v1416
        %v1674 = vmul.f32 %v1616, %v1417
        %v1675 = vmul.f32 %v1621, %v1418
        %v1676 = vmul.f32 %v1626, %v1419
        %v1677 = vmul.f32 %v1631, %v1420
        %v1678 = vmul.f32 %v1636, %v1421
        %v1679 = vmul.f32 %v1641, %v1422
        %v1680 = vmul.f32 %v1646, %v1423
        %1681 = vxpose.xlu0.b32.start [1/16] %v430, 128
        %1682 = vxpose.xlu0.b32.cont [2/16] 0.0, 128
        %1683 = vxpose.xlu0.b32.cont [3/16] 0.0, 128
        %1684 = vxpose.xlu0.b32.cont [4/16] 0.0, 128
        %1685 = vxpose.xlu0.b32.cont [5/16] 0.0, 128
        %1686 = vxpose.xlu0.b32.cont [6/16] 0.0, 128
        %1687 = vxpose.xlu0.b32.cont [7/16] 0.0, 128
        %1688 = vxpose.xlu0.b32.cont [8/16] 0.0, 128
        %1689 = vxpose.xlu0.b32.cont [9/16] 0.0, 128
        %1690 = vxpose.xlu0.b32.cont [10/16] 0.0, 128
        %1691 = vxpose.xlu0.b32.cont [11/16] 0.0, 128
        %1692 = vxpose.xlu0.b32.cont [12/16] 0.0, 128
        %1693 = vxpose.xlu0.b32.cont [13/16] 0.0, 128
        %1694 = vxpose.xlu0.b32.cont [14/16] 0.0, 128
        %1695 = vxpose.xlu0.b32.cont [15/16] 0.0, 128
        %1696 = vxpose.xlu0.b32.end [16/16] 0.0, 128
        %v1697 = vpop.trf.xlu0
        %v1698 = vpop.trf.xlu0
        %v1699 = vpop.trf.xlu0
        %v1700 = vpop.trf.xlu0
        %v1701 = vpop.trf.xlu0
        %v1702 = vpop.trf.xlu0
        %v1703 = vpop.trf.xlu0
        %v1704 = vpop.trf.xlu0
        %v1705 = vpop.trf.xlu0
        %v1706 = vpop.trf.xlu0
        %v1707 = vpop.trf.xlu0
        %v1708 = vpop.trf.xlu0
        %v1709 = vpop.trf.xlu0
        %v1710 = vpop.trf.xlu0
        %v1711 = vpop.trf.xlu0
        %v1712 = vpop.trf.xlu0
        %1713 = vxpose.xlu0.b32.start [1/16] %v432, 128
        %1714 = vxpose.xlu0.b32.cont [2/16] 0.0, 128
        %1715 = vxpose.xlu0.b32.cont [3/16] 0.0, 128
        %1716 = vxpose.xlu0.b32.cont [4/16] 0.0, 128
        %1717 = vxpose.xlu0.b32.cont [5/16] 0.0, 128
        %1718 = vxpose.xlu0.b32.cont [6/16] 0.0, 128
        %1719 = vxpose.xlu0.b32.cont [7/16] 0.0, 128
        %1720 = vxpose.xlu0.b32.cont [8/16] 0.0, 128
        %1721 = vxpose.xlu0.b32.cont [9/16] 0.0, 128
        %1722 = vxpose.xlu0.b32.cont [10/16] 0.0, 128
        %1723 = vxpose.xlu0.b32.cont [11/16] 0.0, 128
        %1724 = vxpose.xlu0.b32.cont [12/16] 0.0, 128
        %1725 = vxpose.xlu0.b32.cont [13/16] 0.0, 128
        %1726 = vxpose.xlu0.b32.cont [14/16] 0.0, 128
        %1727 = vxpose.xlu0.b32.cont [15/16] 0.0, 128
        %1728 = vxpose.xlu0.b32.end [16/16] 0.0, 128
        %v1729 = vpop.trf.xlu0
        %v1730 = vpop.trf.xlu0
        %v1731 = vpop.trf.xlu0
        %v1732 = vpop.trf.xlu0
        %v1733 = vpop.trf.xlu0
        %v1734 = vpop.trf.xlu0
        %v1735 = vpop.trf.xlu0
        %v1736 = vpop.trf.xlu0
        %v1737 = vpop.trf.xlu0
        %v1738 = vpop.trf.xlu0
        %v1739 = vpop.trf.xlu0
        %v1740 = vpop.trf.xlu0
        %v1741 = vpop.trf.xlu0
        %v1742 = vpop.trf.xlu0
        %v1743 = vpop.trf.xlu0
        %v1744 = vpop.trf.xlu0
        %v1746 = vsel %vm558, %v1697, 0
        %v1749 = vsel %vm558, %v1698, 0
        %v1752 = vsel %vm558, %v1699, 0
        %v1755 = vsel %vm558, %v1700, 0
        %v1758 = vsel %vm558, %v1701, 0
        %v1761 = vsel %vm558, %v1702, 0
        %v1764 = vsel %vm558, %v1703, 0
        %v1767 = vsel %vm558, %v1704, 0
        %v1770 = vsel %vm558, %v1705, 0
        %v1773 = vsel %vm558, %v1706, 0
        %v1776 = vsel %vm558, %v1707, 0
        %v1779 = vsel %vm558, %v1708, 0
        %v1782 = vsel %vm558, %v1709, 0
        %v1785 = vsel %vm558, %v1710, 0
        %v1788 = vsel %vm558, %v1711, 0
        %v1791 = vsel %vm558, %v1712, 0
        %v1794 = vsel %vm558, %v1729, 0
        %v1797 = vsel %vm558, %v1730, 0
        %v1800 = vsel %vm558, %v1731, 0
        %v1803 = vsel %vm558, %v1732, 0
        %v1806 = vsel %vm558, %v1733, 0
        %v1809 = vsel %vm558, %v1734, 0
        %v1812 = vsel %vm558, %v1735, 0
        %v1815 = vsel %vm558, %v1736, 0
        %v1818 = vsel %vm558, %v1737, 0
        %v1821 = vsel %vm558, %v1738, 0
        %v1824 = vsel %vm558, %v1739, 0
        %v1827 = vsel %vm558, %v1740, 0
        %v1830 = vsel %vm558, %v1741, 0
        %v1833 = vsel %vm558, %v1742, 0
        %v1836 = vsel %vm558, %v1743, 0
        %v1839 = vsel %vm558, %v1744, 0
        %1841 = vmatprep.subr.mxu0 0.0
        %1842 = vmatpush1.msra.mxu0 0.0
        %1843 = vmatprep.subr.mxu0 0.0
        %1844 = vmatpush1.msra.mxu0 0.0
        %1845 = vmatprep.subr.mxu0 0.0
        %1846 = vmatpush1.msra.mxu0 0.0
        %1847 = vmatprep.subr.mxu0 0.0
        %1848 = vmatpush1.msra.mxu0 0.0
        %1849 = vmatprep.subr.mxu0 0.0
        %1850 = vmatpush1.msra.mxu0 0.0
        %1851 = vmatprep.subr.mxu0 0.0
        %1852 = vmatpush1.msra.mxu0 0.0
        %1853 = vmatprep.subr.mxu0 0.0
        %1854 = vmatpush1.msra.mxu0 0.0
        %1855 = vmatprep.subr.mxu0 0.0
        %1856 = vmatpush1.msra.mxu0 0.0
        %1857 = vmatprep.subr.mxu0 0.0
        %1858 = vmatpush1.msra.mxu0 0.0
        %1859 = vmatprep.subr.mxu0 0.0
        %1860 = vmatpush1.msra.mxu0 0.0
        %1861 = vmatprep.subr.mxu0 0.0
        %1862 = vmatpush1.msra.mxu0 0.0
        %1863 = vmatprep.subr.mxu0 0.0
        %1864 = vmatpush1.msra.mxu0 0.0
        %1865 = vmatprep.subr.mxu0 0.0
        %1866 = vmatpush1.msra.mxu0 0.0
        %1867 = vmatprep.subr.mxu0 0.0
        %1868 = vmatpush1.msra.mxu0 0.0
        %1869 = vmatprep.subr.mxu0 0.0
        %1870 = vmatpush1.msra.mxu0 0.0
        %1871 = vmatprep.subr.mxu0 %v456
        %1872 = vmatpush1.msra.mxu0 %v454
        %1873 = vmatprep.subr.mxu0 0.0
        %1874 = vmatpush2.msra.mxu0 0.0
        %1875 = vmatprep.subr.mxu0 0.0
        %1876 = vmatpush2.msra.mxu0 0.0
        %1877 = vmatprep.subr.mxu0 0.0
        %1878 = vmatpush2.msra.mxu0 0.0
        %1879 = vmatprep.subr.mxu0 0.0
        %1880 = vmatpush2.msra.mxu0 0.0
        %1881 = vmatprep.subr.mxu0 0.0
        %1882 = vmatpush2.msra.mxu0 0.0
        %1883 = vmatprep.subr.mxu0 0.0
        %1884 = vmatpush2.msra.mxu0 0.0
        %1885 = vmatprep.subr.mxu0 0.0
        %1886 = vmatpush2.msra.mxu0 0.0
        %1887 = vmatprep.subr.mxu0 0.0
        %1888 = vmatpush2.msra.mxu0 0.0
        %1889 = vmatprep.subr.mxu0 0.0
        %1890 = vmatpush2.msra.mxu0 0.0
        %1891 = vmatprep.subr.mxu0 0.0
        %1892 = vmatpush2.msra.mxu0 0.0
        %1893 = vmatprep.subr.mxu0 0.0
        %1894 = vmatpush2.msra.mxu0 0.0
        %1895 = vmatprep.subr.mxu0 0.0
        %1896 = vmatpush2.msra.mxu0 0.0
        %1897 = vmatprep.subr.mxu0 0.0
        %1898 = vmatpush2.msra.mxu0 0.0
        %1899 = vmatprep.subr.mxu0 0.0
        %1900 = vmatpush2.msra.mxu0 0.0
        %1901 = vmatprep.subr.mxu0 0.0
        %1902 = vmatpush2.msra.mxu0 0.0
        %1903 = vmatprep.subr.mxu0 0.0
        %1904 = vmatpush2.msra.mxu0 0.0
        %1905 = vmatprep.mubr.f32.mxu0 0.0
        %1906 = vmatmul.mubr.f32.gmra.mxu0 %v1746
        %v1907 = vpop.f32.mrf.mxu0
        %v1908 = vadd.f32 0.0, %v1907
        %v1909 = vpop.f32.mrf.mxu0
        %v1910 = vadd.f32 0.0, %v1909
        %1911 = vmatprep.mubr.f32.mxu0 0.0
        %1912 = vmatmul.mubr.f32.gmra.mxu0 %v1749
        %v1913 = vpop.f32.mrf.mxu0
        %v1914 = vadd.f32 0.0, %v1913
        %v1915 = vpop.f32.mrf.mxu0
        %v1916 = vadd.f32 0.0, %v1915
        %1917 = vmatprep.mubr.f32.mxu0 0.0
        %1918 = vmatmul.mubr.f32.gmra.mxu0 %v1752
        %v1919 = vpop.f32.mrf.mxu0
        %v1920 = vadd.f32 0.0, %v1919
        %v1921 = vpop.f32.mrf.mxu0
        %v1922 = vadd.f32 0.0, %v1921
        %1923 = vmatprep.mubr.f32.mxu0 0.0
        %1924 = vmatmul.mubr.f32.gmra.mxu0 %v1755
        %v1925 = vpop.f32.mrf.mxu0
        %v1926 = vadd.f32 0.0, %v1925
        %v1927 = vpop.f32.mrf.mxu0
        %v1928 = vadd.f32 0.0, %v1927
        %1929 = vmatprep.mubr.f32.mxu0 0.0
        %1930 = vmatmul.mubr.f32.gmra.mxu0 %v1758
        %v1931 = vpop.f32.mrf.mxu0
        %v1932 = vadd.f32 0.0, %v1931
        %v1933 = vpop.f32.mrf.mxu0
        %v1934 = vadd.f32 0.0, %v1933
        %1935 = vmatprep.mubr.f32.mxu0 0.0
        %1936 = vmatmul.mubr.f32.gmra.mxu0 %v1761
        %v1937 = vpop.f32.mrf.mxu0
        %v1938 = vadd.f32 0.0, %v1937
        %v1939 = vpop.f32.mrf.mxu0
        %v1940 = vadd.f32 0.0, %v1939
        %1941 = vmatprep.mubr.f32.mxu0 0.0
        %1942 = vmatmul.mubr.f32.gmra.mxu0 %v1764
        %v1943 = vpop.f32.mrf.mxu0
        %v1944 = vadd.f32 0.0, %v1943
        %v1945 = vpop.f32.mrf.mxu0
        %v1946 = vadd.f32 0.0, %v1945
        %1947 = vmatprep.mubr.f32.mxu0 0.0
        %1948 = vmatmul.mubr.f32.gmra.mxu0 %v1767
        %v1949 = vpop.f32.mrf.mxu0
        %v1950 = vadd.f32 0.0, %v1949
        %v1951 = vpop.f32.mrf.mxu0
        %v1952 = vadd.f32 0.0, %v1951
        %1953 = vmatprep.mubr.f32.mxu0 0.0
        %1954 = vmatmul.mubr.f32.gmra.mxu0 %v1770
        %v1955 = vpop.f32.mrf.mxu0
        %v1956 = vadd.f32 0.0, %v1955
        %v1957 = vpop.f32.mrf.mxu0
        %v1958 = vadd.f32 0.0, %v1957
        %1959 = vmatprep.mubr.f32.mxu0 0.0
        %1960 = vmatmul.mubr.f32.gmra.mxu0 %v1773
        %v1961 = vpop.f32.mrf.mxu0
        %v1962 = vadd.f32 0.0, %v1961
        %v1963 = vpop.f32.mrf.mxu0
        %v1964 = vadd.f32 0.0, %v1963
        %1965 = vmatprep.mubr.f32.mxu0 0.0
        %1966 = vmatmul.mubr.f32.gmra.mxu0 %v1776
        %v1967 = vpop.f32.mrf.mxu0
        %v1968 = vadd.f32 0.0, %v1967
        %v1969 = vpop.f32.mrf.mxu0
        %v1970 = vadd.f32 0.0, %v1969
        %1971 = vmatprep.mubr.f32.mxu0 0.0
        %1972 = vmatmul.mubr.f32.gmra.mxu0 %v1779
        %v1973 = vpop.f32.mrf.mxu0
        %v1974 = vadd.f32 0.0, %v1973
        %v1975 = vpop.f32.mrf.mxu0
        %v1976 = vadd.f32 0.0, %v1975
        %1977 = vmatprep.mubr.f32.mxu0 0.0
        %1978 = vmatmul.mubr.f32.gmra.mxu0 %v1782
        %v1979 = vpop.f32.mrf.mxu0
        %v1980 = vadd.f32 0.0, %v1979
        %v1981 = vpop.f32.mrf.mxu0
        %v1982 = vadd.f32 0.0, %v1981
        %1983 = vmatprep.mubr.f32.mxu0 0.0
        %1984 = vmatmul.mubr.f32.gmra.mxu0 %v1785
        %v1985 = vpop.f32.mrf.mxu0
        %v1986 = vadd.f32 0.0, %v1985
        %v1987 = vpop.f32.mrf.mxu0
        %v1988 = vadd.f32 0.0, %v1987
        %1989 = vmatprep.mubr.f32.mxu0 0.0
        %1990 = vmatmul.mubr.f32.gmra.mxu0 %v1788
        %v1991 = vpop.f32.mrf.mxu0
        %v1992 = vadd.f32 0.0, %v1991
        %v1993 = vpop.f32.mrf.mxu0
        %v1994 = vadd.f32 0.0, %v1993
        %1995 = vmatprep.mubr.f32.mxu0 0.0
        %1996 = vmatmul.mubr.f32.gmra.mxu0 %v1791
        %v1997 = vpop.f32.mrf.mxu0
        %v1998 = vadd.f32 0.0, %v1997
        %v1999 = vpop.f32.mrf.mxu0
        %v2000 = vadd.f32 0.0, %v1999
        %2001 = vmatprep.mubr.f32.mxu0 0.0
        %2002 = vmatmul.mubr.f32.gmra.mxu0 %v1794
        %v2003 = vpop.f32.mrf.mxu0
        %v2004 = vadd.f32 0.0, %v2003
        %v2005 = vpop.f32.mrf.mxu0
        %v2006 = vadd.f32 0.0, %v2005
        %2007 = vmatprep.mubr.f32.mxu0 0.0
        %2008 = vmatmul.mubr.f32.gmra.mxu0 %v1797
        %v2009 = vpop.f32.mrf.mxu0
        %v2010 = vadd.f32 0.0, %v2009
        %v2011 = vpop.f32.mrf.mxu0
        %v2012 = vadd.f32 0.0, %v2011
        %2013 = vmatprep.mubr.f32.mxu0 0.0
        %2014 = vmatmul.mubr.f32.gmra.mxu0 %v1800
        %v2015 = vpop.f32.mrf.mxu0
        %v2016 = vadd.f32 0.0, %v2015
        %v2017 = vpop.f32.mrf.mxu0
        %v2018 = vadd.f32 0.0, %v2017
        %2019 = vmatprep.mubr.f32.mxu0 0.0
        %2020 = vmatmul.mubr.f32.gmra.mxu0 %v1803
        %v2021 = vpop.f32.mrf.mxu0
        %v2022 = vadd.f32 0.0, %v2021
        %v2023 = vpop.f32.mrf.mxu0
        %v2024 = vadd.f32 0.0, %v2023
        %2025 = vmatprep.mubr.f32.mxu0 0.0
        %2026 = vmatmul.mubr.f32.gmra.mxu0 %v1806
        %v2027 = vpop.f32.mrf.mxu0
        %v2028 = vadd.f32 0.0, %v2027
        %v2029 = vpop.f32.mrf.mxu0
        %v2030 = vadd.f32 0.0, %v2029
        %2031 = vmatprep.mubr.f32.mxu0 0.0
        %2032 = vmatmul.mubr.f32.gmra.mxu0 %v1809
        %v2033 = vpop.f32.mrf.mxu0
        %v2034 = vadd.f32 0.0, %v2033
        %v2035 = vpop.f32.mrf.mxu0
        %v2036 = vadd.f32 0.0, %v2035
        %2037 = vmatprep.mubr.f32.mxu0 0.0
        %2038 = vmatmul.mubr.f32.gmra.mxu0 %v1812
        %v2039 = vpop.f32.mrf.mxu0
        %v2040 = vadd.f32 0.0, %v2039
        %v2041 = vpop.f32.mrf.mxu0
        %v2042 = vadd.f32 0.0, %v2041
        %2043 = vmatprep.mubr.f32.mxu0 0.0
        %2044 = vmatmul.mubr.f32.gmra.mxu0 %v1815
        %v2045 = vpop.f32.mrf.mxu0
        %v2046 = vadd.f32 0.0, %v2045
        %v2047 = vpop.f32.mrf.mxu0
        %v2048 = vadd.f32 0.0, %v2047
        %2049 = vmatprep.mubr.f32.mxu0 0.0
        %2050 = vmatmul.mubr.f32.gmra.mxu0 %v1818
        %v2051 = vpop.f32.mrf.mxu0
        %v2052 = vadd.f32 0.0, %v2051
        %v2053 = vpop.f32.mrf.mxu0
        %v2054 = vadd.f32 0.0, %v2053
        %2055 = vmatprep.mubr.f32.mxu0 0.0
        %2056 = vmatmul.mubr.f32.gmra.mxu0 %v1821
        %v2057 = vpop.f32.mrf.mxu0
        %v2058 = vadd.f32 0.0, %v2057
        %v2059 = vpop.f32.mrf.mxu0
        %v2060 = vadd.f32 0.0, %v2059
        %2061 = vmatprep.mubr.f32.mxu0 0.0
        %2062 = vmatmul.mubr.f32.gmra.mxu0 %v1824
        %v2063 = vpop.f32.mrf.mxu0
        %v2064 = vadd.f32 0.0, %v2063
        %v2065 = vpop.f32.mrf.mxu0
        %v2066 = vadd.f32 0.0, %v2065
        %2067 = vmatprep.mubr.f32.mxu0 0.0
        %2068 = vmatmul.mubr.f32.gmra.mxu0 %v1827
        %v2069 = vpop.f32.mrf.mxu0
        %v2070 = vadd.f32 0.0, %v2069
        %v2071 = vpop.f32.mrf.mxu0
        %v2072 = vadd.f32 0.0, %v2071
        %2073 = vmatprep.mubr.f32.mxu0 0.0
        %2074 = vmatmul.mubr.f32.gmra.mxu0 %v1830
        %v2075 = vpop.f32.mrf.mxu0
        %v2076 = vadd.f32 0.0, %v2075
        %v2077 = vpop.f32.mrf.mxu0
        %v2078 = vadd.f32 0.0, %v2077
        %2079 = vmatprep.mubr.f32.mxu0 0.0
        %2080 = vmatmul.mubr.f32.gmra.mxu0 %v1833
        %v2081 = vpop.f32.mrf.mxu0
        %v2082 = vadd.f32 0.0, %v2081
        %v2083 = vpop.f32.mrf.mxu0
        %v2084 = vadd.f32 0.0, %v2083
        %2085 = vmatprep.mubr.f32.mxu0 0.0
        %2086 = vmatmul.mubr.f32.gmra.mxu0 %v1836
        %v2087 = vpop.f32.mrf.mxu0
        %v2088 = vadd.f32 0.0, %v2087
        %v2089 = vpop.f32.mrf.mxu0
        %v2090 = vadd.f32 0.0, %v2089
        %2091 = vmatprep.mubr.f32.mxu0 0.0
        %2092 = vmatmul.mubr.f32.gmra.mxu0 %v1839
        %v2093 = vpop.f32.mrf.mxu0
        %v2094 = vadd.f32 0.0, %v2093
        %v2095 = vpop.f32.mrf.mxu0
        %v2096 = vadd.f32 0.0, %v2095
        %2097 = vdwg.mxu0
        %v2098 = vmax.f32 %v1908, %v1910
        %2099 = vmax.xlane.f32.xlu0 %v2098
        %v2100 = vpop.xlane.xlu0 %2099
        %v2101 = vmax.f32 %v1914, %v1916
        %2102 = vmax.xlane.f32.xlu0 %v2101
        %v2103 = vpop.xlane.xlu0 %2102
        %v2104 = vmax.f32 %v1920, %v1922
        %2105 = vmax.xlane.f32.xlu0 %v2104
        %v2106 = vpop.xlane.xlu0 %2105
        %v2107 = vmax.f32 %v1926, %v1928
        %2108 = vmax.xlane.f32.xlu0 %v2107
        %v2109 = vpop.xlane.xlu0 %2108
        %v2110 = vmax.f32 %v1932, %v1934
        %2111 = vmax.xlane.f32.xlu0 %v2110
        %v2112 = vpop.xlane.xlu0 %2111
        %v2113 = vmax.f32 %v1938, %v1940
        %2114 = vmax.xlane.f32.xlu0 %v2113
        %v2115 = vpop.xlane.xlu0 %2114
        %v2116 = vmax.f32 %v1944, %v1946
        %2117 = vmax.xlane.f32.xlu0 %v2116
        %v2118 = vpop.xlane.xlu0 %2117
        %v2119 = vmax.f32 %v1950, %v1952
        %2120 = vmax.xlane.f32.xlu0 %v2119
        %v2121 = vpop.xlane.xlu0 %2120
        %v2122 = vmax.f32 %v1956, %v1958
        %2123 = vmax.xlane.f32.xlu0 %v2122
        %v2124 = vpop.xlane.xlu0 %2123
        %v2125 = vmax.f32 %v1962, %v1964
        %2126 = vmax.xlane.f32.xlu0 %v2125
        %v2127 = vpop.xlane.xlu0 %2126
        %v2128 = vmax.f32 %v1968, %v1970
        %2129 = vmax.xlane.f32.xlu0 %v2128
        %v2130 = vpop.xlane.xlu0 %2129
        %v2131 = vmax.f32 %v1974, %v1976
        %2132 = vmax.xlane.f32.xlu0 %v2131
        %v2133 = vpop.xlane.xlu0 %2132
        %v2134 = vmax.f32 %v1980, %v1982
        %2135 = vmax.xlane.f32.xlu0 %v2134
        %v2136 = vpop.xlane.xlu0 %2135
        %v2137 = vmax.f32 %v1986, %v1988
        %2138 = vmax.xlane.f32.xlu0 %v2137
        %v2139 = vpop.xlane.xlu0 %2138
        %v2140 = vmax.f32 %v1992, %v1994
        %2141 = vmax.xlane.f32.xlu0 %v2140
        %v2142 = vpop.xlane.xlu0 %2141
        %v2143 = vmax.f32 %v1998, %v2000
        %2144 = vmax.xlane.f32.xlu0 %v2143
        %v2145 = vpop.xlane.xlu0 %2144
        %v2146 = vmax.f32 %v2004, %v2006
        %2147 = vmax.xlane.f32.xlu0 %v2146
        %v2148 = vpop.xlane.xlu0 %2147
        %v2149 = vmax.f32 %v2010, %v2012
        %2150 = vmax.xlane.f32.xlu0 %v2149
        %v2151 = vpop.xlane.xlu0 %2150
        %v2152 = vmax.f32 %v2016, %v2018
        %2153 = vmax.xlane.f32.xlu0 %v2152
        %v2154 = vpop.xlane.xlu0 %2153
        %v2155 = vmax.f32 %v2022, %v2024
        %2156 = vmax.xlane.f32.xlu0 %v2155
        %v2157 = vpop.xlane.xlu0 %2156
        %v2158 = vmax.f32 %v2028, %v2030
        %2159 = vmax.xlane.f32.xlu0 %v2158
        %v2160 = vpop.xlane.xlu0 %2159
        %v2161 = vmax.f32 %v2034, %v2036
        %2162 = vmax.xlane.f32.xlu0 %v2161
        %v2163 = vpop.xlane.xlu0 %2162
        %v2164 = vmax.f32 %v2040, %v2042
        %2165 = vmax.xlane.f32.xlu0 %v2164
        %v2166 = vpop.xlane.xlu0 %2165
        %v2167 = vmax.f32 %v2046, %v2048
        %2168 = vmax.xlane.f32.xlu0 %v2167
        %v2169 = vpop.xlane.xlu0 %2168
        %v2170 = vmax.f32 %v2052, %v2054
        %2171 = vmax.xlane.f32.xlu0 %v2170
        %v2172 = vpop.xlane.xlu0 %2171
        %v2173 = vmax.f32 %v2058, %v2060
        %2174 = vmax.xlane.f32.xlu0 %v2173
        %v2175 = vpop.xlane.xlu0 %2174
        %v2176 = vmax.f32 %v2064, %v2066
        %2177 = vmax.xlane.f32.xlu0 %v2176
        %v2178 = vpop.xlane.xlu0 %2177
        %v2179 = vmax.f32 %v2070, %v2072
        %2180 = vmax.xlane.f32.xlu0 %v2179
        %v2181 = vpop.xlane.xlu0 %2180
        %v2182 = vmax.f32 %v2076, %v2078
        %2183 = vmax.xlane.f32.xlu0 %v2182
        %v2184 = vpop.xlane.xlu0 %2183
        %v2185 = vmax.f32 %v2082, %v2084
        %2186 = vmax.xlane.f32.xlu0 %v2185
        %v2187 = vpop.xlane.xlu0 %2186
        %v2188 = vmax.f32 %v2088, %v2090
        %2189 = vmax.xlane.f32.xlu0 %v2188
        %v2190 = vpop.xlane.xlu0 %2189
        %v2191 = vmax.f32 %v2094, %v2096
        %2192 = vmax.xlane.f32.xlu0 %v2191
        %v2193 = vpop.xlane.xlu0 %2192
        %v2194 = vsub.f32 %v1908, %v2100
        %v2195 = vsub.f32 %v1910, %v2100
        %v2196 = vsub.f32 %v1914, %v2103
        %v2197 = vsub.f32 %v1916, %v2103
        %v2198 = vsub.f32 %v1920, %v2106
        %v2199 = vsub.f32 %v1922, %v2106
        %v2200 = vsub.f32 %v1926, %v2109
        %v2201 = vsub.f32 %v1928, %v2109
        %v2202 = vsub.f32 %v1932, %v2112
        %v2203 = vsub.f32 %v1934, %v2112
        %v2204 = vsub.f32 %v1938, %v2115
        %v2205 = vsub.f32 %v1940, %v2115
        %v2206 = vsub.f32 %v1944, %v2118
        %v2207 = vsub.f32 %v1946, %v2118
        %v2208 = vsub.f32 %v1950, %v2121
        %v2209 = vsub.f32 %v1952, %v2121
        %v2210 = vsub.f32 %v1956, %v2124
        %v2211 = vsub.f32 %v1958, %v2124
        %v2212 = vsub.f32 %v1962, %v2127
        %v2213 = vsub.f32 %v1964, %v2127
        %v2214 = vsub.f32 %v1968, %v2130
        %v2215 = vsub.f32 %v1970, %v2130
        %v2216 = vsub.f32 %v1974, %v2133
        %v2217 = vsub.f32 %v1976, %v2133
        %v2218 = vsub.f32 %v1980, %v2136
        %v2219 = vsub.f32 %v1982, %v2136
        %v2220 = vsub.f32 %v1986, %v2139
        %v2221 = vsub.f32 %v1988, %v2139
        %v2222 = vsub.f32 %v1992, %v2142
        %v2223 = vsub.f32 %v1994, %v2142
        %v2224 = vsub.f32 %v1998, %v2145
        %v2225 = vsub.f32 %v2000, %v2145
        %v2226 = vsub.f32 %v2004, %v2148
        %v2227 = vsub.f32 %v2006, %v2148
        %v2228 = vsub.f32 %v2010, %v2151
        %v2229 = vsub.f32 %v2012, %v2151
        %v2230 = vsub.f32 %v2016, %v2154
        %v2231 = vsub.f32 %v2018, %v2154
        %v2232 = vsub.f32 %v2022, %v2157
        %v2233 = vsub.f32 %v2024, %v2157
        %v2234 = vsub.f32 %v2028, %v2160
        %v2235 = vsub.f32 %v2030, %v2160
        %v2236 = vsub.f32 %v2034, %v2163
        %v2237 = vsub.f32 %v2036, %v2163
        %v2238 = vsub.f32 %v2040, %v2166
        %v2239 = vsub.f32 %v2042, %v2166
        %v2240 = vsub.f32 %v2046, %v2169
        %v2241 = vsub.f32 %v2048, %v2169
        %v2242 = vsub.f32 %v2052, %v2172
        %v2243 = vsub.f32 %v2054, %v2172
        %v2244 = vsub.f32 %v2058, %v2175
        %v2245 = vsub.f32 %v2060, %v2175
        %v2246 = vsub.f32 %v2064, %v2178
        %v2247 = vsub.f32 %v2066, %v2178
        %v2248 = vsub.f32 %v2070, %v2181
        %v2249 = vsub.f32 %v2072, %v2181
        %v2250 = vsub.f32 %v2076, %v2184
        %v2251 = vsub.f32 %v2078, %v2184
        %v2252 = vsub.f32 %v2082, %v2187
        %v2253 = vsub.f32 %v2084, %v2187
        %v2254 = vsub.f32 %v2088, %v2190
        %v2255 = vsub.f32 %v2090, %v2190
        %v2256 = vsub.f32 %v2094, %v2193
        %v2257 = vsub.f32 %v2096, %v2193
        %v2258 = vmul.f32 %v2194, 1.442695
        %v2259 = vpow.pop %v2258
        %v2260 = vmul.f32 %v2195, 1.442695
        %v2261 = vpow.pop %v2260
        %v2262 = vmul.f32 %v2196, 1.442695
        %v2263 = vpow.pop %v2262
        %v2264 = vmul.f32 %v2197, 1.442695
        %v2265 = vpow.pop %v2264
        %v2266 = vmul.f32 %v2198, 1.442695
        %v2267 = vpow.pop %v2266
        %v2268 = vmul.f32 %v2199, 1.442695
        %v2269 = vpow.pop %v2268
        %v2270 = vmul.f32 %v2200, 1.442695
        %v2271 = vpow.pop %v2270
        %v2272 = vmul.f32 %v2201, 1.442695
        %v2273 = vpow.pop %v2272
        %v2274 = vmul.f32 %v2202, 1.442695
        %v2275 = vpow.pop %v2274
        %v2276 = vmul.f32 %v2203, 1.442695
        %v2277 = vpow.pop %v2276
        %v2278 = vmul.f32 %v2204, 1.442695
        %v2279 = vpow.pop %v2278
        %v2280 = vmul.f32 %v2205, 1.442695
        %v2281 = vpow.pop %v2280
        %v2282 = vmul.f32 %v2206, 1.442695
        %v2283 = vpow.pop %v2282
        %v2284 = vmul.f32 %v2207, 1.442695
        %v2285 = vpow.pop %v2284
        %v2286 = vmul.f32 %v2208, 1.442695
        %v2287 = vpow.pop %v2286
        %v2288 = vmul.f32 %v2209, 1.442695
        %v2289 = vpow.pop %v2288
        %v2290 = vmul.f32 %v2210, 1.442695
        %v2291 = vpow.pop %v2290
        %v2292 = vmul.f32 %v2211, 1.442695
        %v2293 = vpow.pop %v2292
        %v2294 = vmul.f32 %v2212, 1.442695
        %v2295 = vpow.pop %v2294
        %v2296 = vmul.f32 %v2213, 1.442695
        %v2297 = vpow.pop %v2296
        %v2298 = vmul.f32 %v2214, 1.442695
        %v2299 = vpow.pop %v2298
        %v2300 = vmul.f32 %v2215, 1.442695
        %v2301 = vpow.pop %v2300
        %v2302 = vmul.f32 %v2216, 1.442695
        %v2303 = vpow.pop %v2302
        %v2304 = vmul.f32 %v2217, 1.442695
        %v2305 = vpow.pop %v2304
        %v2306 = vmul.f32 %v2218, 1.442695
        %v2307 = vpow.pop %v2306
        %v2308 = vmul.f32 %v2219, 1.442695
        %v2309 = vpow.pop %v2308
        %v2310 = vmul.f32 %v2220, 1.442695
        %v2311 = vpow.pop %v2310
        %v2312 = vmul.f32 %v2221, 1.442695
        %v2313 = vpow.pop %v2312
        %v2314 = vmul.f32 %v2222, 1.442695
        %v2315 = vpow.pop %v2314
        %v2316 = vmul.f32 %v2223, 1.442695
        %v2317 = vpow.pop %v2316
        %v2318 = vmul.f32 %v2224, 1.442695
        %v2319 = vpow.pop %v2318
        %v2320 = vmul.f32 %v2225, 1.442695
        %v2321 = vpow.pop %v2320
        %v2322 = vmul.f32 %v2226, 1.442695
        %v2323 = vpow.pop %v2322
        %v2324 = vmul.f32 %v2227, 1.442695
        %v2325 = vpow.pop %v2324
        %v2326 = vmul.f32 %v2228, 1.442695
        %v2327 = vpow.pop %v2326
        %v2328 = vmul.f32 %v2229, 1.442695
        %v2329 = vpow.pop %v2328
        %v2330 = vmul.f32 %v2230, 1.442695
        %v2331 = vpow.pop %v2330
        %v2332 = vmul.f32 %v2231, 1.442695
        %v2333 = vpow.pop %v2332
        %v2334 = vmul.f32 %v2232, 1.442695
        %v2335 = vpow.pop %v2334
        %v2336 = vmul.f32 %v2233, 1.442695
        %v2337 = vpow.pop %v2336
        %v2338 = vmul.f32 %v2234, 1.442695
        %v2339 = vpow.pop %v2338
        %v2340 = vmul.f32 %v2235, 1.442695
        %v2341 = vpow.pop %v2340
        %v2342 = vmul.f32 %v2236, 1.442695
        %v2343 = vpow.pop %v2342
        %v2344 = vmul.f32 %v2237, 1.442695
        %v2345 = vpow.pop %v2344
        %v2346 = vmul.f32 %v2238, 1.442695
        %v2347 = vpow.pop %v2346
        %v2348 = vmul.f32 %v2239, 1.442695
        %v2349 = vpow.pop %v2348
        %v2350 = vmul.f32 %v2240, 1.442695
        %v2351 = vpow.pop %v2350
        %v2352 = vmul.f32 %v2241, 1.442695
        %v2353 = vpow.pop %v2352
        %v2354 = vmul.f32 %v2242, 1.442695
        %v2355 = vpow.pop %v2354
        %v2356 = vmul.f32 %v2243, 1.442695
        %v2357 = vpow.pop %v2356
        %v2358 = vmul.f32 %v2244, 1.442695
        %v2359 = vpow.pop %v2358
        %v2360 = vmul.f32 %v2245, 1.442695
        %v2361 = vpow.pop %v2360
        %v2362 = vmul.f32 %v2246, 1.442695
        %v2363 = vpow.pop %v2362
        %v2364 = vmul.f32 %v2247, 1.442695
        %v2365 = vpow.pop %v2364
        %v2366 = vmul.f32 %v2248, 1.442695
        %v2367 = vpow.pop %v2366
        %v2368 = vmul.f32 %v2249, 1.442695
        %v2369 = vpow.pop %v2368
        %v2370 = vmul.f32 %v2250, 1.442695
        %v2371 = vpow.pop %v2370
        %v2372 = vmul.f32 %v2251, 1.442695
        %v2373 = vpow.pop %v2372
        %v2374 = vmul.f32 %v2252, 1.442695
        %v2375 = vpow.pop %v2374
        %v2376 = vmul.f32 %v2253, 1.442695
        %v2377 = vpow.pop %v2376
        %v2378 = vmul.f32 %v2254, 1.442695
        %v2379 = vpow.pop %v2378
        %v2380 = vmul.f32 %v2255, 1.442695
        %v2381 = vpow.pop %v2380
        %v2382 = vmul.f32 %v2256, 1.442695
        %v2383 = vpow.pop %v2382
        %v2384 = vmul.f32 %v2257, 1.442695
        %v2385 = vpow.pop %v2384
        %v2386 = vadd.f32 %v2259, %v2261
        %2387 = vadd.xlane.f32.xlu0 %v2386
        %v2388 = vpop.xlane.xlu0 %2387
        %v2389 = vadd.f32 %v2263, %v2265
        %2390 = vadd.xlane.f32.xlu0 %v2389
        %v2391 = vpop.xlane.xlu0 %2390
        %v2392 = vadd.f32 %v2267, %v2269
        %2393 = vadd.xlane.f32.xlu0 %v2392
        %v2394 = vpop.xlane.xlu0 %2393
        %v2395 = vadd.f32 %v2271, %v2273
        %2396 = vadd.xlane.f32.xlu0 %v2395
        %v2397 = vpop.xlane.xlu0 %2396
        %v2398 = vadd.f32 %v2275, %v2277
        %2399 = vadd.xlane.f32.xlu0 %v2398
        %v2400 = vpop.xlane.xlu0 %2399
        %v2401 = vadd.f32 %v2279, %v2281
        %2402 = vadd.xlane.f32.xlu0 %v2401
        %v2403 = vpop.xlane.xlu0 %2402
        %v2404 = vadd.f32 %v2283, %v2285
        %2405 = vadd.xlane.f32.xlu0 %v2404
        %v2406 = vpop.xlane.xlu0 %2405
        %v2407 = vadd.f32 %v2287, %v2289
        %2408 = vadd.xlane.f32.xlu0 %v2407
        %v2409 = vpop.xlane.xlu0 %2408
        %v2410 = vadd.f32 %v2291, %v2293
        %2411 = vadd.xlane.f32.xlu0 %v2410
        %v2412 = vpop.xlane.xlu0 %2411
        %v2413 = vadd.f32 %v2295, %v2297
        %2414 = vadd.xlane.f32.xlu0 %v2413
        %v2415 = vpop.xlane.xlu0 %2414
        %v2416 = vadd.f32 %v2299, %v2301
        %2417 = vadd.xlane.f32.xlu0 %v2416
        %v2418 = vpop.xlane.xlu0 %2417
        %v2419 = vadd.f32 %v2303, %v2305
        %2420 = vadd.xlane.f32.xlu0 %v2419
        %v2421 = vpop.xlane.xlu0 %2420
        %v2422 = vadd.f32 %v2307, %v2309
        %2423 = vadd.xlane.f32.xlu0 %v2422
        %v2424 = vpop.xlane.xlu0 %2423
        %v2425 = vadd.f32 %v2311, %v2313
        %2426 = vadd.xlane.f32.xlu0 %v2425
        %v2427 = vpop.xlane.xlu0 %2426
        %v2428 = vadd.f32 %v2315, %v2317
        %2429 = vadd.xlane.f32.xlu0 %v2428
        %v2430 = vpop.xlane.xlu0 %2429
        %v2431 = vadd.f32 %v2319, %v2321
        %2432 = vadd.xlane.f32.xlu0 %v2431
        %v2433 = vpop.xlane.xlu0 %2432
        %v2434 = vadd.f32 %v2323, %v2325
        %2435 = vadd.xlane.f32.xlu0 %v2434
        %v2436 = vpop.xlane.xlu0 %2435
        %v2437 = vadd.f32 %v2327, %v2329
        %2438 = vadd.xlane.f32.xlu0 %v2437
        %v2439 = vpop.xlane.xlu0 %2438
        %v2440 = vadd.f32 %v2331, %v2333
        %2441 = vadd.xlane.f32.xlu0 %v2440
        %v2442 = vpop.xlane.xlu0 %2441
        %v2443 = vadd.f32 %v2335, %v2337
        %2444 = vadd.xlane.f32.xlu0 %v2443
        %v2445 = vpop.xlane.xlu0 %2444
        %v2446 = vadd.f32 %v2339, %v2341
        %2447 = vadd.xlane.f32.xlu0 %v2446
        %v2448 = vpop.xlane.xlu0 %2447
        %v2449 = vadd.f32 %v2343, %v2345
        %2450 = vadd.xlane.f32.xlu0 %v2449
        %v2451 = vpop.xlane.xlu0 %2450
        %v2452 = vadd.f32 %v2347, %v2349
        %2453 = vadd.xlane.f32.xlu0 %v2452
        %v2454 = vpop.xlane.xlu0 %2453
        %v2455 = vadd.f32 %v2351, %v2353
        %2456 = vadd.xlane.f32.xlu0 %v2455
        %v2457 = vpop.xlane.xlu0 %2456
        %v2458 = vadd.f32 %v2355, %v2357
        %2459 = vadd.xlane.f32.xlu0 %v2458
        %v2460 = vpop.xlane.xlu0 %2459
        %v2461 = vadd.f32 %v2359, %v2361
        %2462 = vadd.xlane.f32.xlu0 %v2461
        %v2463 = vpop.xlane.xlu0 %2462
        %v2464 = vadd.f32 %v2363, %v2365
        %2465 = vadd.xlane.f32.xlu0 %v2464
        %v2466 = vpop.xlane.xlu0 %2465
        %v2467 = vadd.f32 %v2367, %v2369
        %2468 = vadd.xlane.f32.xlu0 %v2467
        %v2469 = vpop.xlane.xlu0 %2468
        %v2470 = vadd.f32 %v2371, %v2373
        %2471 = vadd.xlane.f32.xlu0 %v2470
        %v2472 = vpop.xlane.xlu0 %2471
        %v2473 = vadd.f32 %v2375, %v2377
        %2474 = vadd.xlane.f32.xlu0 %v2473
        %v2475 = vpop.xlane.xlu0 %2474
        %v2476 = vadd.f32 %v2379, %v2381
        %2477 = vadd.xlane.f32.xlu0 %v2476
        %v2478 = vpop.xlane.xlu0 %2477
        %v2479 = vadd.f32 %v2383, %v2385
        %2480 = vadd.xlane.f32.xlu0 %v2479
        %v2481 = vpop.xlane.xlu0 %2480
        %v2482 = vrcp.pop %v2388
        %v2483 = vrcp.pop %v2391
        %v2484 = vrcp.pop %v2394
        %v2485 = vrcp.pop %v2397
        %v2486 = vrcp.pop %v2400
        %v2487 = vrcp.pop %v2403
        %v2488 = vrcp.pop %v2406
        %v2489 = vrcp.pop %v2409
        %v2490 = vrcp.pop %v2412
        %v2491 = vrcp.pop %v2415
        %v2492 = vrcp.pop %v2418
        %v2493 = vrcp.pop %v2421
        %v2494 = vrcp.pop %v2424
        %v2495 = vrcp.pop %v2427
        %v2496 = vrcp.pop %v2430
        %v2497 = vrcp.pop %v2433
        %v2498 = vrcp.pop %v2436
        %v2499 = vrcp.pop %v2439
        %v2500 = vrcp.pop %v2442
        %v2501 = vrcp.pop %v2445
        %v2502 = vrcp.pop %v2448
        %v2503 = vrcp.pop %v2451
        %v2504 = vrcp.pop %v2454
        %v2505 = vrcp.pop %v2457
        %v2506 = vrcp.pop %v2460
        %v2507 = vrcp.pop %v2463
        %v2508 = vrcp.pop %v2466
        %v2509 = vrcp.pop %v2469
        %v2510 = vrcp.pop %v2472
        %v2511 = vrcp.pop %v2475
        %v2512 = vrcp.pop %v2478
        %v2513 = vrcp.pop %v2481
        %v2514 = vmul.f32 %v2388, %v2482
        %v2515 = vmul.f32 %v2391, %v2483
        %v2516 = vmul.f32 %v2394, %v2484
        %v2517 = vmul.f32 %v2397, %v2485
        %v2518 = vmul.f32 %v2400, %v2486
        %v2519 = vmul.f32 %v2403, %v2487
        %v2520 = vmul.f32 %v2406, %v2488
        %v2521 = vmul.f32 %v2409, %v2489
        %v2522 = vmul.f32 %v2412, %v2490
        %v2523 = vmul.f32 %v2415, %v2491
        %v2524 = vmul.f32 %v2418, %v2492
        %v2525 = vmul.f32 %v2421, %v2493
        %v2526 = vmul.f32 %v2424, %v2494
        %v2527 = vmul.f32 %v2427, %v2495
        %v2528 = vmul.f32 %v2430, %v2496
        %v2529 = vmul.f32 %v2433, %v2497
        %v2530 = vmul.f32 %v2436, %v2498
        %v2531 = vmul.f32 %v2439, %v2499
        %v2532 = vmul.f32 %v2442, %v2500
        %v2533 = vmul.f32 %v2445, %v2501
        %v2534 = vmul.f32 %v2448, %v2502
        %v2535 = vmul.f32 %v2451, %v2503
        %v2536 = vmul.f32 %v2454, %v2504
        %v2537 = vmul.f32 %v2457, %v2505
        %v2538 = vmul.f32 %v2460, %v2506
        %v2539 = vmul.f32 %v2463, %v2507
        %v2540 = vmul.f32 %v2466, %v2508
        %v2541 = vmul.f32 %v2469, %v2509
        %v2542 = vmul.f32 %v2472, %v2510
        %v2543 = vmul.f32 %v2475, %v2511
        %v2544 = vmul.f32 %v2478, %v2512
        %v2545 = vmul.f32 %v2481, %v2513
        %v2546 = vsub.f32 2.0, %v2514
        %v2547 = vsub.f32 2.0, %v2515
        %v2548 = vsub.f32 2.0, %v2516
        %v2549 = vsub.f32 2.0, %v2517
        %v2550 = vsub.f32 2.0, %v2518
        %v2551 = vsub.f32 2.0, %v2519
        %v2552 = vsub.f32 2.0, %v2520
        %v2553 = vsub.f32 2.0, %v2521
        %v2554 = vsub.f32 2.0, %v2522
        %v2555 = vsub.f32 2.0, %v2523
        %v2556 = vsub.f32 2.0, %v2524
        %v2557 = vsub.f32 2.0, %v2525
        %v2558 = vsub.f32 2.0, %v2526
        %v2559 = vsub.f32 2.0, %v2527
        %v2560 = vsub.f32 2.0, %v2528
        %v2561 = vsub.f32 2.0, %v2529
        %v2562 = vsub.f32 2.0, %v2530
        %v2563 = vsub.f32 2.0, %v2531
        %v2564 = vsub.f32 2.0, %v2532
        %v2565 = vsub.f32 2.0, %v2533
        %v2566 = vsub.f32 2.0, %v2534
        %v2567 = vsub.f32 2.0, %v2535
        %v2568 = vsub.f32 2.0, %v2536
        %v2569 = vsub.f32 2.0, %v2537
        %v2570 = vsub.f32 2.0, %v2538
        %v2571 = vsub.f32 2.0, %v2539
        %v2572 = vsub.f32 2.0, %v2540
        %v2573 = vsub.f32 2.0, %v2541
        %v2574 = vsub.f32 2.0, %v2542
        %v2575 = vsub.f32 2.0, %v2543
        %v2576 = vsub.f32 2.0, %v2544
        %v2577 = vsub.f32 2.0, %v2545
        %v2578 = vmul.f32 %v2482, %v2546
        %v2579 = vmul.f32 %v2483, %v2547
        %v2580 = vmul.f32 %v2484, %v2548
        %v2581 = vmul.f32 %v2485, %v2549
        %v2582 = vmul.f32 %v2486, %v2550
        %v2583 = vmul.f32 %v2487, %v2551
        %v2584 = vmul.f32 %v2488, %v2552
        %v2585 = vmul.f32 %v2489, %v2553
        %v2586 = vmul.f32 %v2490, %v2554
        %v2587 = vmul.f32 %v2491, %v2555
        %v2588 = vmul.f32 %v2492, %v2556
        %v2589 = vmul.f32 %v2493, %v2557
        %v2590 = vmul.f32 %v2494, %v2558
        %v2591 = vmul.f32 %v2495, %v2559
        %v2592 = vmul.f32 %v2496, %v2560
        %v2593 = vmul.f32 %v2497, %v2561
        %v2594 = vmul.f32 %v2498, %v2562
        %v2595 = vmul.f32 %v2499, %v2563
        %v2596 = vmul.f32 %v2500, %v2564
        %v2597 = vmul.f32 %v2501, %v2565
        %v2598 = vmul.f32 %v2502, %v2566
        %v2599 = vmul.f32 %v2503, %v2567
        %v2600 = vmul.f32 %v2504, %v2568
        %v2601 = vmul.f32 %v2505, %v2569
        %v2602 = vmul.f32 %v2506, %v2570
        %v2603 = vmul.f32 %v2507, %v2571
        %v2604 = vmul.f32 %v2508, %v2572
        %v2605 = vmul.f32 %v2509, %v2573
        %v2606 = vmul.f32 %v2510, %v2574
        %v2607 = vmul.f32 %v2511, %v2575
        %v2608 = vmul.f32 %v2512, %v2576
        %v2609 = vmul.f32 %v2513, %v2577
        %2610 = vmatprep.subr.mxu0 0.0
        %2611 = vmatpush1.xpose.msra.mxu0 0.0
        %2612 = vmatprep.subr.mxu0 0.0
        %2613 = vmatpush1.xpose.msra.mxu0 0.0
        %2614 = vmatprep.subr.mxu0 0.0
        %2615 = vmatpush1.xpose.msra.mxu0 0.0
        %2616 = vmatprep.subr.mxu0 0.0
        %2617 = vmatpush1.xpose.msra.mxu0 0.0
        %2618 = vmatprep.subr.mxu0 0.0
        %2619 = vmatpush1.xpose.msra.mxu0 0.0
        %2620 = vmatprep.subr.mxu0 0.0
        %2621 = vmatpush1.xpose.msra.mxu0 0.0
        %2622 = vmatprep.subr.mxu0 0.0
        %2623 = vmatpush1.xpose.msra.mxu0 0.0
        %2624 = vmatprep.subr.mxu0 0.0
        %2625 = vmatpush1.xpose.msra.mxu0 0.0
        %2626 = vmatprep.subr.mxu0 0.0
        %2627 = vmatpush1.xpose.msra.mxu0 0.0
        %2628 = vmatprep.subr.mxu0 0.0
        %2629 = vmatpush1.xpose.msra.mxu0 0.0
        %2630 = vmatprep.subr.mxu0 0.0
        %2631 = vmatpush1.xpose.msra.mxu0 0.0
        %2632 = vmatprep.subr.mxu0 0.0
        %2633 = vmatpush1.xpose.msra.mxu0 0.0
        %2634 = vmatprep.subr.mxu0 0.0
        %2635 = vmatpush1.xpose.msra.mxu0 0.0
        %2636 = vmatprep.subr.mxu0 0.0
        %2637 = vmatpush1.xpose.msra.mxu0 0.0
        %2638 = vmatprep.subr.mxu0 0.0
        %2639 = vmatpush1.xpose.msra.mxu0 0.0
        %2640 = vmatprep.subr.mxu0 %v480
        %2641 = vmatpush1.xpose.msra.mxu0 %v478
        %2642 = vmatprep.subr.mxu0 0.0
        %2643 = vmatpush2.xpose.msra.mxu0 0.0
        %2644 = vmatprep.subr.mxu0 0.0
        %2645 = vmatpush2.xpose.msra.mxu0 0.0
        %2646 = vmatprep.subr.mxu0 0.0
        %2647 = vmatpush2.xpose.msra.mxu0 0.0
        %2648 = vmatprep.subr.mxu0 0.0
        %2649 = vmatpush2.xpose.msra.mxu0 0.0
        %2650 = vmatprep.subr.mxu0 0.0
        %2651 = vmatpush2.xpose.msra.mxu0 0.0
        %2652 = vmatprep.subr.mxu0 0.0
        %2653 = vmatpush2.xpose.msra.mxu0 0.0
        %2654 = vmatprep.subr.mxu0 0.0
        %2655 = vmatpush2.xpose.msra.mxu0 0.0
        %2656 = vmatprep.subr.mxu0 0.0
        %2657 = vmatpush2.xpose.msra.mxu0 0.0
        %2658 = vmatprep.subr.mxu0 0.0
        %2659 = vmatpush2.xpose.msra.mxu0 0.0
        %2660 = vmatprep.subr.mxu0 0.0
        %2661 = vmatpush2.xpose.msra.mxu0 0.0
        %2662 = vmatprep.subr.mxu0 0.0
        %2663 = vmatpush2.xpose.msra.mxu0 0.0
        %2664 = vmatprep.subr.mxu0 0.0
        %2665 = vmatpush2.xpose.msra.mxu0 0.0
        %2666 = vmatprep.subr.mxu0 0.0
        %2667 = vmatpush2.xpose.msra.mxu0 0.0
        %2668 = vmatprep.subr.mxu0 0.0
        %2669 = vmatpush2.xpose.msra.mxu0 0.0
        %2670 = vmatprep.subr.mxu0 0.0
        %2671 = vmatpush2.xpose.msra.mxu0 0.0
        %2672 = vmatprep.subr.mxu0 0.0
        %2673 = vmatpush2.xpose.msra.mxu0 0.0
        %2674 = vmatprep.mubr.f32.mxu0 %v2261
        %2675 = vmatmul.mubr.f32.gmra.mxu0 %v2259
        %v2676 = vpop.f32.mrf.mxu0
        %v2677 = vadd.f32 0.0, %v2676
        %v2678 = vpop.f32.mrf.mxu0
        %2679 = vmatprep.mubr.f32.mxu0 %v2265
        %2680 = vmatmul.mubr.f32.gmra.mxu0 %v2263
        %v2681 = vpop.f32.mrf.mxu0
        %v2682 = vadd.f32 0.0, %v2681
        %v2683 = vpop.f32.mrf.mxu0
        %2684 = vmatprep.mubr.f32.mxu0 %v2269
        %2685 = vmatmul.mubr.f32.gmra.mxu0 %v2267
        %v2686 = vpop.f32.mrf.mxu0
        %v2687 = vadd.f32 0.0, %v2686
        %v2688 = vpop.f32.mrf.mxu0
        %2689 = vmatprep.mubr.f32.mxu0 %v2273
        %2690 = vmatmul.mubr.f32.gmra.mxu0 %v2271
        %v2691 = vpop.f32.mrf.mxu0
        %v2692 = vadd.f32 0.0, %v2691
        %v2693 = vpop.f32.mrf.mxu0
        %2694 = vmatprep.mubr.f32.mxu0 %v2277
        %2695 = vmatmul.mubr.f32.gmra.mxu0 %v2275
        %v2696 = vpop.f32.mrf.mxu0
        %v2697 = vadd.f32 0.0, %v2696
        %v2698 = vpop.f32.mrf.mxu0
        %2699 = vmatprep.mubr.f32.mxu0 %v2281
        %2700 = vmatmul.mubr.f32.gmra.mxu0 %v2279
        %v2701 = vpop.f32.mrf.mxu0
        %v2702 = vadd.f32 0.0, %v2701
        %v2703 = vpop.f32.mrf.mxu0
        %2704 = vmatprep.mubr.f32.mxu0 %v2285
        %2705 = vmatmul.mubr.f32.gmra.mxu0 %v2283
        %v2706 = vpop.f32.mrf.mxu0
        %v2707 = vadd.f32 0.0, %v2706
        %v2708 = vpop.f32.mrf.mxu0
        %2709 = vmatprep.mubr.f32.mxu0 %v2289
        %2710 = vmatmul.mubr.f32.gmra.mxu0 %v2287
        %v2711 = vpop.f32.mrf.mxu0
        %v2712 = vadd.f32 0.0, %v2711
        %v2713 = vpop.f32.mrf.mxu0
        %2714 = vmatprep.mubr.f32.mxu0 %v2293
        %2715 = vmatmul.mubr.f32.gmra.mxu0 %v2291
        %v2716 = vpop.f32.mrf.mxu0
        %v2717 = vadd.f32 0.0, %v2716
        %v2718 = vpop.f32.mrf.mxu0
        %2719 = vmatprep.mubr.f32.mxu0 %v2297
        %2720 = vmatmul.mubr.f32.gmra.mxu0 %v2295
        %v2721 = vpop.f32.mrf.mxu0
        %v2722 = vadd.f32 0.0, %v2721
        %v2723 = vpop.f32.mrf.mxu0
        %2724 = vmatprep.mubr.f32.mxu0 %v2301
        %2725 = vmatmul.mubr.f32.gmra.mxu0 %v2299
        %v2726 = vpop.f32.mrf.mxu0
        %v2727 = vadd.f32 0.0, %v2726
        %v2728 = vpop.f32.mrf.mxu0
        %2729 = vmatprep.mubr.f32.mxu0 %v2305
        %2730 = vmatmul.mubr.f32.gmra.mxu0 %v2303
        %v2731 = vpop.f32.mrf.mxu0
        %v2732 = vadd.f32 0.0, %v2731
        %v2733 = vpop.f32.mrf.mxu0
        %2734 = vmatprep.mubr.f32.mxu0 %v2309
        %2735 = vmatmul.mubr.f32.gmra.mxu0 %v2307
        %v2736 = vpop.f32.mrf.mxu0
        %v2737 = vadd.f32 0.0, %v2736
        %v2738 = vpop.f32.mrf.mxu0
        %2739 = vmatprep.mubr.f32.mxu0 %v2313
        %2740 = vmatmul.mubr.f32.gmra.mxu0 %v2311
        %v2741 = vpop.f32.mrf.mxu0
        %v2742 = vadd.f32 0.0, %v2741
        %v2743 = vpop.f32.mrf.mxu0
        %2744 = vmatprep.mubr.f32.mxu0 %v2317
        %2745 = vmatmul.mubr.f32.gmra.mxu0 %v2315
        %v2746 = vpop.f32.mrf.mxu0
        %v2747 = vadd.f32 0.0, %v2746
        %v2748 = vpop.f32.mrf.mxu0
        %2749 = vmatprep.mubr.f32.mxu0 %v2321
        %2750 = vmatmul.mubr.f32.gmra.mxu0 %v2319
        %v2751 = vpop.f32.mrf.mxu0
        %v2752 = vadd.f32 0.0, %v2751
        %v2753 = vpop.f32.mrf.mxu0
        %2754 = vmatprep.mubr.f32.mxu0 %v2325
        %2755 = vmatmul.mubr.f32.gmra.mxu0 %v2323
        %v2756 = vpop.f32.mrf.mxu0
        %v2757 = vadd.f32 0.0, %v2756
        %v2758 = vpop.f32.mrf.mxu0
        %2759 = vmatprep.mubr.f32.mxu0 %v2329
        %2760 = vmatmul.mubr.f32.gmra.mxu0 %v2327
        %v2761 = vpop.f32.mrf.mxu0
        %v2762 = vadd.f32 0.0, %v2761
        %v2763 = vpop.f32.mrf.mxu0
        %2764 = vmatprep.mubr.f32.mxu0 %v2333
        %2765 = vmatmul.mubr.f32.gmra.mxu0 %v2331
        %v2766 = vpop.f32.mrf.mxu0
        %v2767 = vadd.f32 0.0, %v2766
        %v2768 = vpop.f32.mrf.mxu0
        %2769 = vmatprep.mubr.f32.mxu0 %v2337
        %2770 = vmatmul.mubr.f32.gmra.mxu0 %v2335
        %v2771 = vpop.f32.mrf.mxu0
        %v2772 = vadd.f32 0.0, %v2771
        %v2773 = vpop.f32.mrf.mxu0
        %2774 = vmatprep.mubr.f32.mxu0 %v2341
        %2775 = vmatmul.mubr.f32.gmra.mxu0 %v2339
        %v2776 = vpop.f32.mrf.mxu0
        %v2777 = vadd.f32 0.0, %v2776
        %v2778 = vpop.f32.mrf.mxu0
        %2779 = vmatprep.mubr.f32.mxu0 %v2345
        %2780 = vmatmul.mubr.f32.gmra.mxu0 %v2343
        %v2781 = vpop.f32.mrf.mxu0
        %v2782 = vadd.f32 0.0, %v2781
        %v2783 = vpop.f32.mrf.mxu0
        %2784 = vmatprep.mubr.f32.mxu0 %v2349
        %2785 = vmatmul.mubr.f32.gmra.mxu0 %v2347
        %v2786 = vpop.f32.mrf.mxu0
        %v2787 = vadd.f32 0.0, %v2786
        %v2788 = vpop.f32.mrf.mxu0
        %2789 = vmatprep.mubr.f32.mxu0 %v2353
        %2790 = vmatmul.mubr.f32.gmra.mxu0 %v2351
        %v2791 = vpop.f32.mrf.mxu0
        %v2792 = vadd.f32 0.0, %v2791
        %v2793 = vpop.f32.mrf.mxu0
        %2794 = vmatprep.mubr.f32.mxu0 %v2357
        %2795 = vmatmul.mubr.f32.gmra.mxu0 %v2355
        %v2796 = vpop.f32.mrf.mxu0
        %v2797 = vadd.f32 0.0, %v2796
        %v2798 = vpop.f32.mrf.mxu0
        %2799 = vmatprep.mubr.f32.mxu0 %v2361
        %2800 = vmatmul.mubr.f32.gmra.mxu0 %v2359
        %v2801 = vpop.f32.mrf.mxu0
        %v2802 = vadd.f32 0.0, %v2801
        %v2803 = vpop.f32.mrf.mxu0
        %2804 = vmatprep.mubr.f32.mxu0 %v2365
        %2805 = vmatmul.mubr.f32.gmra.mxu0 %v2363
        %v2806 = vpop.f32.mrf.mxu0
        %v2807 = vadd.f32 0.0, %v2806
        %v2808 = vpop.f32.mrf.mxu0
        %2809 = vmatprep.mubr.f32.mxu0 %v2369
        %2810 = vmatmul.mubr.f32.gmra.mxu0 %v2367
        %v2811 = vpop.f32.mrf.mxu0
        %v2812 = vadd.f32 0.0, %v2811
        %v2813 = vpop.f32.mrf.mxu0
        %2814 = vmatprep.mubr.f32.mxu0 %v2373
        %2815 = vmatmul.mubr.f32.gmra.mxu0 %v2371
        %v2816 = vpop.f32.mrf.mxu0
        %v2817 = vadd.f32 0.0, %v2816
        %v2818 = vpop.f32.mrf.mxu0
        %2819 = vmatprep.mubr.f32.mxu0 %v2377
        %2820 = vmatmul.mubr.f32.gmra.mxu0 %v2375
        %v2821 = vpop.f32.mrf.mxu0
        %v2822 = vadd.f32 0.0, %v2821
        %v2823 = vpop.f32.mrf.mxu0
        %2824 = vmatprep.mubr.f32.mxu0 %v2381
        %2825 = vmatmul.mubr.f32.gmra.mxu0 %v2379
        %v2826 = vpop.f32.mrf.mxu0
        %v2827 = vadd.f32 0.0, %v2826
        %v2828 = vpop.f32.mrf.mxu0
        %2829 = vmatprep.mubr.f32.mxu0 %v2385
        %2830 = vmatmul.mubr.f32.gmra.mxu0 %v2383
        %v2831 = vpop.f32.mrf.mxu0
        %v2832 = vadd.f32 0.0, %v2831
        %v2833 = vpop.f32.mrf.mxu0
        %2834 = vdwg.mxu0
        %v2835 = vmul.f32 %v2677, %v2578
        %v2836 = vmul.f32 %v2682, %v2579
        %v2837 = vmul.f32 %v2687, %v2580
        %v2838 = vmul.f32 %v2692, %v2581
        %v2839 = vmul.f32 %v2697, %v2582
        %v2840 = vmul.f32 %v2702, %v2583
        %v2841 = vmul.f32 %v2707, %v2584
        %v2842 = vmul.f32 %v2712, %v2585
        %v2843 = vmul.f32 %v2717, %v2586
        %v2844 = vmul.f32 %v2722, %v2587
        %v2845 = vmul.f32 %v2727, %v2588
        %v2846 = vmul.f32 %v2732, %v2589
        %v2847 = vmul.f32 %v2737, %v2590
        %v2848 = vmul.f32 %v2742, %v2591
        %v2849 = vmul.f32 %v2747, %v2592
        %v2850 = vmul.f32 %v2752, %v2593
        %v2851 = vmul.f32 %v2757, %v2594
        %v2852 = vmul.f32 %v2762, %v2595
        %v2853 = vmul.f32 %v2767, %v2596
        %v2854 = vmul.f32 %v2772, %v2597
        %v2855 = vmul.f32 %v2777, %v2598
        %v2856 = vmul.f32 %v2782, %v2599
        %v2857 = vmul.f32 %v2787, %v2600
        %v2858 = vmul.f32 %v2792, %v2601
        %v2859 = vmul.f32 %v2797, %v2602
        %v2860 = vmul.f32 %v2802, %v2603
        %v2861 = vmul.f32 %v2807, %v2604
        %v2862 = vmul.f32 %v2812, %v2605
        %v2863 = vmul.f32 %v2817, %v2606
        %v2864 = vmul.f32 %v2822, %v2607
        %v2865 = vmul.f32 %v2827, %v2608
        %v2866 = vmul.f32 %v2832, %v2609
        %v2868 = vsel %vm558, %v2835, 0
        %v2871 = vsel %vm558, %v2836, 0
        %v2874 = vsel %vm558, %v2837, 0
        %v2877 = vsel %vm558, %v2838, 0
        %v2880 = vsel %vm558, %v2839, 0
        %v2883 = vsel %vm558, %v2840, 0
        %v2886 = vsel %vm558, %v2841, 0
        %v2889 = vsel %vm558, %v2842, 0
        %v2892 = vsel %vm558, %v2843, 0
        %v2895 = vsel %vm558, %v2844, 0
        %v2898 = vsel %vm558, %v2845, 0
        %v2901 = vsel %vm558, %v2846, 0
        %v2904 = vsel %vm558, %v2847, 0
        %v2907 = vsel %vm558, %v2848, 0
        %v2910 = vsel %vm558, %v2849, 0
        %v2913 = vsel %vm558, %v2850, 0
        %v2916 = vsel %vm558, %v2851, 0
        %v2919 = vsel %vm558, %v2852, 0
        %v2922 = vsel %vm558, %v2853, 0
        %v2925 = vsel %vm558, %v2854, 0
        %v2928 = vsel %vm558, %v2855, 0
        %v2931 = vsel %vm558, %v2856, 0
        %v2934 = vsel %vm558, %v2857, 0
        %v2937 = vsel %vm558, %v2858, 0
        %v2940 = vsel %vm558, %v2859, 0
        %v2943 = vsel %vm558, %v2860, 0
        %v2946 = vsel %vm558, %v2861, 0
        %v2949 = vsel %vm558, %v2862, 0
        %v2952 = vsel %vm558, %v2863, 0
        %v2955 = vsel %vm558, %v2864, 0
        %v2958 = vsel %vm558, %v2865, 0
        %v2961 = vsel %vm558, %v2866, 0
        %2963 = vmatprep.subr.mxu0 0.0
        %2964 = vmatpush1.msra.mxu0 0.0
        %2965 = vmatprep.subr.mxu0 0.0
        %2966 = vmatpush1.msra.mxu0 0.0
        %2967 = vmatprep.subr.mxu0 0.0
        %2968 = vmatpush1.msra.mxu0 0.0
        %2969 = vmatprep.subr.mxu0 0.0
        %2970 = vmatpush1.msra.mxu0 0.0
        %2971 = vmatprep.subr.mxu0 0.0
        %2972 = vmatpush1.msra.mxu0 0.0
        %2973 = vmatprep.subr.mxu0 0.0
        %2974 = vmatpush1.msra.mxu0 0.0
        %2975 = vmatprep.subr.mxu0 0.0
        %2976 = vmatpush1.msra.mxu0 0.0
        %2977 = vmatprep.subr.mxu0 0.0
        %2978 = vmatpush1.msra.mxu0 0.0
        %2979 = vmatprep.subr.mxu0 0.0
        %2980 = vmatpush1.msra.mxu0 0.0
        %2981 = vmatprep.subr.mxu0 0.0
        %2982 = vmatpush1.msra.mxu0 0.0
        %2983 = vmatprep.subr.mxu0 0.0
        %2984 = vmatpush1.msra.mxu0 0.0
        %2985 = vmatprep.subr.mxu0 0.0
        %2986 = vmatpush1.msra.mxu0 0.0
        %2987 = vmatprep.subr.mxu0 0.0
        %2988 = vmatpush1.msra.mxu0 0.0
        %2989 = vmatprep.subr.mxu0 0.0
        %2990 = vmatpush1.msra.mxu0 0.0
        %2991 = vmatprep.subr.mxu0 0.0
        %2992 = vmatpush1.msra.mxu0 0.0
        %2993 = vmatprep.subr.mxu0 0.0
        %2994 = vmatpush1.msra.mxu0 %v248
        %2995 = vmatprep.subr.mxu0 0.0
        %2996 = vmatpush2.msra.mxu0 0.0
        %2997 = vmatprep.subr.mxu0 0.0
        %2998 = vmatpush2.msra.mxu0 0.0
        %2999 = vmatprep.subr.mxu0 0.0
        %3000 = vmatpush2.msra.mxu0 0.0
        %3001 = vmatprep.subr.mxu0 0.0
        %3002 = vmatpush2.msra.mxu0 0.0
        %3003 = vmatprep.subr.mxu0 0.0
        %3004 = vmatpush2.msra.mxu0 0.0
        %3005 = vmatprep.subr.mxu0 0.0
        %3006 = vmatpush2.msra.mxu0 0.0
        %3007 = vmatprep.subr.mxu0 0.0
        %3008 = vmatpush2.msra.mxu0 0.0
        %3009 = vmatprep.subr.mxu0 0.0
        %3010 = vmatpush2.msra.mxu0 0.0
        %3011 = vmatprep.subr.mxu0 0.0
        %3012 = vmatpush2.msra.mxu0 0.0
        %3013 = vmatprep.subr.mxu0 0.0
        %3014 = vmatpush2.msra.mxu0 0.0
        %3015 = vmatprep.subr.mxu0 0.0
        %3016 = vmatpush2.msra.mxu0 0.0
        %3017 = vmatprep.subr.mxu0 0.0
        %3018 = vmatpush2.msra.mxu0 0.0
        %3019 = vmatprep.subr.mxu0 0.0
        %3020 = vmatpush2.msra.mxu0 0.0
        %3021 = vmatprep.subr.mxu0 0.0
        %3022 = vmatpush2.msra.mxu0 0.0
        %3023 = vmatprep.subr.mxu0 0.0
        %3024 = vmatpush2.msra.mxu0 0.0
        %3025 = vmatprep.subr.mxu0 0.0
        %3026 = vmatpush2.msra.mxu0 0.0
        %3027 = vmatprep.mubr.f32.mxu0 0.0
        %3028 = vmatmul.mubr.f32.gmra.mxu0 %v2868
        %v3029 = vpop.f32.mrf.mxu0
        %v3030 = vadd.f32 0.0, %v3029
        %v3031 = vpop.f32.mrf.mxu0
        %3032 = vmatprep.mubr.f32.mxu0 0.0
        %3033 = vmatmul.mubr.f32.gmra.mxu0 %v2871
        %v3034 = vpop.f32.mrf.mxu0
        %v3035 = vadd.f32 0.0, %v3034
        %v3036 = vpop.f32.mrf.mxu0
        %3037 = vmatprep.mubr.f32.mxu0 0.0
        %3038 = vmatmul.mubr.f32.gmra.mxu0 %v2874
        %v3039 = vpop.f32.mrf.mxu0
        %v3040 = vadd.f32 0.0, %v3039
        %v3041 = vpop.f32.mrf.mxu0
        %3042 = vmatprep.mubr.f32.mxu0 0.0
        %3043 = vmatmul.mubr.f32.gmra.mxu0 %v2877
        %v3044 = vpop.f32.mrf.mxu0
        %v3045 = vadd.f32 0.0, %v3044
        %v3046 = vpop.f32.mrf.mxu0
        %3047 = vmatprep.mubr.f32.mxu0 0.0
        %3048 = vmatmul.mubr.f32.gmra.mxu0 %v2880
        %v3049 = vpop.f32.mrf.mxu0
        %v3050 = vadd.f32 0.0, %v3049
        %v3051 = vpop.f32.mrf.mxu0
        %3052 = vmatprep.mubr.f32.mxu0 0.0
        %3053 = vmatmul.mubr.f32.gmra.mxu0 %v2883
        %v3054 = vpop.f32.mrf.mxu0
        %v3055 = vadd.f32 0.0, %v3054
        %v3056 = vpop.f32.mrf.mxu0
        %3057 = vmatprep.mubr.f32.mxu0 0.0
        %3058 = vmatmul.mubr.f32.gmra.mxu0 %v2886
        %v3059 = vpop.f32.mrf.mxu0
        %v3060 = vadd.f32 0.0, %v3059
        %v3061 = vpop.f32.mrf.mxu0
        %3062 = vmatprep.mubr.f32.mxu0 0.0
        %3063 = vmatmul.mubr.f32.gmra.mxu0 %v2889
        %v3064 = vpop.f32.mrf.mxu0
        %v3065 = vadd.f32 0.0, %v3064
        %v3066 = vpop.f32.mrf.mxu0
        %3067 = vmatprep.mubr.f32.mxu0 0.0
        %3068 = vmatmul.mubr.f32.gmra.mxu0 %v2892
        %v3069 = vpop.f32.mrf.mxu0
        %v3070 = vadd.f32 0.0, %v3069
        %v3071 = vpop.f32.mrf.mxu0
        %3072 = vmatprep.mubr.f32.mxu0 0.0
        %3073 = vmatmul.mubr.f32.gmra.mxu0 %v2895
        %v3074 = vpop.f32.mrf.mxu0
        %v3075 = vadd.f32 0.0, %v3074
        %v3076 = vpop.f32.mrf.mxu0
        %3077 = vmatprep.mubr.f32.mxu0 0.0
        %3078 = vmatmul.mubr.f32.gmra.mxu0 %v2898
        %v3079 = vpop.f32.mrf.mxu0
        %v3080 = vadd.f32 0.0, %v3079
        %v3081 = vpop.f32.mrf.mxu0
        %3082 = vmatprep.mubr.f32.mxu0 0.0
        %3083 = vmatmul.mubr.f32.gmra.mxu0 %v2901
        %v3084 = vpop.f32.mrf.mxu0
        %v3085 = vadd.f32 0.0, %v3084
        %v3086 = vpop.f32.mrf.mxu0
        %3087 = vmatprep.mubr.f32.mxu0 0.0
        %3088 = vmatmul.mubr.f32.gmra.mxu0 %v2904
        %v3089 = vpop.f32.mrf.mxu0
        %v3090 = vadd.f32 0.0, %v3089
        %v3091 = vpop.f32.mrf.mxu0
        %3092 = vmatprep.mubr.f32.mxu0 0.0
        %3093 = vmatmul.mubr.f32.gmra.mxu0 %v2907
        %v3094 = vpop.f32.mrf.mxu0
        %v3095 = vadd.f32 0.0, %v3094
        %v3096 = vpop.f32.mrf.mxu0
        %3097 = vmatprep.mubr.f32.mxu0 0.0
        %3098 = vmatmul.mubr.f32.gmra.mxu0 %v2910
        %v3099 = vpop.f32.mrf.mxu0
        %v3100 = vadd.f32 0.0, %v3099
        %v3101 = vpop.f32.mrf.mxu0
        %3102 = vmatprep.mubr.f32.mxu0 0.0
        %3103 = vmatmul.mubr.f32.gmra.mxu0 %v2913
        %v3104 = vpop.f32.mrf.mxu0
        %v3105 = vadd.f32 0.0, %v3104
        %v3106 = vpop.f32.mrf.mxu0
        %3107 = vmatprep.mubr.f32.mxu0 0.0
        %3108 = vmatmul.mubr.f32.gmra.mxu0 %v2916
        %v3109 = vpop.f32.mrf.mxu0
        %v3110 = vadd.f32 0.0, %v3109
        %v3111 = vpop.f32.mrf.mxu0
        %3112 = vmatprep.mubr.f32.mxu0 0.0
        %3113 = vmatmul.mubr.f32.gmra.mxu0 %v2919
        %v3114 = vpop.f32.mrf.mxu0
        %v3115 = vadd.f32 0.0, %v3114
        %v3116 = vpop.f32.mrf.mxu0
        %3117 = vmatprep.mubr.f32.mxu0 0.0
        %3118 = vmatmul.mubr.f32.gmra.mxu0 %v2922
        %v3119 = vpop.f32.mrf.mxu0
        %v3120 = vadd.f32 0.0, %v3119
        %v3121 = vpop.f32.mrf.mxu0
        %3122 = vmatprep.mubr.f32.mxu0 0.0
        %3123 = vmatmul.mubr.f32.gmra.mxu0 %v2925
        %v3124 = vpop.f32.mrf.mxu0
        %v3125 = vadd.f32 0.0, %v3124
        %v3126 = vpop.f32.mrf.mxu0
        %3127 = vmatprep.mubr.f32.mxu0 0.0
        %3128 = vmatmul.mubr.f32.gmra.mxu0 %v2928
        %v3129 = vpop.f32.mrf.mxu0
        %v3130 = vadd.f32 0.0, %v3129
        %v3131 = vpop.f32.mrf.mxu0
        %3132 = vmatprep.mubr.f32.mxu0 0.0
        %3133 = vmatmul.mubr.f32.gmra.mxu0 %v2931
        %v3134 = vpop.f32.mrf.mxu0
        %v3135 = vadd.f32 0.0, %v3134
        %v3136 = vpop.f32.mrf.mxu0
        %3137 = vmatprep.mubr.f32.mxu0 0.0
        %3138 = vmatmul.mubr.f32.gmra.mxu0 %v2934
        %v3139 = vpop.f32.mrf.mxu0
        %v3140 = vadd.f32 0.0, %v3139
        %v3141 = vpop.f32.mrf.mxu0
        %3142 = vmatprep.mubr.f32.mxu0 0.0
        %3143 = vmatmul.mubr.f32.gmra.mxu0 %v2937
        %v3144 = vpop.f32.mrf.mxu0
        %v3145 = vadd.f32 0.0, %v3144
        %v3146 = vpop.f32.mrf.mxu0
        %3147 = vmatprep.mubr.f32.mxu0 0.0
        %3148 = vmatmul.mubr.f32.gmra.mxu0 %v2940
        %v3149 = vpop.f32.mrf.mxu0
        %v3150 = vadd.f32 0.0, %v3149
        %v3151 = vpop.f32.mrf.mxu0
        %3152 = vmatprep.mubr.f32.mxu0 0.0
        %3153 = vmatmul.mubr.f32.gmra.mxu0 %v2943
        %v3154 = vpop.f32.mrf.mxu0
        %v3155 = vadd.f32 0.0, %v3154
        %v3156 = vpop.f32.mrf.mxu0
        %3157 = vmatprep.mubr.f32.mxu0 0.0
        %3158 = vmatmul.mubr.f32.gmra.mxu0 %v2946
        %v3159 = vpop.f32.mrf.mxu0
        %v3160 = vadd.f32 0.0, %v3159
        %v3161 = vpop.f32.mrf.mxu0
        %3162 = vmatprep.mubr.f32.mxu0 0.0
        %3163 = vmatmul.mubr.f32.gmra.mxu0 %v2949
        %v3164 = vpop.f32.mrf.mxu0
        %v3165 = vadd.f32 0.0, %v3164
        %v3166 = vpop.f32.mrf.mxu0
        %3167 = vmatprep.mubr.f32.mxu0 0.0
        %3168 = vmatmul.mubr.f32.gmra.mxu0 %v2952
        %v3169 = vpop.f32.mrf.mxu0
        %v3170 = vadd.f32 0.0, %v3169
        %v3171 = vpop.f32.mrf.mxu0
        %3172 = vmatprep.mubr.f32.mxu0 0.0
        %3173 = vmatmul.mubr.f32.gmra.mxu0 %v2955
        %v3174 = vpop.f32.mrf.mxu0
        %v3175 = vadd.f32 0.0, %v3174
        %v3176 = vpop.f32.mrf.mxu0
        %3177 = vmatprep.mubr.f32.mxu0 0.0
        %3178 = vmatmul.mubr.f32.gmra.mxu0 %v2958
        %v3179 = vpop.f32.mrf.mxu0
        %v3180 = vadd.f32 0.0, %v3179
        %v3181 = vpop.f32.mrf.mxu0
        %3182 = vmatprep.mubr.f32.mxu0 0.0
        %3183 = vmatmul.mubr.f32.gmra.mxu0 %v2961
        %v3184 = vpop.f32.mrf.mxu0
        %v3185 = vadd.f32 0.0, %v3184
        %v3186 = vpop.f32.mrf.mxu0
        %3187 = vdwg.mxu0
        %v3189 = vsel %vm558, %v1649, 0
        %v3192 = vsel %vm558, %v1650, 0
        %v3195 = vsel %vm558, %v1651, 0
        %v3198 = vsel %vm558, %v1652, 0
        %v3201 = vsel %vm558, %v1653, 0
        %v3204 = vsel %vm558, %v1654, 0
        %v3207 = vsel %vm558, %v1655, 0
        %v3210 = vsel %vm558, %v1656, 0
        %v3213 = vsel %vm558, %v1657, 0
        %v3216 = vsel %vm558, %v1658, 0
        %v3219 = vsel %vm558, %v1659, 0
        %v3222 = vsel %vm558, %v1660, 0
        %v3225 = vsel %vm558, %v1661, 0
        %v3228 = vsel %vm558, %v1662, 0
        %v3231 = vsel %vm558, %v1663, 0
        %v3234 = vsel %vm558, %v1664, 0
        %v3237 = vsel %vm558, %v1665, 0
        %v3240 = vsel %vm558, %v1666, 0
        %v3243 = vsel %vm558, %v1667, 0
        %v3246 = vsel %vm558, %v1668, 0
        %v3249 = vsel %vm558, %v1669, 0
        %v3252 = vsel %vm558, %v1670, 0
        %v3255 = vsel %vm558, %v1671, 0
        %v3258 = vsel %vm558, %v1672, 0
        %v3261 = vsel %vm558, %v1673, 0
        %v3264 = vsel %vm558, %v1674, 0
        %v3267 = vsel %vm558, %v1675, 0
        %v3270 = vsel %vm558, %v1676, 0
        %v3273 = vsel %vm558, %v1677, 0
        %v3276 = vsel %vm558, %v1678, 0
        %v3279 = vsel %vm558, %v1679, 0
        %v3282 = vsel %vm558, %v1680, 0
        %3284 = vmatprep.subr.mxu0 0.0
        %3285 = vmatpush1.msra.mxu0 0.0
        %3286 = vmatprep.subr.mxu0 0.0
        %3287 = vmatpush1.msra.mxu0 0.0
        %3288 = vmatprep.subr.mxu0 0.0
        %3289 = vmatpush1.msra.mxu0 0.0
        %3290 = vmatprep.subr.mxu0 0.0
        %3291 = vmatpush1.msra.mxu0 0.0
        %3292 = vmatprep.subr.mxu0 0.0
        %3293 = vmatpush1.msra.mxu0 0.0
        %3294 = vmatprep.subr.mxu0 0.0
        %3295 = vmatpush1.msra.mxu0 0.0
        %3296 = vmatprep.subr.mxu0 0.0
        %3297 = vmatpush1.msra.mxu0 0.0
        %3298 = vmatprep.subr.mxu0 0.0
        %3299 = vmatpush1.msra.mxu0 0.0
        %3300 = vmatprep.subr.mxu0 0.0
        %3301 = vmatpush1.msra.mxu0 0.0
        %3302 = vmatprep.subr.mxu0 0.0
        %3303 = vmatpush1.msra.mxu0 0.0
        %3304 = vmatprep.subr.mxu0 0.0
        %3305 = vmatpush1.msra.mxu0 0.0
        %3306 = vmatprep.subr.mxu0 0.0
        %3307 = vmatpush1.msra.mxu0 0.0
        %3308 = vmatprep.subr.mxu0 0.0
        %3309 = vmatpush1.msra.mxu0 0.0
        %3310 = vmatprep.subr.mxu0 0.0
        %3311 = vmatpush1.msra.mxu0 0.0
        %3312 = vmatprep.subr.mxu0 0.0
        %3313 = vmatpush1.msra.mxu0 0.0
        %3314 = vmatprep.subr.mxu0 0.0
        %3315 = vmatpush1.msra.mxu0 %v247
        %3316 = vmatprep.subr.mxu0 0.0
        %3317 = vmatpush2.msra.mxu0 0.0
        %3318 = vmatprep.subr.mxu0 0.0
        %3319 = vmatpush2.msra.mxu0 0.0
        %3320 = vmatprep.subr.mxu0 0.0
        %3321 = vmatpush2.msra.mxu0 0.0
        %3322 = vmatprep.subr.mxu0 0.0
        %3323 = vmatpush2.msra.mxu0 0.0
        %3324 = vmatprep.subr.mxu0 0.0
        %3325 = vmatpush2.msra.mxu0 0.0
        %3326 = vmatprep.subr.mxu0 0.0
        %3327 = vmatpush2.msra.mxu0 0.0
        %3328 = vmatprep.subr.mxu0 0.0
        %3329 = vmatpush2.msra.mxu0 0.0
        %3330 = vmatprep.subr.mxu0 0.0
        %3331 = vmatpush2.msra.mxu0 0.0
        %3332 = vmatprep.subr.mxu0 0.0
        %3333 = vmatpush2.msra.mxu0 0.0
        %3334 = vmatprep.subr.mxu0 0.0
        %3335 = vmatpush2.msra.mxu0 0.0
        %3336 = vmatprep.subr.mxu0 0.0
        %3337 = vmatpush2.msra.mxu0 0.0
        %3338 = vmatprep.subr.mxu0 0.0
        %3339 = vmatpush2.msra.mxu0 0.0
        %3340 = vmatprep.subr.mxu0 0.0
        %3341 = vmatpush2.msra.mxu0 0.0
        %3342 = vmatprep.subr.mxu0 0.0
        %3343 = vmatpush2.msra.mxu0 0.0
        %3344 = vmatprep.subr.mxu0 0.0
        %3345 = vmatpush2.msra.mxu0 0.0
        %3346 = vmatprep.subr.mxu0 0.0
        %3347 = vmatpush2.msra.mxu0 0.0
        %3348 = vmatprep.mubr.f32.mxu0 0.0
        %3349 = vmatmul.mubr.f32.gmra.mxu0 %v3189
        %v3350 = vpop.f32.mrf.mxu0
        %v3351 = vadd.f32 %v3030, %v3350
        %v3352 = vpop.f32.mrf.mxu0
        %3353 = vmatprep.mubr.f32.mxu0 0.0
        %3354 = vmatmul.mubr.f32.gmra.mxu0 %v3192
        %v3355 = vpop.f32.mrf.mxu0
        %v3356 = vadd.f32 %v3035, %v3355
        %v3357 = vpop.f32.mrf.mxu0
        %3358 = vmatprep.mubr.f32.mxu0 0.0
        %3359 = vmatmul.mubr.f32.gmra.mxu0 %v3195
        %v3360 = vpop.f32.mrf.mxu0
        %v3361 = vadd.f32 %v3040, %v3360
        %v3362 = vpop.f32.mrf.mxu0
        %3363 = vmatprep.mubr.f32.mxu0 0.0
        %3364 = vmatmul.mubr.f32.gmra.mxu0 %v3198
        %v3365 = vpop.f32.mrf.mxu0
        %v3366 = vadd.f32 %v3045, %v3365
        %v3367 = vpop.f32.mrf.mxu0
        %3368 = vmatprep.mubr.f32.mxu0 0.0
        %3369 = vmatmul.mubr.f32.gmra.mxu0 %v3201
        %v3370 = vpop.f32.mrf.mxu0
        %v3371 = vadd.f32 %v3050, %v3370
        %v3372 = vpop.f32.mrf.mxu0
        %3373 = vmatprep.mubr.f32.mxu0 0.0
        %3374 = vmatmul.mubr.f32.gmra.mxu0 %v3204
        %v3375 = vpop.f32.mrf.mxu0
        %v3376 = vadd.f32 %v3055, %v3375
        %v3377 = vpop.f32.mrf.mxu0
        %3378 = vmatprep.mubr.f32.mxu0 0.0
        %3379 = vmatmul.mubr.f32.gmra.mxu0 %v3207
        %v3380 = vpop.f32.mrf.mxu0
        %v3381 = vadd.f32 %v3060, %v3380
        %v3382 = vpop.f32.mrf.mxu0
        %3383 = vmatprep.mubr.f32.mxu0 0.0
        %3384 = vmatmul.mubr.f32.gmra.mxu0 %v3210
        %v3385 = vpop.f32.mrf.mxu0
        %v3386 = vadd.f32 %v3065, %v3385
        %v3387 = vpop.f32.mrf.mxu0
        %3388 = vmatprep.mubr.f32.mxu0 0.0
        %3389 = vmatmul.mubr.f32.gmra.mxu0 %v3213
        %v3390 = vpop.f32.mrf.mxu0
        %v3391 = vadd.f32 %v3070, %v3390
        %v3392 = vpop.f32.mrf.mxu0
        %3393 = vmatprep.mubr.f32.mxu0 0.0
        %3394 = vmatmul.mubr.f32.gmra.mxu0 %v3216
        %v3395 = vpop.f32.mrf.mxu0
        %v3396 = vadd.f32 %v3075, %v3395
        %v3397 = vpop.f32.mrf.mxu0
        %3398 = vmatprep.mubr.f32.mxu0 0.0
        %3399 = vmatmul.mubr.f32.gmra.mxu0 %v3219
        %v3400 = vpop.f32.mrf.mxu0
        %v3401 = vadd.f32 %v3080, %v3400
        %v3402 = vpop.f32.mrf.mxu0
        %3403 = vmatprep.mubr.f32.mxu0 0.0
        %3404 = vmatmul.mubr.f32.gmra.mxu0 %v3222
        %v3405 = vpop.f32.mrf.mxu0
        %v3406 = vadd.f32 %v3085, %v3405
        %v3407 = vpop.f32.mrf.mxu0
        %3408 = vmatprep.mubr.f32.mxu0 0.0
        %3409 = vmatmul.mubr.f32.gmra.mxu0 %v3225
        %v3410 = vpop.f32.mrf.mxu0
        %v3411 = vadd.f32 %v3090, %v3410
        %v3412 = vpop.f32.mrf.mxu0
        %3413 = vmatprep.mubr.f32.mxu0 0.0
        %3414 = vmatmul.mubr.f32.gmra.mxu0 %v3228
        %v3415 = vpop.f32.mrf.mxu0
        %v3416 = vadd.f32 %v3095, %v3415
        %v3417 = vpop.f32.mrf.mxu0
        %3418 = vmatprep.mubr.f32.mxu0 0.0
        %3419 = vmatmul.mubr.f32.gmra.mxu0 %v3231
        %v3420 = vpop.f32.mrf.mxu0
        %v3421 = vadd.f32 %v3100, %v3420
        %v3422 = vpop.f32.mrf.mxu0
        %3423 = vmatprep.mubr.f32.mxu0 0.0
        %3424 = vmatmul.mubr.f32.gmra.mxu0 %v3234
        %v3425 = vpop.f32.mrf.mxu0
        %v3426 = vadd.f32 %v3105, %v3425
        %v3427 = vpop.f32.mrf.mxu0
        %3428 = vmatprep.mubr.f32.mxu0 0.0
        %3429 = vmatmul.mubr.f32.gmra.mxu0 %v3237
        %v3430 = vpop.f32.mrf.mxu0
        %v3431 = vadd.f32 %v3110, %v3430
        %v3432 = vpop.f32.mrf.mxu0
        %3433 = vmatprep.mubr.f32.mxu0 0.0
        %3434 = vmatmul.mubr.f32.gmra.mxu0 %v3240
        %v3435 = vpop.f32.mrf.mxu0
        %v3436 = vadd.f32 %v3115, %v3435
        %v3437 = vpop.f32.mrf.mxu0
        %3438 = vmatprep.mubr.f32.mxu0 0.0
        %3439 = vmatmul.mubr.f32.gmra.mxu0 %v3243
        %v3440 = vpop.f32.mrf.mxu0
        %v3441 = vadd.f32 %v3120, %v3440
        %v3442 = vpop.f32.mrf.mxu0
        %3443 = vmatprep.mubr.f32.mxu0 0.0
        %3444 = vmatmul.mubr.f32.gmra.mxu0 %v3246
        %v3445 = vpop.f32.mrf.mxu0
        %v3446 = vadd.f32 %v3125, %v3445
        %v3447 = vpop.f32.mrf.mxu0
        %3448 = vmatprep.mubr.f32.mxu0 0.0
        %3449 = vmatmul.mubr.f32.gmra.mxu0 %v3249
        %v3450 = vpop.f32.mrf.mxu0
        %v3451 = vadd.f32 %v3130, %v3450
        %v3452 = vpop.f32.mrf.mxu0
        %3453 = vmatprep.mubr.f32.mxu0 0.0
        %3454 = vmatmul.mubr.f32.gmra.mxu0 %v3252
        %v3455 = vpop.f32.mrf.mxu0
        %v3456 = vadd.f32 %v3135, %v3455
        %v3457 = vpop.f32.mrf.mxu0
        %3458 = vmatprep.mubr.f32.mxu0 0.0
        %3459 = vmatmul.mubr.f32.gmra.mxu0 %v3255
        %v3460 = vpop.f32.mrf.mxu0
        %v3461 = vadd.f32 %v3140, %v3460
        %v3462 = vpop.f32.mrf.mxu0
        %3463 = vmatprep.mubr.f32.mxu0 0.0
        %3464 = vmatmul.mubr.f32.gmra.mxu0 %v3258
        %v3465 = vpop.f32.mrf.mxu0
        %v3466 = vadd.f32 %v3145, %v3465
        %v3467 = vpop.f32.mrf.mxu0
        %3468 = vmatprep.mubr.f32.mxu0 0.0
        %3469 = vmatmul.mubr.f32.gmra.mxu0 %v3261
        %v3470 = vpop.f32.mrf.mxu0
        %v3471 = vadd.f32 %v3150, %v3470
        %v3472 = vpop.f32.mrf.mxu0
        %3473 = vmatprep.mubr.f32.mxu0 0.0
        %3474 = vmatmul.mubr.f32.gmra.mxu0 %v3264
        %v3475 = vpop.f32.mrf.mxu0
        %v3476 = vadd.f32 %v3155, %v3475
        %v3477 = vpop.f32.mrf.mxu0
        %3478 = vmatprep.mubr.f32.mxu0 0.0
        %3479 = vmatmul.mubr.f32.gmra.mxu0 %v3267
        %v3480 = vpop.f32.mrf.mxu0
        %v3481 = vadd.f32 %v3160, %v3480
        %v3482 = vpop.f32.mrf.mxu0
        %3483 = vmatprep.mubr.f32.mxu0 0.0
        %3484 = vmatmul.mubr.f32.gmra.mxu0 %v3270
        %v3485 = vpop.f32.mrf.mxu0
        %v3486 = vadd.f32 %v3165, %v3485
        %v3487 = vpop.f32.mrf.mxu0
        %3488 = vmatprep.mubr.f32.mxu0 0.0
        %3489 = vmatmul.mubr.f32.gmra.mxu0 %v3273
        %v3490 = vpop.f32.mrf.mxu0
        %v3491 = vadd.f32 %v3170, %v3490
        %v3492 = vpop.f32.mrf.mxu0
        %3493 = vmatprep.mubr.f32.mxu0 0.0
        %3494 = vmatmul.mubr.f32.gmra.mxu0 %v3276
        %v3495 = vpop.f32.mrf.mxu0
        %v3496 = vadd.f32 %v3175, %v3495
        %v3497 = vpop.f32.mrf.mxu0
        %3498 = vmatprep.mubr.f32.mxu0 0.0
        %3499 = vmatmul.mubr.f32.gmra.mxu0 %v3279
        %v3500 = vpop.f32.mrf.mxu0
        %v3501 = vadd.f32 %v3180, %v3500
        %v3502 = vpop.f32.mrf.mxu0
        %3503 = vmatprep.mubr.f32.mxu0 0.0
        %3504 = vmatmul.mubr.f32.gmra.mxu0 %v3282
        %v3505 = vpop.f32.mrf.mxu0
        %v3506 = vadd.f32 %v3185, %v3505
        %v3507 = vpop.f32.mrf.mxu0
        %3508 = vdwg.mxu0
        %3509 = vxpose.xlu0.b32.start [1/16] %v436, 128
        %3510 = vxpose.xlu0.b32.cont [2/16] 0.0, 128
        %3511 = vxpose.xlu0.b32.cont [3/16] 0.0, 128
        %3512 = vxpose.xlu0.b32.cont [4/16] 0.0, 128
        %3513 = vxpose.xlu0.b32.cont [5/16] 0.0, 128
        %3514 = vxpose.xlu0.b32.cont [6/16] 0.0, 128
        %3515 = vxpose.xlu0.b32.cont [7/16] 0.0, 128
        %3516 = vxpose.xlu0.b32.cont [8/16] 0.0, 128
        %3517 = vxpose.xlu0.b32.cont [9/16] 0.0, 128
        %3518 = vxpose.xlu0.b32.cont [10/16] 0.0, 128
        %3519 = vxpose.xlu0.b32.cont [11/16] 0.0, 128
        %3520 = vxpose.xlu0.b32.cont [12/16] 0.0, 128
        %3521 = vxpose.xlu0.b32.cont [13/16] 0.0, 128
        %3522 = vxpose.xlu0.b32.cont [14/16] 0.0, 128
        %3523 = vxpose.xlu0.b32.cont [15/16] 0.0, 128
        %3524 = vxpose.xlu0.b32.end [16/16] 0.0, 128
        %v3525 = vpop.trf.xlu0
        %v3526 = vpop.trf.xlu0
        %v3527 = vpop.trf.xlu0
        %v3528 = vpop.trf.xlu0
        %v3529 = vpop.trf.xlu0
        %v3530 = vpop.trf.xlu0
        %v3531 = vpop.trf.xlu0
        %v3532 = vpop.trf.xlu0
        %v3533 = vpop.trf.xlu0
        %v3534 = vpop.trf.xlu0
        %v3535 = vpop.trf.xlu0
        %v3536 = vpop.trf.xlu0
        %v3537 = vpop.trf.xlu0
        %v3538 = vpop.trf.xlu0
        %v3539 = vpop.trf.xlu0
        %v3540 = vpop.trf.xlu0
        %3541 = vxpose.xlu0.b32.start [1/16] %v438, 128
        %3542 = vxpose.xlu0.b32.cont [2/16] 0.0, 128
        %3543 = vxpose.xlu0.b32.cont [3/16] 0.0, 128
        %3544 = vxpose.xlu0.b32.cont [4/16] 0.0, 128
        %3545 = vxpose.xlu0.b32.cont [5/16] 0.0, 128
        %3546 = vxpose.xlu0.b32.cont [6/16] 0.0, 128
        %3547 = vxpose.xlu0.b32.cont [7/16] 0.0, 128
        %3548 = vxpose.xlu0.b32.cont [8/16] 0.0, 128
        %3549 = vxpose.xlu0.b32.cont [9/16] 0.0, 128
        %3550 = vxpose.xlu0.b32.cont [10/16] 0.0, 128
        %3551 = vxpose.xlu0.b32.cont [11/16] 0.0, 128
        %3552 = vxpose.xlu0.b32.cont [12/16] 0.0, 128
        %3553 = vxpose.xlu0.b32.cont [13/16] 0.0, 128
        %3554 = vxpose.xlu0.b32.cont [14/16] 0.0, 128
        %3555 = vxpose.xlu0.b32.cont [15/16] 0.0, 128
        %3556 = vxpose.xlu0.b32.end [16/16] 0.0, 128
        %v3557 = vpop.trf.xlu0
        %v3558 = vpop.trf.xlu0
        %v3559 = vpop.trf.xlu0
        %v3560 = vpop.trf.xlu0
        %v3561 = vpop.trf.xlu0
        %v3562 = vpop.trf.xlu0
        %v3563 = vpop.trf.xlu0
        %v3564 = vpop.trf.xlu0
        %v3565 = vpop.trf.xlu0
        %v3566 = vpop.trf.xlu0
        %v3567 = vpop.trf.xlu0
        %v3568 = vpop.trf.xlu0
        %v3569 = vpop.trf.xlu0
        %v3570 = vpop.trf.xlu0
        %v3571 = vpop.trf.xlu0
        %v3572 = vpop.trf.xlu0
        %v3574 = vsel %vm558, %v3525, 0
        %v3577 = vsel %vm558, %v3526, 0
        %v3580 = vsel %vm558, %v3527, 0
        %v3583 = vsel %vm558, %v3528, 0
        %v3586 = vsel %vm558, %v3529, 0
        %v3589 = vsel %vm558, %v3530, 0
        %v3592 = vsel %vm558, %v3531, 0
        %v3595 = vsel %vm558, %v3532, 0
        %v3598 = vsel %vm558, %v3533, 0
        %v3601 = vsel %vm558, %v3534, 0
        %v3604 = vsel %vm558, %v3535, 0
        %v3607 = vsel %vm558, %v3536, 0
        %v3610 = vsel %vm558, %v3537, 0
        %v3613 = vsel %vm558, %v3538, 0
        %v3616 = vsel %vm558, %v3539, 0
        %v3619 = vsel %vm558, %v3540, 0
        %v3622 = vsel %vm558, %v3557, 0
        %v3625 = vsel %vm558, %v3558, 0
        %v3628 = vsel %vm558, %v3559, 0
        %v3631 = vsel %vm558, %v3560, 0
        %v3634 = vsel %vm558, %v3561, 0
        %v3637 = vsel %vm558, %v3562, 0
        %v3640 = vsel %vm558, %v3563, 0
        %v3643 = vsel %vm558, %v3564, 0
        %v3646 = vsel %vm558, %v3565, 0
        %v3649 = vsel %vm558, %v3566, 0
        %v3652 = vsel %vm558, %v3567, 0
        %v3655 = vsel %vm558, %v3568, 0
        %v3658 = vsel %vm558, %v3569, 0
        %v3661 = vsel %vm558, %v3570, 0
        %v3664 = vsel %vm558, %v3571, 0
        %v3667 = vsel %vm558, %v3572, 0
        %3669 = vmatprep.subr.mxu0 0.0
        %3670 = vmatpush1.msra.mxu0 0.0
        %3671 = vmatprep.subr.mxu0 0.0
        %3672 = vmatpush1.msra.mxu0 0.0
        %3673 = vmatprep.subr.mxu0 0.0
        %3674 = vmatpush1.msra.mxu0 0.0
        %3675 = vmatprep.subr.mxu0 0.0
        %3676 = vmatpush1.msra.mxu0 0.0
        %3677 = vmatprep.subr.mxu0 0.0
        %3678 = vmatpush1.msra.mxu0 0.0
        %3679 = vmatprep.subr.mxu0 0.0
        %3680 = vmatpush1.msra.mxu0 0.0
        %3681 = vmatprep.subr.mxu0 0.0
        %3682 = vmatpush1.msra.mxu0 0.0
        %3683 = vmatprep.subr.mxu0 0.0
        %3684 = vmatpush1.msra.mxu0 0.0
        %3685 = vmatprep.subr.mxu0 0.0
        %3686 = vmatpush1.msra.mxu0 0.0
        %3687 = vmatprep.subr.mxu0 0.0
        %3688 = vmatpush1.msra.mxu0 0.0
        %3689 = vmatprep.subr.mxu0 0.0
        %3690 = vmatpush1.msra.mxu0 0.0
        %3691 = vmatprep.subr.mxu0 0.0
        %3692 = vmatpush1.msra.mxu0 0.0
        %3693 = vmatprep.subr.mxu0 0.0
        %3694 = vmatpush1.msra.mxu0 0.0
        %3695 = vmatprep.subr.mxu0 0.0
        %3696 = vmatpush1.msra.mxu0 0.0
        %3697 = vmatprep.subr.mxu0 0.0
        %3698 = vmatpush1.msra.mxu0 0.0
        %3699 = vmatprep.subr.mxu0 %v462
        %3700 = vmatpush1.msra.mxu0 %v460
        %3701 = vmatprep.subr.mxu0 0.0
        %3702 = vmatpush2.msra.mxu0 0.0
        %3703 = vmatprep.subr.mxu0 0.0
        %3704 = vmatpush2.msra.mxu0 0.0
        %3705 = vmatprep.subr.mxu0 0.0
        %3706 = vmatpush2.msra.mxu0 0.0
        %3707 = vmatprep.subr.mxu0 0.0
        %3708 = vmatpush2.msra.mxu0 0.0
        %3709 = vmatprep.subr.mxu0 0.0
        %3710 = vmatpush2.msra.mxu0 0.0
        %3711 = vmatprep.subr.mxu0 0.0
        %3712 = vmatpush2.msra.mxu0 0.0
        %3713 = vmatprep.subr.mxu0 0.0
        %3714 = vmatpush2.msra.mxu0 0.0
        %3715 = vmatprep.subr.mxu0 0.0
        %3716 = vmatpush2.msra.mxu0 0.0
        %3717 = vmatprep.subr.mxu0 0.0
        %3718 = vmatpush2.msra.mxu0 0.0
        %3719 = vmatprep.subr.mxu0 0.0
        %3720 = vmatpush2.msra.mxu0 0.0
        %3721 = vmatprep.subr.mxu0 0.0
        %3722 = vmatpush2.msra.mxu0 0.0
        %3723 = vmatprep.subr.mxu0 0.0
        %3724 = vmatpush2.msra.mxu0 0.0
        %3725 = vmatprep.subr.mxu0 0.0
        %3726 = vmatpush2.msra.mxu0 0.0
        %3727 = vmatprep.subr.mxu0 0.0
        %3728 = vmatpush2.msra.mxu0 0.0
        %3729 = vmatprep.subr.mxu0 0.0
        %3730 = vmatpush2.msra.mxu0 0.0
        %3731 = vmatprep.subr.mxu0 0.0
        %3732 = vmatpush2.msra.mxu0 0.0
        %3733 = vmatprep.mubr.f32.mxu0 0.0
        %3734 = vmatmul.mubr.f32.gmra.mxu0 %v3574
        %v3735 = vpop.f32.mrf.mxu0
        %v3736 = vadd.f32 0.0, %v3735
        %v3737 = vpop.f32.mrf.mxu0
        %v3738 = vadd.f32 0.0, %v3737
        %3739 = vmatprep.mubr.f32.mxu0 0.0
        %3740 = vmatmul.mubr.f32.gmra.mxu0 %v3577
        %v3741 = vpop.f32.mrf.mxu0
        %v3742 = vadd.f32 0.0, %v3741
        %v3743 = vpop.f32.mrf.mxu0
        %v3744 = vadd.f32 0.0, %v3743
        %3745 = vmatprep.mubr.f32.mxu0 0.0
        %3746 = vmatmul.mubr.f32.gmra.mxu0 %v3580
        %v3747 = vpop.f32.mrf.mxu0
        %v3748 = vadd.f32 0.0, %v3747
        %v3749 = vpop.f32.mrf.mxu0
        %v3750 = vadd.f32 0.0, %v3749
        %3751 = vmatprep.mubr.f32.mxu0 0.0
        %3752 = vmatmul.mubr.f32.gmra.mxu0 %v3583
        %v3753 = vpop.f32.mrf.mxu0
        %v3754 = vadd.f32 0.0, %v3753
        %v3755 = vpop.f32.mrf.mxu0
        %v3756 = vadd.f32 0.0, %v3755
        %3757 = vmatprep.mubr.f32.mxu0 0.0
        %3758 = vmatmul.mubr.f32.gmra.mxu0 %v3586
        %v3759 = vpop.f32.mrf.mxu0
        %v3760 = vadd.f32 0.0, %v3759
        %v3761 = vpop.f32.mrf.mxu0
        %v3762 = vadd.f32 0.0, %v3761
        %3763 = vmatprep.mubr.f32.mxu0 0.0
        %3764 = vmatmul.mubr.f32.gmra.mxu0 %v3589
        %v3765 = vpop.f32.mrf.mxu0
        %v3766 = vadd.f32 0.0, %v3765
        %v3767 = vpop.f32.mrf.mxu0
        %v3768 = vadd.f32 0.0, %v3767
        %3769 = vmatprep.mubr.f32.mxu0 0.0
        %3770 = vmatmul.mubr.f32.gmra.mxu0 %v3592
        %v3771 = vpop.f32.mrf.mxu0
        %v3772 = vadd.f32 0.0, %v3771
        %v3773 = vpop.f32.mrf.mxu0
        %v3774 = vadd.f32 0.0, %v3773
        %3775 = vmatprep.mubr.f32.mxu0 0.0
        %3776 = vmatmul.mubr.f32.gmra.mxu0 %v3595
        %v3777 = vpop.f32.mrf.mxu0
        %v3778 = vadd.f32 0.0, %v3777
        %v3779 = vpop.f32.mrf.mxu0
        %v3780 = vadd.f32 0.0, %v3779
        %3781 = vmatprep.mubr.f32.mxu0 0.0
        %3782 = vmatmul.mubr.f32.gmra.mxu0 %v3598
        %v3783 = vpop.f32.mrf.mxu0
        %v3784 = vadd.f32 0.0, %v3783
        %v3785 = vpop.f32.mrf.mxu0
        %v3786 = vadd.f32 0.0, %v3785
        %3787 = vmatprep.mubr.f32.mxu0 0.0
        %3788 = vmatmul.mubr.f32.gmra.mxu0 %v3601
        %v3789 = vpop.f32.mrf.mxu0
        %v3790 = vadd.f32 0.0, %v3789
        %v3791 = vpop.f32.mrf.mxu0
        %v3792 = vadd.f32 0.0, %v3791
        %3793 = vmatprep.mubr.f32.mxu0 0.0
        %3794 = vmatmul.mubr.f32.gmra.mxu0 %v3604
        %v3795 = vpop.f32.mrf.mxu0
        %v3796 = vadd.f32 0.0, %v3795
        %v3797 = vpop.f32.mrf.mxu0
        %v3798 = vadd.f32 0.0, %v3797
        %3799 = vmatprep.mubr.f32.mxu0 0.0
        %3800 = vmatmul.mubr.f32.gmra.mxu0 %v3607
        %v3801 = vpop.f32.mrf.mxu0
        %v3802 = vadd.f32 0.0, %v3801
        %v3803 = vpop.f32.mrf.mxu0
        %v3804 = vadd.f32 0.0, %v3803
        %3805 = vmatprep.mubr.f32.mxu0 0.0
        %3806 = vmatmul.mubr.f32.gmra.mxu0 %v3610
        %v3807 = vpop.f32.mrf.mxu0
        %v3808 = vadd.f32 0.0, %v3807
        %v3809 = vpop.f32.mrf.mxu0
        %v3810 = vadd.f32 0.0, %v3809
        %3811 = vmatprep.mubr.f32.mxu0 0.0
        %3812 = vmatmul.mubr.f32.gmra.mxu0 %v3613
        %v3813 = vpop.f32.mrf.mxu0
        %v3814 = vadd.f32 0.0, %v3813
        %v3815 = vpop.f32.mrf.mxu0
        %v3816 = vadd.f32 0.0, %v3815
        %3817 = vmatprep.mubr.f32.mxu0 0.0
        %3818 = vmatmul.mubr.f32.gmra.mxu0 %v3616
        %v3819 = vpop.f32.mrf.mxu0
        %v3820 = vadd.f32 0.0, %v3819
        %v3821 = vpop.f32.mrf.mxu0
        %v3822 = vadd.f32 0.0, %v3821
        %3823 = vmatprep.mubr.f32.mxu0 0.0
        %3824 = vmatmul.mubr.f32.gmra.mxu0 %v3619
        %v3825 = vpop.f32.mrf.mxu0
        %v3826 = vadd.f32 0.0, %v3825
        %v3827 = vpop.f32.mrf.mxu0
        %v3828 = vadd.f32 0.0, %v3827
        %3829 = vmatprep.mubr.f32.mxu0 0.0
        %3830 = vmatmul.mubr.f32.gmra.mxu0 %v3622
        %v3831 = vpop.f32.mrf.mxu0
        %v3832 = vadd.f32 0.0, %v3831
        %v3833 = vpop.f32.mrf.mxu0
        %v3834 = vadd.f32 0.0, %v3833
        %3835 = vmatprep.mubr.f32.mxu0 0.0
        %3836 = vmatmul.mubr.f32.gmra.mxu0 %v3625
        %v3837 = vpop.f32.mrf.mxu0
        %v3838 = vadd.f32 0.0, %v3837
        %v3839 = vpop.f32.mrf.mxu0
        %v3840 = vadd.f32 0.0, %v3839
        %3841 = vmatprep.mubr.f32.mxu0 0.0
        %3842 = vmatmul.mubr.f32.gmra.mxu0 %v3628
        %v3843 = vpop.f32.mrf.mxu0
        %v3844 = vadd.f32 0.0, %v3843
        %v3845 = vpop.f32.mrf.mxu0
        %v3846 = vadd.f32 0.0, %v3845
        %3847 = vmatprep.mubr.f32.mxu0 0.0
        %3848 = vmatmul.mubr.f32.gmra.mxu0 %v3631
        %v3849 = vpop.f32.mrf.mxu0
        %v3850 = vadd.f32 0.0, %v3849
        %v3851 = vpop.f32.mrf.mxu0
        %v3852 = vadd.f32 0.0, %v3851
        %3853 = vmatprep.mubr.f32.mxu0 0.0
        %3854 = vmatmul.mubr.f32.gmra.mxu0 %v3634
        %v3855 = vpop.f32.mrf.mxu0
        %v3856 = vadd.f32 0.0, %v3855
        %v3857 = vpop.f32.mrf.mxu0
        %v3858 = vadd.f32 0.0, %v3857
        %3859 = vmatprep.mubr.f32.mxu0 0.0
        %3860 = vmatmul.mubr.f32.gmra.mxu0 %v3637
        %v3861 = vpop.f32.mrf.mxu0
        %v3862 = vadd.f32 0.0, %v3861
        %v3863 = vpop.f32.mrf.mxu0
        %v3864 = vadd.f32 0.0, %v3863
        %3865 = vmatprep.mubr.f32.mxu0 0.0
        %3866 = vmatmul.mubr.f32.gmra.mxu0 %v3640
        %v3867 = vpop.f32.mrf.mxu0
        %v3868 = vadd.f32 0.0, %v3867
        %v3869 = vpop.f32.mrf.mxu0
        %v3870 = vadd.f32 0.0, %v3869
        %3871 = vmatprep.mubr.f32.mxu0 0.0
        %3872 = vmatmul.mubr.f32.gmra.mxu0 %v3643
        %v3873 = vpop.f32.mrf.mxu0
        %v3874 = vadd.f32 0.0, %v3873
        %v3875 = vpop.f32.mrf.mxu0
        %v3876 = vadd.f32 0.0, %v3875
        %3877 = vmatprep.mubr.f32.mxu0 0.0
        %3878 = vmatmul.mubr.f32.gmra.mxu0 %v3646
        %v3879 = vpop.f32.mrf.mxu0
        %v3880 = vadd.f32 0.0, %v3879
        %v3881 = vpop.f32.mrf.mxu0
        %v3882 = vadd.f32 0.0, %v3881
        %3883 = vmatprep.mubr.f32.mxu0 0.0
        %3884 = vmatmul.mubr.f32.gmra.mxu0 %v3649
        %v3885 = vpop.f32.mrf.mxu0
        %v3886 = vadd.f32 0.0, %v3885
        %v3887 = vpop.f32.mrf.mxu0
        %v3888 = vadd.f32 0.0, %v3887
        %3889 = vmatprep.mubr.f32.mxu0 0.0
        %3890 = vmatmul.mubr.f32.gmra.mxu0 %v3652
        %v3891 = vpop.f32.mrf.mxu0
        %v3892 = vadd.f32 0.0, %v3891
        %v3893 = vpop.f32.mrf.mxu0
        %v3894 = vadd.f32 0.0, %v3893
        %3895 = vmatprep.mubr.f32.mxu0 0.0
        %3896 = vmatmul.mubr.f32.gmra.mxu0 %v3655
        %v3897 = vpop.f32.mrf.mxu0
        %v3898 = vadd.f32 0.0, %v3897
        %v3899 = vpop.f32.mrf.mxu0
        %v3900 = vadd.f32 0.0, %v3899
        %3901 = vmatprep.mubr.f32.mxu0 0.0
        %3902 = vmatmul.mubr.f32.gmra.mxu0 %v3658
        %v3903 = vpop.f32.mrf.mxu0
        %v3904 = vadd.f32 0.0, %v3903
        %v3905 = vpop.f32.mrf.mxu0
        %v3906 = vadd.f32 0.0, %v3905
        %3907 = vmatprep.mubr.f32.mxu0 0.0
        %3908 = vmatmul.mubr.f32.gmra.mxu0 %v3661
        %v3909 = vpop.f32.mrf.mxu0
        %v3910 = vadd.f32 0.0, %v3909
        %v3911 = vpop.f32.mrf.mxu0
        %v3912 = vadd.f32 0.0, %v3911
        %3913 = vmatprep.mubr.f32.mxu0 0.0
        %3914 = vmatmul.mubr.f32.gmra.mxu0 %v3664
        %v3915 = vpop.f32.mrf.mxu0
        %v3916 = vadd.f32 0.0, %v3915
        %v3917 = vpop.f32.mrf.mxu0
        %v3918 = vadd.f32 0.0, %v3917
        %3919 = vmatprep.mubr.f32.mxu0 0.0
        %3920 = vmatmul.mubr.f32.gmra.mxu0 %v3667
        %v3921 = vpop.f32.mrf.mxu0
        %v3922 = vadd.f32 0.0, %v3921
        %v3923 = vpop.f32.mrf.mxu0
        %v3924 = vadd.f32 0.0, %v3923
        %3925 = vdwg.mxu0
        %v3926 = vmax.f32 %v3736, %v3738
        %3927 = vmax.xlane.f32.xlu0 %v3926
        %v3928 = vpop.xlane.xlu0 %3927
        %v3929 = vmax.f32 %v3742, %v3744
        %3930 = vmax.xlane.f32.xlu0 %v3929
        %v3931 = vpop.xlane.xlu0 %3930
        %v3932 = vmax.f32 %v3748, %v3750
        %3933 = vmax.xlane.f32.xlu0 %v3932
        %v3934 = vpop.xlane.xlu0 %3933
        %v3935 = vmax.f32 %v3754, %v3756
        %3936 = vmax.xlane.f32.xlu0 %v3935
        %v3937 = vpop.xlane.xlu0 %3936
        %v3938 = vmax.f32 %v3760, %v3762
        %3939 = vmax.xlane.f32.xlu0 %v3938
        %v3940 = vpop.xlane.xlu0 %3939
        %v3941 = vmax.f32 %v3766, %v3768
        %3942 = vmax.xlane.f32.xlu0 %v3941
        %v3943 = vpop.xlane.xlu0 %3942
        %v3944 = vmax.f32 %v3772, %v3774
        %3945 = vmax.xlane.f32.xlu0 %v3944
        %v3946 = vpop.xlane.xlu0 %3945
        %v3947 = vmax.f32 %v3778, %v3780
        %3948 = vmax.xlane.f32.xlu0 %v3947
        %v3949 = vpop.xlane.xlu0 %3948
        %v3950 = vmax.f32 %v3784, %v3786
        %3951 = vmax.xlane.f32.xlu0 %v3950
        %v3952 = vpop.xlane.xlu0 %3951
        %v3953 = vmax.f32 %v3790, %v3792
        %3954 = vmax.xlane.f32.xlu0 %v3953
        %v3955 = vpop.xlane.xlu0 %3954
        %v3956 = vmax.f32 %v3796, %v3798
        %3957 = vmax.xlane.f32.xlu0 %v3956
        %v3958 = vpop.xlane.xlu0 %3957
        %v3959 = vmax.f32 %v3802, %v3804
        %3960 = vmax.xlane.f32.xlu0 %v3959
        %v3961 = vpop.xlane.xlu0 %3960
        %v3962 = vmax.f32 %v3808, %v3810
        %3963 = vmax.xlane.f32.xlu0 %v3962
        %v3964 = vpop.xlane.xlu0 %3963
        %v3965 = vmax.f32 %v3814, %v3816
        %3966 = vmax.xlane.f32.xlu0 %v3965
        %v3967 = vpop.xlane.xlu0 %3966
        %v3968 = vmax.f32 %v3820, %v3822
        %3969 = vmax.xlane.f32.xlu0 %v3968
        %v3970 = vpop.xlane.xlu0 %3969
        %v3971 = vmax.f32 %v3826, %v3828
        %3972 = vmax.xlane.f32.xlu0 %v3971
        %v3973 = vpop.xlane.xlu0 %3972
        %v3974 = vmax.f32 %v3832, %v3834
        %3975 = vmax.xlane.f32.xlu0 %v3974
        %v3976 = vpop.xlane.xlu0 %3975
        %v3977 = vmax.f32 %v3838, %v3840
        %3978 = vmax.xlane.f32.xlu0 %v3977
        %v3979 = vpop.xlane.xlu0 %3978
        %v3980 = vmax.f32 %v3844, %v3846
        %3981 = vmax.xlane.f32.xlu0 %v3980
        %v3982 = vpop.xlane.xlu0 %3981
        %v3983 = vmax.f32 %v3850, %v3852
        %3984 = vmax.xlane.f32.xlu0 %v3983
        %v3985 = vpop.xlane.xlu0 %3984
        %v3986 = vmax.f32 %v3856, %v3858
        %3987 = vmax.xlane.f32.xlu0 %v3986
        %v3988 = vpop.xlane.xlu0 %3987
        %v3989 = vmax.f32 %v3862, %v3864
        %3990 = vmax.xlane.f32.xlu0 %v3989
        %v3991 = vpop.xlane.xlu0 %3990
        %v3992 = vmax.f32 %v3868, %v3870
        %3993 = vmax.xlane.f32.xlu0 %v3992
        %v3994 = vpop.xlane.xlu0 %3993
        %v3995 = vmax.f32 %v3874, %v3876
        %3996 = vmax.xlane.f32.xlu0 %v3995
        %v3997 = vpop.xlane.xlu0 %3996
        %v3998 = vmax.f32 %v3880, %v3882
        %3999 = vmax.xlane.f32.xlu0 %v3998
        %v4000 = vpop.xlane.xlu0 %3999
        %v4001 = vmax.f32 %v3886, %v3888
        %4002 = vmax.xlane.f32.xlu0 %v4001
        %v4003 = vpop.xlane.xlu0 %4002
        %v4004 = vmax.f32 %v3892, %v3894
        %4005 = vmax.xlane.f32.xlu0 %v4004
        %v4006 = vpop.xlane.xlu0 %4005
        %v4007 = vmax.f32 %v3898, %v3900
        %4008 = vmax.xlane.f32.xlu0 %v4007
        %v4009 = vpop.xlane.xlu0 %4008
        %v4010 = vmax.f32 %v3904, %v3906
        %4011 = vmax.xlane.f32.xlu0 %v4010
        %v4012 = vpop.xlane.xlu0 %4011
        %v4013 = vmax.f32 %v3910, %v3912
        %4014 = vmax.xlane.f32.xlu0 %v4013
        %v4015 = vpop.xlane.xlu0 %4014
        %v4016 = vmax.f32 %v3916, %v3918
        %4017 = vmax.xlane.f32.xlu0 %v4016
        %v4018 = vpop.xlane.xlu0 %4017
        %v4019 = vmax.f32 %v3922, %v3924
        %4020 = vmax.xlane.f32.xlu0 %v4019
        %v4021 = vpop.xlane.xlu0 %4020
        %v4022 = vsub.f32 %v3736, %v3928
        %v4023 = vsub.f32 %v3738, %v3928
        %v4024 = vsub.f32 %v3742, %v3931
        %v4025 = vsub.f32 %v3744, %v3931
        %v4026 = vsub.f32 %v3748, %v3934
        %v4027 = vsub.f32 %v3750, %v3934
        %v4028 = vsub.f32 %v3754, %v3937
        %v4029 = vsub.f32 %v3756, %v3937
        %v4030 = vsub.f32 %v3760, %v3940
        %v4031 = vsub.f32 %v3762, %v3940
        %v4032 = vsub.f32 %v3766, %v3943
        %v4033 = vsub.f32 %v3768, %v3943
        %v4034 = vsub.f32 %v3772, %v3946
        %v4035 = vsub.f32 %v3774, %v3946
        %v4036 = vsub.f32 %v3778, %v3949
        %v4037 = vsub.f32 %v3780, %v3949
        %v4038 = vsub.f32 %v3784, %v3952
        %v4039 = vsub.f32 %v3786, %v3952
        %v4040 = vsub.f32 %v3790, %v3955
        %v4041 = vsub.f32 %v3792, %v3955
        %v4042 = vsub.f32 %v3796, %v3958
        %v4043 = vsub.f32 %v3798, %v3958
        %v4044 = vsub.f32 %v3802, %v3961
        %v4045 = vsub.f32 %v3804, %v3961
        %v4046 = vsub.f32 %v3808, %v3964
        %v4047 = vsub.f32 %v3810, %v3964
        %v4048 = vsub.f32 %v3814, %v3967
        %v4049 = vsub.f32 %v3816, %v3967
        %v4050 = vsub.f32 %v3820, %v3970
        %v4051 = vsub.f32 %v3822, %v3970
        %v4052 = vsub.f32 %v3826, %v3973
        %v4053 = vsub.f32 %v3828, %v3973
        %v4054 = vsub.f32 %v3832, %v3976
        %v4055 = vsub.f32 %v3834, %v3976
        %v4056 = vsub.f32 %v3838, %v3979
        %v4057 = vsub.f32 %v3840, %v3979
        %v4058 = vsub.f32 %v3844, %v3982
        %v4059 = vsub.f32 %v3846, %v3982
        %v4060 = vsub.f32 %v3850, %v3985
        %v4061 = vsub.f32 %v3852, %v3985
        %v4062 = vsub.f32 %v3856, %v3988
        %v4063 = vsub.f32 %v3858, %v3988
        %v4064 = vsub.f32 %v3862, %v3991
        %v4065 = vsub.f32 %v3864, %v3991
        %v4066 = vsub.f32 %v3868, %v3994
        %v4067 = vsub.f32 %v3870, %v3994
        %v4068 = vsub.f32 %v3874, %v3997
        %v4069 = vsub.f32 %v3876, %v3997
        %v4070 = vsub.f32 %v3880, %v4000
        %v4071 = vsub.f32 %v3882, %v4000
        %v4072 = vsub.f32 %v3886, %v4003
        %v4073 = vsub.f32 %v3888, %v4003
        %v4074 = vsub.f32 %v3892, %v4006
        %v4075 = vsub.f32 %v3894, %v4006
        %v4076 = vsub.f32 %v3898, %v4009
        %v4077 = vsub.f32 %v3900, %v4009
        %v4078 = vsub.f32 %v3904, %v4012
        %v4079 = vsub.f32 %v3906, %v4012
        %v4080 = vsub.f32 %v3910, %v4015
        %v4081 = vsub.f32 %v3912, %v4015
        %v4082 = vsub.f32 %v3916, %v4018
        %v4083 = vsub.f32 %v3918, %v4018
        %v4084 = vsub.f32 %v3922, %v4021
        %v4085 = vsub.f32 %v3924, %v4021
        %v4086 = vmul.f32 %v4022, 1.442695
        %v4087 = vpow.pop %v4086
        %v4088 = vmul.f32 %v4023, 1.442695
        %v4089 = vpow.pop %v4088
        %v4090 = vmul.f32 %v4024, 1.442695
        %v4091 = vpow.pop %v4090
        %v4092 = vmul.f32 %v4025, 1.442695
        %v4093 = vpow.pop %v4092
        %v4094 = vmul.f32 %v4026, 1.442695
        %v4095 = vpow.pop %v4094
        %v4096 = vmul.f32 %v4027, 1.442695
        %v4097 = vpow.pop %v4096
        %v4098 = vmul.f32 %v4028, 1.442695
        %v4099 = vpow.pop %v4098
        %v4100 = vmul.f32 %v4029, 1.442695
        %v4101 = vpow.pop %v4100
        %v4102 = vmul.f32 %v4030, 1.442695
        %v4103 = vpow.pop %v4102
        %v4104 = vmul.f32 %v4031, 1.442695
        %v4105 = vpow.pop %v4104
        %v4106 = vmul.f32 %v4032, 1.442695
        %v4107 = vpow.pop %v4106
        %v4108 = vmul.f32 %v4033, 1.442695
        %v4109 = vpow.pop %v4108
        %v4110 = vmul.f32 %v4034, 1.442695
        %v4111 = vpow.pop %v4110
        %v4112 = vmul.f32 %v4035, 1.442695
        %v4113 = vpow.pop %v4112
        %v4114 = vmul.f32 %v4036, 1.442695
        %v4115 = vpow.pop %v4114
        %v4116 = vmul.f32 %v4037, 1.442695
        %v4117 = vpow.pop %v4116
        %v4118 = vmul.f32 %v4038, 1.442695
        %v4119 = vpow.pop %v4118
        %v4120 = vmul.f32 %v4039, 1.442695
        %v4121 = vpow.pop %v4120
        %v4122 = vmul.f32 %v4040, 1.442695
        %v4123 = vpow.pop %v4122
        %v4124 = vmul.f32 %v4041, 1.442695
        %v4125 = vpow.pop %v4124
        %v4126 = vmul.f32 %v4042, 1.442695
        %v4127 = vpow.pop %v4126
        %v4128 = vmul.f32 %v4043, 1.442695
        %v4129 = vpow.pop %v4128
        %v4130 = vmul.f32 %v4044, 1.442695
        %v4131 = vpow.pop %v4130
        %v4132 = vmul.f32 %v4045, 1.442695
        %v4133 = vpow.pop %v4132
        %v4134 = vmul.f32 %v4046, 1.442695
        %v4135 = vpow.pop %v4134
        %v4136 = vmul.f32 %v4047, 1.442695
        %v4137 = vpow.pop %v4136
        %v4138 = vmul.f32 %v4048, 1.442695
        %v4139 = vpow.pop %v4138
        %v4140 = vmul.f32 %v4049, 1.442695
        %v4141 = vpow.pop %v4140
        %v4142 = vmul.f32 %v4050, 1.442695
        %v4143 = vpow.pop %v4142
        %v4144 = vmul.f32 %v4051, 1.442695
        %v4145 = vpow.pop %v4144
        %v4146 = vmul.f32 %v4052, 1.442695
        %v4147 = vpow.pop %v4146
        %v4148 = vmul.f32 %v4053, 1.442695
        %v4149 = vpow.pop %v4148
        %v4150 = vmul.f32 %v4054, 1.442695
        %v4151 = vpow.pop %v4150
        %v4152 = vmul.f32 %v4055, 1.442695
        %v4153 = vpow.pop %v4152
        %v4154 = vmul.f32 %v4056, 1.442695
        %v4155 = vpow.pop %v4154
        %v4156 = vmul.f32 %v4057, 1.442695
        %v4157 = vpow.pop %v4156
        %v4158 = vmul.f32 %v4058, 1.442695
        %v4159 = vpow.pop %v4158
        %v4160 = vmul.f32 %v4059, 1.442695
        %v4161 = vpow.pop %v4160
        %v4162 = vmul.f32 %v4060, 1.442695
        %v4163 = vpow.pop %v4162
        %v4164 = vmul.f32 %v4061, 1.442695
        %v4165 = vpow.pop %v4164
        %v4166 = vmul.f32 %v4062, 1.442695
        %v4167 = vpow.pop %v4166
        %v4168 = vmul.f32 %v4063, 1.442695
        %v4169 = vpow.pop %v4168
        %v4170 = vmul.f32 %v4064, 1.442695
        %v4171 = vpow.pop %v4170
        %v4172 = vmul.f32 %v4065, 1.442695
        %v4173 = vpow.pop %v4172
        %v4174 = vmul.f32 %v4066, 1.442695
        %v4175 = vpow.pop %v4174
        %v4176 = vmul.f32 %v4067, 1.442695
        %v4177 = vpow.pop %v4176
        %v4178 = vmul.f32 %v4068, 1.442695
        %v4179 = vpow.pop %v4178
        %v4180 = vmul.f32 %v4069, 1.442695
        %v4181 = vpow.pop %v4180
        %v4182 = vmul.f32 %v4070, 1.442695
        %v4183 = vpow.pop %v4182
        %v4184 = vmul.f32 %v4071, 1.442695
        %v4185 = vpow.pop %v4184
        %v4186 = vmul.f32 %v4072, 1.442695
        %v4187 = vpow.pop %v4186
        %v4188 = vmul.f32 %v4073, 1.442695
        %v4189 = vpow.pop %v4188
        %v4190 = vmul.f32 %v4074, 1.442695
        %v4191 = vpow.pop %v4190
        %v4192 = vmul.f32 %v4075, 1.442695
        %v4193 = vpow.pop %v4192
        %v4194 = vmul.f32 %v4076, 1.442695
        %v4195 = vpow.pop %v4194
        %v4196 = vmul.f32 %v4077, 1.442695
        %v4197 = vpow.pop %v4196
        %v4198 = vmul.f32 %v4078, 1.442695
        %v4199 = vpow.pop %v4198
        %v4200 = vmul.f32 %v4079, 1.442695
        %v4201 = vpow.pop %v4200
        %v4202 = vmul.f32 %v4080, 1.442695
        %v4203 = vpow.pop %v4202
        %v4204 = vmul.f32 %v4081, 1.442695
        %v4205 = vpow.pop %v4204
        %v4206 = vmul.f32 %v4082, 1.442695
        %v4207 = vpow.pop %v4206
        %v4208 = vmul.f32 %v4083, 1.442695
        %v4209 = vpow.pop %v4208
        %v4210 = vmul.f32 %v4084, 1.442695
        %v4211 = vpow.pop %v4210
        %v4212 = vmul.f32 %v4085, 1.442695
        %v4213 = vpow.pop %v4212
        %v4214 = vadd.f32 %v4087, %v4089
        %4215 = vadd.xlane.f32.xlu0 %v4214
        %v4216 = vpop.xlane.xlu0 %4215
        %v4217 = vadd.f32 %v4091, %v4093
        %4218 = vadd.xlane.f32.xlu0 %v4217
        %v4219 = vpop.xlane.xlu0 %4218
        %v4220 = vadd.f32 %v4095, %v4097
        %4221 = vadd.xlane.f32.xlu0 %v4220
        %v4222 = vpop.xlane.xlu0 %4221
        %v4223 = vadd.f32 %v4099, %v4101
        %4224 = vadd.xlane.f32.xlu0 %v4223
        %v4225 = vpop.xlane.xlu0 %4224
        %v4226 = vadd.f32 %v4103, %v4105
        %4227 = vadd.xlane.f32.xlu0 %v4226
        %v4228 = vpop.xlane.xlu0 %4227
        %v4229 = vadd.f32 %v4107, %v4109
        %4230 = vadd.xlane.f32.xlu0 %v4229
        %v4231 = vpop.xlane.xlu0 %4230
        %v4232 = vadd.f32 %v4111, %v4113
        %4233 = vadd.xlane.f32.xlu0 %v4232
        %v4234 = vpop.xlane.xlu0 %4233
        %v4235 = vadd.f32 %v4115, %v4117
        %4236 = vadd.xlane.f32.xlu0 %v4235
        %v4237 = vpop.xlane.xlu0 %4236
        %v4238 = vadd.f32 %v4119, %v4121
        %4239 = vadd.xlane.f32.xlu0 %v4238
        %v4240 = vpop.xlane.xlu0 %4239
        %v4241 = vadd.f32 %v4123, %v4125
        %4242 = vadd.xlane.f32.xlu0 %v4241
        %v4243 = vpop.xlane.xlu0 %4242
        %v4244 = vadd.f32 %v4127, %v4129
        %4245 = vadd.xlane.f32.xlu0 %v4244
        %v4246 = vpop.xlane.xlu0 %4245
        %v4247 = vadd.f32 %v4131, %v4133
        %4248 = vadd.xlane.f32.xlu0 %v4247
        %v4249 = vpop.xlane.xlu0 %4248
        %v4250 = vadd.f32 %v4135, %v4137
        %4251 = vadd.xlane.f32.xlu0 %v4250
        %v4252 = vpop.xlane.xlu0 %4251
        %v4253 = vadd.f32 %v4139, %v4141
        %4254 = vadd.xlane.f32.xlu0 %v4253
        %v4255 = vpop.xlane.xlu0 %4254
        %v4256 = vadd.f32 %v4143, %v4145
        %4257 = vadd.xlane.f32.xlu0 %v4256
        %v4258 = vpop.xlane.xlu0 %4257
        %v4259 = vadd.f32 %v4147, %v4149
        %4260 = vadd.xlane.f32.xlu0 %v4259
        %v4261 = vpop.xlane.xlu0 %4260
        %v4262 = vadd.f32 %v4151, %v4153
        %4263 = vadd.xlane.f32.xlu0 %v4262
        %v4264 = vpop.xlane.xlu0 %4263
        %v4265 = vadd.f32 %v4155, %v4157
        %4266 = vadd.xlane.f32.xlu0 %v4265
        %v4267 = vpop.xlane.xlu0 %4266
        %v4268 = vadd.f32 %v4159, %v4161
        %4269 = vadd.xlane.f32.xlu0 %v4268
        %v4270 = vpop.xlane.xlu0 %4269
        %v4271 = vadd.f32 %v4163, %v4165
        %4272 = vadd.xlane.f32.xlu0 %v4271
        %v4273 = vpop.xlane.xlu0 %4272
        %v4274 = vadd.f32 %v4167, %v4169
        %4275 = vadd.xlane.f32.xlu0 %v4274
        %v4276 = vpop.xlane.xlu0 %4275
        %v4277 = vadd.f32 %v4171, %v4173
        %4278 = vadd.xlane.f32.xlu0 %v4277
        %v4279 = vpop.xlane.xlu0 %4278
        %v4280 = vadd.f32 %v4175, %v4177
        %4281 = vadd.xlane.f32.xlu0 %v4280
        %v4282 = vpop.xlane.xlu0 %4281
        %v4283 = vadd.f32 %v4179, %v4181
        %4284 = vadd.xlane.f32.xlu0 %v4283
        %v4285 = vpop.xlane.xlu0 %4284
        %v4286 = vadd.f32 %v4183, %v4185
        %4287 = vadd.xlane.f32.xlu0 %v4286
        %v4288 = vpop.xlane.xlu0 %4287
        %v4289 = vadd.f32 %v4187, %v4189
        %4290 = vadd.xlane.f32.xlu0 %v4289
        %v4291 = vpop.xlane.xlu0 %4290
        %v4292 = vadd.f32 %v4191, %v4193
        %4293 = vadd.xlane.f32.xlu0 %v4292
        %v4294 = vpop.xlane.xlu0 %4293
        %v4295 = vadd.f32 %v4195, %v4197
        %4296 = vadd.xlane.f32.xlu0 %v4295
        %v4297 = vpop.xlane.xlu0 %4296
        %v4298 = vadd.f32 %v4199, %v4201
        %4299 = vadd.xlane.f32.xlu0 %v4298
        %v4300 = vpop.xlane.xlu0 %4299
        %v4301 = vadd.f32 %v4203, %v4205
        %4302 = vadd.xlane.f32.xlu0 %v4301
        %v4303 = vpop.xlane.xlu0 %4302
        %v4304 = vadd.f32 %v4207, %v4209
        %4305 = vadd.xlane.f32.xlu0 %v4304
        %v4306 = vpop.xlane.xlu0 %4305
        %v4307 = vadd.f32 %v4211, %v4213
        %4308 = vadd.xlane.f32.xlu0 %v4307
        %v4309 = vpop.xlane.xlu0 %4308
        %v4310 = vrcp.pop %v4216
        %v4311 = vrcp.pop %v4219
        %v4312 = vrcp.pop %v4222
        %v4313 = vrcp.pop %v4225
        %v4314 = vrcp.pop %v4228
        %v4315 = vrcp.pop %v4231
        %v4316 = vrcp.pop %v4234
        %v4317 = vrcp.pop %v4237
        %v4318 = vrcp.pop %v4240
        %v4319 = vrcp.pop %v4243
        %v4320 = vrcp.pop %v4246
        %v4321 = vrcp.pop %v4249
        %v4322 = vrcp.pop %v4252
        %v4323 = vrcp.pop %v4255
        %v4324 = vrcp.pop %v4258
        %v4325 = vrcp.pop %v4261
        %v4326 = vrcp.pop %v4264
        %v4327 = vrcp.pop %v4267
        %v4328 = vrcp.pop %v4270
        %v4329 = vrcp.pop %v4273
        %v4330 = vrcp.pop %v4276
        %v4331 = vrcp.pop %v4279
        %v4332 = vrcp.pop %v4282
        %v4333 = vrcp.pop %v4285
        %v4334 = vrcp.pop %v4288
        %v4335 = vrcp.pop %v4291
        %v4336 = vrcp.pop %v4294
        %v4337 = vrcp.pop %v4297
        %v4338 = vrcp.pop %v4300
        %v4339 = vrcp.pop %v4303
        %v4340 = vrcp.pop %v4306
        %v4341 = vrcp.pop %v4309
        %v4342 = vmul.f32 %v4216, %v4310
        %v4343 = vmul.f32 %v4219, %v4311
        %v4344 = vmul.f32 %v4222, %v4312
        %v4345 = vmul.f32 %v4225, %v4313
        %v4346 = vmul.f32 %v4228, %v4314
        %v4347 = vmul.f32 %v4231, %v4315
        %v4348 = vmul.f32 %v4234, %v4316
        %v4349 = vmul.f32 %v4237, %v4317
        %v4350 = vmul.f32 %v4240, %v4318
        %v4351 = vmul.f32 %v4243, %v4319
        %v4352 = vmul.f32 %v4246, %v4320
        %v4353 = vmul.f32 %v4249, %v4321
        %v4354 = vmul.f32 %v4252, %v4322
        %v4355 = vmul.f32 %v4255, %v4323
        %v4356 = vmul.f32 %v4258, %v4324
        %v4357 = vmul.f32 %v4261, %v4325
        %v4358 = vmul.f32 %v4264, %v4326
        %v4359 = vmul.f32 %v4267, %v4327
        %v4360 = vmul.f32 %v4270, %v4328
        %v4361 = vmul.f32 %v4273, %v4329
        %v4362 = vmul.f32 %v4276, %v4330
        %v4363 = vmul.f32 %v4279, %v4331
        %v4364 = vmul.f32 %v4282, %v4332
        %v4365 = vmul.f32 %v4285, %v4333
        %v4366 = vmul.f32 %v4288, %v4334
        %v4367 = vmul.f32 %v4291, %v4335
        %v4368 = vmul.f32 %v4294, %v4336
        %v4369 = vmul.f32 %v4297, %v4337
        %v4370 = vmul.f32 %v4300, %v4338
        %v4371 = vmul.f32 %v4303, %v4339
        %v4372 = vmul.f32 %v4306, %v4340
        %v4373 = vmul.f32 %v4309, %v4341
        %v4374 = vsub.f32 2.0, %v4342
        %v4375 = vsub.f32 2.0, %v4343
        %v4376 = vsub.f32 2.0, %v4344
        %v4377 = vsub.f32 2.0, %v4345
        %v4378 = vsub.f32 2.0, %v4346
        %v4379 = vsub.f32 2.0, %v4347
        %v4380 = vsub.f32 2.0, %v4348
        %v4381 = vsub.f32 2.0, %v4349
        %v4382 = vsub.f32 2.0, %v4350
        %v4383 = vsub.f32 2.0, %v4351
        %v4384 = vsub.f32 2.0, %v4352
        %v4385 = vsub.f32 2.0, %v4353
        %v4386 = vsub.f32 2.0, %v4354
        %v4387 = vsub.f32 2.0, %v4355
        %v4388 = vsub.f32 2.0, %v4356
        %v4389 = vsub.f32 2.0, %v4357
        %v4390 = vsub.f32 2.0, %v4358
        %v4391 = vsub.f32 2.0, %v4359
        %v4392 = vsub.f32 2.0, %v4360
        %v4393 = vsub.f32 2.0, %v4361
        %v4394 = vsub.f32 2.0, %v4362
        %v4395 = vsub.f32 2.0, %v4363
        %v4396 = vsub.f32 2.0, %v4364
        %v4397 = vsub.f32 2.0, %v4365
        %v4398 = vsub.f32 2.0, %v4366
        %v4399 = vsub.f32 2.0, %v4367
        %v4400 = vsub.f32 2.0, %v4368
        %v4401 = vsub.f32 2.0, %v4369
        %v4402 = vsub.f32 2.0, %v4370
        %v4403 = vsub.f32 2.0, %v4371
        %v4404 = vsub.f32 2.0, %v4372
        %v4405 = vsub.f32 2.0, %v4373
        %v4406 = vmul.f32 %v4310, %v4374
        %v4407 = vmul.f32 %v4311, %v4375
        %v4408 = vmul.f32 %v4312, %v4376
        %v4409 = vmul.f32 %v4313, %v4377
        %v4410 = vmul.f32 %v4314, %v4378
        %v4411 = vmul.f32 %v4315, %v4379
        %v4412 = vmul.f32 %v4316, %v4380
        %v4413 = vmul.f32 %v4317, %v4381
        %v4414 = vmul.f32 %v4318, %v4382
        %v4415 = vmul.f32 %v4319, %v4383
        %v4416 = vmul.f32 %v4320, %v4384
        %v4417 = vmul.f32 %v4321, %v4385
        %v4418 = vmul.f32 %v4322, %v4386
        %v4419 = vmul.f32 %v4323, %v4387
        %v4420 = vmul.f32 %v4324, %v4388
        %v4421 = vmul.f32 %v4325, %v4389
        %v4422 = vmul.f32 %v4326, %v4390
        %v4423 = vmul.f32 %v4327, %v4391
        %v4424 = vmul.f32 %v4328, %v4392
        %v4425 = vmul.f32 %v4329, %v4393
        %v4426 = vmul.f32 %v4330, %v4394
        %v4427 = vmul.f32 %v4331, %v4395
        %v4428 = vmul.f32 %v4332, %v4396
        %v4429 = vmul.f32 %v4333, %v4397
        %v4430 = vmul.f32 %v4334, %v4398
        %v4431 = vmul.f32 %v4335, %v4399
        %v4432 = vmul.f32 %v4336, %v4400
        %v4433 = vmul.f32 %v4337, %v4401
        %v4434 = vmul.f32 %v4338, %v4402
        %v4435 = vmul.f32 %v4339, %v4403
        %v4436 = vmul.f32 %v4340, %v4404
        %v4437 = vmul.f32 %v4341, %v4405
        %4438 = vmatprep.subr.mxu0 0.0
        %4439 = vmatpush1.xpose.msra.mxu0 0.0
        %4440 = vmatprep.subr.mxu0 0.0
        %4441 = vmatpush1.xpose.msra.mxu0 0.0
        %4442 = vmatprep.subr.mxu0 0.0
        %4443 = vmatpush1.xpose.msra.mxu0 0.0
        %4444 = vmatprep.subr.mxu0 0.0
        %4445 = vmatpush1.xpose.msra.mxu0 0.0
        %4446 = vmatprep.subr.mxu0 0.0
        %4447 = vmatpush1.xpose.msra.mxu0 0.0
        %4448 = vmatprep.subr.mxu0 0.0
        %4449 = vmatpush1.xpose.msra.mxu0 0.0
        %4450 = vmatprep.subr.mxu0 0.0
        %4451 = vmatpush1.xpose.msra.mxu0 0.0
        %4452 = vmatprep.subr.mxu0 0.0
        %4453 = vmatpush1.xpose.msra.mxu0 0.0
        %4454 = vmatprep.subr.mxu0 0.0
        %4455 = vmatpush1.xpose.msra.mxu0 0.0
        %4456 = vmatprep.subr.mxu0 0.0
        %4457 = vmatpush1.xpose.msra.mxu0 0.0
        %4458 = vmatprep.subr.mxu0 0.0
        %4459 = vmatpush1.xpose.msra.mxu0 0.0
        %4460 = vmatprep.subr.mxu0 0.0
        %4461 = vmatpush1.xpose.msra.mxu0 0.0
        %4462 = vmatprep.subr.mxu0 0.0
        %4463 = vmatpush1.xpose.msra.mxu0 0.0
        %4464 = vmatprep.subr.mxu0 0.0
        %4465 = vmatpush1.xpose.msra.mxu0 0.0
        %4466 = vmatprep.subr.mxu0 0.0
        %4467 = vmatpush1.xpose.msra.mxu0 0.0
        %4468 = vmatprep.subr.mxu0 %v486
        %4469 = vmatpush1.xpose.msra.mxu0 %v484
        %4470 = vmatprep.subr.mxu0 0.0
        %4471 = vmatpush2.xpose.msra.mxu0 0.0
        %4472 = vmatprep.subr.mxu0 0.0
        %4473 = vmatpush2.xpose.msra.mxu0 0.0
        %4474 = vmatprep.subr.mxu0 0.0
        %4475 = vmatpush2.xpose.msra.mxu0 0.0
        %4476 = vmatprep.subr.mxu0 0.0
        %4477 = vmatpush2.xpose.msra.mxu0 0.0
        %4478 = vmatprep.subr.mxu0 0.0
        %4479 = vmatpush2.xpose.msra.mxu0 0.0
        %4480 = vmatprep.subr.mxu0 0.0
        %4481 = vmatpush2.xpose.msra.mxu0 0.0
        %4482 = vmatprep.subr.mxu0 0.0
        %4483 = vmatpush2.xpose.msra.mxu0 0.0
        %4484 = vmatprep.subr.mxu0 0.0
        %4485 = vmatpush2.xpose.msra.mxu0 0.0
        %4486 = vmatprep.subr.mxu0 0.0
        %4487 = vmatpush2.xpose.msra.mxu0 0.0
        %4488 = vmatprep.subr.mxu0 0.0
        %4489 = vmatpush2.xpose.msra.mxu0 0.0
        %4490 = vmatprep.subr.mxu0 0.0
        %4491 = vmatpush2.xpose.msra.mxu0 0.0
        %4492 = vmatprep.subr.mxu0 0.0
        %4493 = vmatpush2.xpose.msra.mxu0 0.0
        %4494 = vmatprep.subr.mxu0 0.0
        %4495 = vmatpush2.xpose.msra.mxu0 0.0
        %4496 = vmatprep.subr.mxu0 0.0
        %4497 = vmatpush2.xpose.msra.mxu0 0.0
        %4498 = vmatprep.subr.mxu0 0.0
        %4499 = vmatpush2.xpose.msra.mxu0 0.0
        %4500 = vmatprep.subr.mxu0 0.0
        %4501 = vmatpush2.xpose.msra.mxu0 0.0
        %4502 = vmatprep.mubr.f32.mxu0 %v4089
        %4503 = vmatmul.mubr.f32.gmra.mxu0 %v4087
        %v4504 = vpop.f32.mrf.mxu0
        %v4505 = vadd.f32 0.0, %v4504
        %v4506 = vpop.f32.mrf.mxu0
        %4507 = vmatprep.mubr.f32.mxu0 %v4093
        %4508 = vmatmul.mubr.f32.gmra.mxu0 %v4091
        %v4509 = vpop.f32.mrf.mxu0
        %v4510 = vadd.f32 0.0, %v4509
        %v4511 = vpop.f32.mrf.mxu0
        %4512 = vmatprep.mubr.f32.mxu0 %v4097
        %4513 = vmatmul.mubr.f32.gmra.mxu0 %v4095
        %v4514 = vpop.f32.mrf.mxu0
        %v4515 = vadd.f32 0.0, %v4514
        %v4516 = vpop.f32.mrf.mxu0
        %4517 = vmatprep.mubr.f32.mxu0 %v4101
        %4518 = vmatmul.mubr.f32.gmra.mxu0 %v4099
        %v4519 = vpop.f32.mrf.mxu0
        %v4520 = vadd.f32 0.0, %v4519
        %v4521 = vpop.f32.mrf.mxu0
        %4522 = vmatprep.mubr.f32.mxu0 %v4105
        %4523 = vmatmul.mubr.f32.gmra.mxu0 %v4103
        %v4524 = vpop.f32.mrf.mxu0
        %v4525 = vadd.f32 0.0, %v4524
        %v4526 = vpop.f32.mrf.mxu0
        %4527 = vmatprep.mubr.f32.mxu0 %v4109
        %4528 = vmatmul.mubr.f32.gmra.mxu0 %v4107
        %v4529 = vpop.f32.mrf.mxu0
        %v4530 = vadd.f32 0.0, %v4529
        %v4531 = vpop.f32.mrf.mxu0
        %4532 = vmatprep.mubr.f32.mxu0 %v4113
        %4533 = vmatmul.mubr.f32.gmra.mxu0 %v4111
        %v4534 = vpop.f32.mrf.mxu0
        %v4535 = vadd.f32 0.0, %v4534
        %v4536 = vpop.f32.mrf.mxu0
        %4537 = vmatprep.mubr.f32.mxu0 %v4117
        %4538 = vmatmul.mubr.f32.gmra.mxu0 %v4115
        %v4539 = vpop.f32.mrf.mxu0
        %v4540 = vadd.f32 0.0, %v4539
        %v4541 = vpop.f32.mrf.mxu0
        %4542 = vmatprep.mubr.f32.mxu0 %v4121
        %4543 = vmatmul.mubr.f32.gmra.mxu0 %v4119
        %v4544 = vpop.f32.mrf.mxu0
        %v4545 = vadd.f32 0.0, %v4544
        %v4546 = vpop.f32.mrf.mxu0
        %4547 = vmatprep.mubr.f32.mxu0 %v4125
        %4548 = vmatmul.mubr.f32.gmra.mxu0 %v4123
        %v4549 = vpop.f32.mrf.mxu0
        %v4550 = vadd.f32 0.0, %v4549
        %v4551 = vpop.f32.mrf.mxu0
        %4552 = vmatprep.mubr.f32.mxu0 %v4129
        %4553 = vmatmul.mubr.f32.gmra.mxu0 %v4127
        %v4554 = vpop.f32.mrf.mxu0
        %v4555 = vadd.f32 0.0, %v4554
        %v4556 = vpop.f32.mrf.mxu0
        %4557 = vmatprep.mubr.f32.mxu0 %v4133
        %4558 = vmatmul.mubr.f32.gmra.mxu0 %v4131
        %v4559 = vpop.f32.mrf.mxu0
        %v4560 = vadd.f32 0.0, %v4559
        %v4561 = vpop.f32.mrf.mxu0
        %4562 = vmatprep.mubr.f32.mxu0 %v4137
        %4563 = vmatmul.mubr.f32.gmra.mxu0 %v4135
        %v4564 = vpop.f32.mrf.mxu0
        %v4565 = vadd.f32 0.0, %v4564
        %v4566 = vpop.f32.mrf.mxu0
        %4567 = vmatprep.mubr.f32.mxu0 %v4141
        %4568 = vmatmul.mubr.f32.gmra.mxu0 %v4139
        %v4569 = vpop.f32.mrf.mxu0
        %v4570 = vadd.f32 0.0, %v4569
        %v4571 = vpop.f32.mrf.mxu0
        %4572 = vmatprep.mubr.f32.mxu0 %v4145
        %4573 = vmatmul.mubr.f32.gmra.mxu0 %v4143
        %v4574 = vpop.f32.mrf.mxu0
        %v4575 = vadd.f32 0.0, %v4574
        %v4576 = vpop.f32.mrf.mxu0
        %4577 = vmatprep.mubr.f32.mxu0 %v4149
        %4578 = vmatmul.mubr.f32.gmra.mxu0 %v4147
        %v4579 = vpop.f32.mrf.mxu0
        %v4580 = vadd.f32 0.0, %v4579
        %v4581 = vpop.f32.mrf.mxu0
        %4582 = vmatprep.mubr.f32.mxu0 %v4153
        %4583 = vmatmul.mubr.f32.gmra.mxu0 %v4151
        %v4584 = vpop.f32.mrf.mxu0
        %v4585 = vadd.f32 0.0, %v4584
        %v4586 = vpop.f32.mrf.mxu0
        %4587 = vmatprep.mubr.f32.mxu0 %v4157
        %4588 = vmatmul.mubr.f32.gmra.mxu0 %v4155
        %v4589 = vpop.f32.mrf.mxu0
        %v4590 = vadd.f32 0.0, %v4589
        %v4591 = vpop.f32.mrf.mxu0
        %4592 = vmatprep.mubr.f32.mxu0 %v4161
        %4593 = vmatmul.mubr.f32.gmra.mxu0 %v4159
        %v4594 = vpop.f32.mrf.mxu0
        %v4595 = vadd.f32 0.0, %v4594
        %v4596 = vpop.f32.mrf.mxu0
        %4597 = vmatprep.mubr.f32.mxu0 %v4165
        %4598 = vmatmul.mubr.f32.gmra.mxu0 %v4163
        %v4599 = vpop.f32.mrf.mxu0
        %v4600 = vadd.f32 0.0, %v4599
        %v4601 = vpop.f32.mrf.mxu0
        %4602 = vmatprep.mubr.f32.mxu0 %v4169
        %4603 = vmatmul.mubr.f32.gmra.mxu0 %v4167
        %v4604 = vpop.f32.mrf.mxu0
        %v4605 = vadd.f32 0.0, %v4604
        %v4606 = vpop.f32.mrf.mxu0
        %4607 = vmatprep.mubr.f32.mxu0 %v4173
        %4608 = vmatmul.mubr.f32.gmra.mxu0 %v4171
        %v4609 = vpop.f32.mrf.mxu0
        %v4610 = vadd.f32 0.0, %v4609
        %v4611 = vpop.f32.mrf.mxu0
        %4612 = vmatprep.mubr.f32.mxu0 %v4177
        %4613 = vmatmul.mubr.f32.gmra.mxu0 %v4175
        %v4614 = vpop.f32.mrf.mxu0
        %v4615 = vadd.f32 0.0, %v4614
        %v4616 = vpop.f32.mrf.mxu0
        %4617 = vmatprep.mubr.f32.mxu0 %v4181
        %4618 = vmatmul.mubr.f32.gmra.mxu0 %v4179
        %v4619 = vpop.f32.mrf.mxu0
        %v4620 = vadd.f32 0.0, %v4619
        %v4621 = vpop.f32.mrf.mxu0
        %4622 = vmatprep.mubr.f32.mxu0 %v4185
        %4623 = vmatmul.mubr.f32.gmra.mxu0 %v4183
        %v4624 = vpop.f32.mrf.mxu0
        %v4625 = vadd.f32 0.0, %v4624
        %v4626 = vpop.f32.mrf.mxu0
        %4627 = vmatprep.mubr.f32.mxu0 %v4189
        %4628 = vmatmul.mubr.f32.gmra.mxu0 %v4187
        %v4629 = vpop.f32.mrf.mxu0
        %v4630 = vadd.f32 0.0, %v4629
        %v4631 = vpop.f32.mrf.mxu0
        %4632 = vmatprep.mubr.f32.mxu0 %v4193
        %4633 = vmatmul.mubr.f32.gmra.mxu0 %v4191
        %v4634 = vpop.f32.mrf.mxu0
        %v4635 = vadd.f32 0.0, %v4634
        %v4636 = vpop.f32.mrf.mxu0
        %4637 = vmatprep.mubr.f32.mxu0 %v4197
        %4638 = vmatmul.mubr.f32.gmra.mxu0 %v4195
        %v4639 = vpop.f32.mrf.mxu0
        %v4640 = vadd.f32 0.0, %v4639
        %v4641 = vpop.f32.mrf.mxu0
        %4642 = vmatprep.mubr.f32.mxu0 %v4201
        %4643 = vmatmul.mubr.f32.gmra.mxu0 %v4199
        %v4644 = vpop.f32.mrf.mxu0
        %v4645 = vadd.f32 0.0, %v4644
        %v4646 = vpop.f32.mrf.mxu0
        %4647 = vmatprep.mubr.f32.mxu0 %v4205
        %4648 = vmatmul.mubr.f32.gmra.mxu0 %v4203
        %v4649 = vpop.f32.mrf.mxu0
        %v4650 = vadd.f32 0.0, %v4649
        %v4651 = vpop.f32.mrf.mxu0
        %4652 = vmatprep.mubr.f32.mxu0 %v4209
        %4653 = vmatmul.mubr.f32.gmra.mxu0 %v4207
        %v4654 = vpop.f32.mrf.mxu0
        %v4655 = vadd.f32 0.0, %v4654
        %v4656 = vpop.f32.mrf.mxu0
        %4657 = vmatprep.mubr.f32.mxu0 %v4213
        %4658 = vmatmul.mubr.f32.gmra.mxu0 %v4211
        %v4659 = vpop.f32.mrf.mxu0
        %v4660 = vadd.f32 0.0, %v4659
        %v4661 = vpop.f32.mrf.mxu0
        %4662 = vdwg.mxu0
        %v4663 = vmul.f32 %v4505, %v4406
        %v4664 = vmul.f32 %v4510, %v4407
        %v4665 = vmul.f32 %v4515, %v4408
        %v4666 = vmul.f32 %v4520, %v4409
        %v4667 = vmul.f32 %v4525, %v4410
        %v4668 = vmul.f32 %v4530, %v4411
        %v4669 = vmul.f32 %v4535, %v4412
        %v4670 = vmul.f32 %v4540, %v4413
        %v4671 = vmul.f32 %v4545, %v4414
        %v4672 = vmul.f32 %v4550, %v4415
        %v4673 = vmul.f32 %v4555, %v4416
        %v4674 = vmul.f32 %v4560, %v4417
        %v4675 = vmul.f32 %v4565, %v4418
        %v4676 = vmul.f32 %v4570, %v4419
        %v4677 = vmul.f32 %v4575, %v4420
        %v4678 = vmul.f32 %v4580, %v4421
        %v4679 = vmul.f32 %v4585, %v4422
        %v4680 = vmul.f32 %v4590, %v4423
        %v4681 = vmul.f32 %v4595, %v4424
        %v4682 = vmul.f32 %v4600, %v4425
        %v4683 = vmul.f32 %v4605, %v4426
        %v4684 = vmul.f32 %v4610, %v4427
        %v4685 = vmul.f32 %v4615, %v4428
        %v4686 = vmul.f32 %v4620, %v4429
        %v4687 = vmul.f32 %v4625, %v4430
        %v4688 = vmul.f32 %v4630, %v4431
        %v4689 = vmul.f32 %v4635, %v4432
        %v4690 = vmul.f32 %v4640, %v4433
        %v4691 = vmul.f32 %v4645, %v4434
        %v4692 = vmul.f32 %v4650, %v4435
        %v4693 = vmul.f32 %v4655, %v4436
        %v4694 = vmul.f32 %v4660, %v4437
        %v4696 = vsel %vm558, %v4663, 0
        %v4699 = vsel %vm558, %v4664, 0
        %v4702 = vsel %vm558, %v4665, 0
        %v4705 = vsel %vm558, %v4666, 0
        %v4708 = vsel %vm558, %v4667, 0
        %v4711 = vsel %vm558, %v4668, 0
        %v4714 = vsel %vm558, %v4669, 0
        %v4717 = vsel %vm558, %v4670, 0
        %v4720 = vsel %vm558, %v4671, 0
        %v4723 = vsel %vm558, %v4672, 0
        %v4726 = vsel %vm558, %v4673, 0
        %v4729 = vsel %vm558, %v4674, 0
        %v4732 = vsel %vm558, %v4675, 0
        %v4735 = vsel %vm558, %v4676, 0
        %v4738 = vsel %vm558, %v4677, 0
        %v4741 = vsel %vm558, %v4678, 0
        %v4744 = vsel %vm558, %v4679, 0
        %v4747 = vsel %vm558, %v4680, 0
        %v4750 = vsel %vm558, %v4681, 0
        %v4753 = vsel %vm558, %v4682, 0
        %v4756 = vsel %vm558, %v4683, 0
        %v4759 = vsel %vm558, %v4684, 0
        %v4762 = vsel %vm558, %v4685, 0
        %v4765 = vsel %vm558, %v4686, 0
        %v4768 = vsel %vm558, %v4687, 0
        %v4771 = vsel %vm558, %v4688, 0
        %v4774 = vsel %vm558, %v4689, 0
        %v4777 = vsel %vm558, %v4690, 0
        %v4780 = vsel %vm558, %v4691, 0
        %v4783 = vsel %vm558, %v4692, 0
        %v4786 = vsel %vm558, %v4693, 0
        %v4789 = vsel %vm558, %v4694, 0
        %4791 = vmatprep.subr.mxu0 0.0
        %4792 = vmatpush1.msra.mxu0 0.0
        %4793 = vmatprep.subr.mxu0 0.0
        %4794 = vmatpush1.msra.mxu0 0.0
        %4795 = vmatprep.subr.mxu0 0.0
        %4796 = vmatpush1.msra.mxu0 0.0
        %4797 = vmatprep.subr.mxu0 0.0
        %4798 = vmatpush1.msra.mxu0 0.0
        %4799 = vmatprep.subr.mxu0 0.0
        %4800 = vmatpush1.msra.mxu0 0.0
        %4801 = vmatprep.subr.mxu0 0.0
        %4802 = vmatpush1.msra.mxu0 0.0
        %4803 = vmatprep.subr.mxu0 0.0
        %4804 = vmatpush1.msra.mxu0 0.0
        %4805 = vmatprep.subr.mxu0 0.0
        %4806 = vmatpush1.msra.mxu0 0.0
        %4807 = vmatprep.subr.mxu0 0.0
        %4808 = vmatpush1.msra.mxu0 0.0
        %4809 = vmatprep.subr.mxu0 0.0
        %4810 = vmatpush1.msra.mxu0 0.0
        %4811 = vmatprep.subr.mxu0 0.0
        %4812 = vmatpush1.msra.mxu0 0.0
        %4813 = vmatprep.subr.mxu0 0.0
        %4814 = vmatpush1.msra.mxu0 0.0
        %4815 = vmatprep.subr.mxu0 0.0
        %4816 = vmatpush1.msra.mxu0 0.0
        %4817 = vmatprep.subr.mxu0 0.0
        %4818 = vmatpush1.msra.mxu0 0.0
        %4819 = vmatprep.subr.mxu0 0.0
        %4820 = vmatpush1.msra.mxu0 0.0
        %4821 = vmatprep.subr.mxu0 0.0
        %4822 = vmatpush1.msra.mxu0 %v249
        %4823 = vmatprep.subr.mxu0 0.0
        %4824 = vmatpush2.msra.mxu0 0.0
        %4825 = vmatprep.subr.mxu0 0.0
        %4826 = vmatpush2.msra.mxu0 0.0
        %4827 = vmatprep.subr.mxu0 0.0
        %4828 = vmatpush2.msra.mxu0 0.0
        %4829 = vmatprep.subr.mxu0 0.0
        %4830 = vmatpush2.msra.mxu0 0.0
        %4831 = vmatprep.subr.mxu0 0.0
        %4832 = vmatpush2.msra.mxu0 0.0
        %4833 = vmatprep.subr.mxu0 0.0
        %4834 = vmatpush2.msra.mxu0 0.0
        %4835 = vmatprep.subr.mxu0 0.0
        %4836 = vmatpush2.msra.mxu0 0.0
        %4837 = vmatprep.subr.mxu0 0.0
        %4838 = vmatpush2.msra.mxu0 0.0
        %4839 = vmatprep.subr.mxu0 0.0
        %4840 = vmatpush2.msra.mxu0 0.0
        %4841 = vmatprep.subr.mxu0 0.0
        %4842 = vmatpush2.msra.mxu0 0.0
        %4843 = vmatprep.subr.mxu0 0.0
        %4844 = vmatpush2.msra.mxu0 0.0
        %4845 = vmatprep.subr.mxu0 0.0
        %4846 = vmatpush2.msra.mxu0 0.0
        %4847 = vmatprep.subr.mxu0 0.0
        %4848 = vmatpush2.msra.mxu0 0.0
        %4849 = vmatprep.subr.mxu0 0.0
        %4850 = vmatpush2.msra.mxu0 0.0
        %4851 = vmatprep.subr.mxu0 0.0
        %4852 = vmatpush2.msra.mxu0 0.0
        %4853 = vmatprep.subr.mxu0 0.0
        %4854 = vmatpush2.msra.mxu0 0.0
        %4855 = vmatprep.mubr.f32.mxu0 0.0
        %4856 = vmatmul.mubr.f32.gmra.mxu0 %v4696
        %v4857 = vpop.f32.mrf.mxu0
        %v4858 = vadd.f32 0.0, %v4857
        %v4859 = vpop.f32.mrf.mxu0
        %4860 = vmatprep.mubr.f32.mxu0 0.0
        %4861 = vmatmul.mubr.f32.gmra.mxu0 %v4699
        %v4862 = vpop.f32.mrf.mxu0
        %v4863 = vadd.f32 0.0, %v4862
        %v4864 = vpop.f32.mrf.mxu0
        %4865 = vmatprep.mubr.f32.mxu0 0.0
        %4866 = vmatmul.mubr.f32.gmra.mxu0 %v4702
        %v4867 = vpop.f32.mrf.mxu0
        %v4868 = vadd.f32 0.0, %v4867
        %v4869 = vpop.f32.mrf.mxu0
        %4870 = vmatprep.mubr.f32.mxu0 0.0
        %4871 = vmatmul.mubr.f32.gmra.mxu0 %v4705
        %v4872 = vpop.f32.mrf.mxu0
        %v4873 = vadd.f32 0.0, %v4872
        %v4874 = vpop.f32.mrf.mxu0
        %4875 = vmatprep.mubr.f32.mxu0 0.0
        %4876 = vmatmul.mubr.f32.gmra.mxu0 %v4708
        %v4877 = vpop.f32.mrf.mxu0
        %v4878 = vadd.f32 0.0, %v4877
        %v4879 = vpop.f32.mrf.mxu0
        %4880 = vmatprep.mubr.f32.mxu0 0.0
        %4881 = vmatmul.mubr.f32.gmra.mxu0 %v4711
        %v4882 = vpop.f32.mrf.mxu0
        %v4883 = vadd.f32 0.0, %v4882
        %v4884 = vpop.f32.mrf.mxu0
        %4885 = vmatprep.mubr.f32.mxu0 0.0
        %4886 = vmatmul.mubr.f32.gmra.mxu0 %v4714
        %v4887 = vpop.f32.mrf.mxu0
        %v4888 = vadd.f32 0.0, %v4887
        %v4889 = vpop.f32.mrf.mxu0
        %4890 = vmatprep.mubr.f32.mxu0 0.0
        %4891 = vmatmul.mubr.f32.gmra.mxu0 %v4717
        %v4892 = vpop.f32.mrf.mxu0
        %v4893 = vadd.f32 0.0, %v4892
        %v4894 = vpop.f32.mrf.mxu0
        %4895 = vmatprep.mubr.f32.mxu0 0.0
        %4896 = vmatmul.mubr.f32.gmra.mxu0 %v4720
        %v4897 = vpop.f32.mrf.mxu0
        %v4898 = vadd.f32 0.0, %v4897
        %v4899 = vpop.f32.mrf.mxu0
        %4900 = vmatprep.mubr.f32.mxu0 0.0
        %4901 = vmatmul.mubr.f32.gmra.mxu0 %v4723
        %v4902 = vpop.f32.mrf.mxu0
        %v4903 = vadd.f32 0.0, %v4902
        %v4904 = vpop.f32.mrf.mxu0
        %4905 = vmatprep.mubr.f32.mxu0 0.0
        %4906 = vmatmul.mubr.f32.gmra.mxu0 %v4726
        %v4907 = vpop.f32.mrf.mxu0
        %v4908 = vadd.f32 0.0, %v4907
        %v4909 = vpop.f32.mrf.mxu0
        %4910 = vmatprep.mubr.f32.mxu0 0.0
        %4911 = vmatmul.mubr.f32.gmra.mxu0 %v4729
        %v4912 = vpop.f32.mrf.mxu0
        %v4913 = vadd.f32 0.0, %v4912
        %v4914 = vpop.f32.mrf.mxu0
        %4915 = vmatprep.mubr.f32.mxu0 0.0
        %4916 = vmatmul.mubr.f32.gmra.mxu0 %v4732
        %v4917 = vpop.f32.mrf.mxu0
        %v4918 = vadd.f32 0.0, %v4917
        %v4919 = vpop.f32.mrf.mxu0
        %4920 = vmatprep.mubr.f32.mxu0 0.0
        %4921 = vmatmul.mubr.f32.gmra.mxu0 %v4735
        %v4922 = vpop.f32.mrf.mxu0
        %v4923 = vadd.f32 0.0, %v4922
        %v4924 = vpop.f32.mrf.mxu0
        %4925 = vmatprep.mubr.f32.mxu0 0.0
        %4926 = vmatmul.mubr.f32.gmra.mxu0 %v4738
        %v4927 = vpop.f32.mrf.mxu0
        %v4928 = vadd.f32 0.0, %v4927
        %v4929 = vpop.f32.mrf.mxu0
        %4930 = vmatprep.mubr.f32.mxu0 0.0
        %4931 = vmatmul.mubr.f32.gmra.mxu0 %v4741
        %v4932 = vpop.f32.mrf.mxu0
        %v4933 = vadd.f32 0.0, %v4932
        %v4934 = vpop.f32.mrf.mxu0
        %4935 = vmatprep.mubr.f32.mxu0 0.0
        %4936 = vmatmul.mubr.f32.gmra.mxu0 %v4744
        %v4937 = vpop.f32.mrf.mxu0
        %v4938 = vadd.f32 0.0, %v4937
        %v4939 = vpop.f32.mrf.mxu0
        %4940 = vmatprep.mubr.f32.mxu0 0.0
        %4941 = vmatmul.mubr.f32.gmra.mxu0 %v4747
        %v4942 = vpop.f32.mrf.mxu0
        %v4943 = vadd.f32 0.0, %v4942
        %v4944 = vpop.f32.mrf.mxu0
        %4945 = vmatprep.mubr.f32.mxu0 0.0
        %4946 = vmatmul.mubr.f32.gmra.mxu0 %v4750
        %v4947 = vpop.f32.mrf.mxu0
        %v4948 = vadd.f32 0.0, %v4947
        %v4949 = vpop.f32.mrf.mxu0
        %4950 = vmatprep.mubr.f32.mxu0 0.0
        %4951 = vmatmul.mubr.f32.gmra.mxu0 %v4753
        %v4952 = vpop.f32.mrf.mxu0
        %v4953 = vadd.f32 0.0, %v4952
        %v4954 = vpop.f32.mrf.mxu0
        %4955 = vmatprep.mubr.f32.mxu0 0.0
        %4956 = vmatmul.mubr.f32.gmra.mxu0 %v4756
        %v4957 = vpop.f32.mrf.mxu0
        %v4958 = vadd.f32 0.0, %v4957
        %v4959 = vpop.f32.mrf.mxu0
        %4960 = vmatprep.mubr.f32.mxu0 0.0
        %4961 = vmatmul.mubr.f32.gmra.mxu0 %v4759
        %v4962 = vpop.f32.mrf.mxu0
        %v4963 = vadd.f32 0.0, %v4962
        %v4964 = vpop.f32.mrf.mxu0
        %4965 = vmatprep.mubr.f32.mxu0 0.0
        %4966 = vmatmul.mubr.f32.gmra.mxu0 %v4762
        %v4967 = vpop.f32.mrf.mxu0
        %v4968 = vadd.f32 0.0, %v4967
        %v4969 = vpop.f32.mrf.mxu0
        %4970 = vmatprep.mubr.f32.mxu0 0.0
        %4971 = vmatmul.mubr.f32.gmra.mxu0 %v4765
        %v4972 = vpop.f32.mrf.mxu0
        %v4973 = vadd.f32 0.0, %v4972
        %v4974 = vpop.f32.mrf.mxu0
        %4975 = vmatprep.mubr.f32.mxu0 0.0
        %4976 = vmatmul.mubr.f32.gmra.mxu0 %v4768
        %v4977 = vpop.f32.mrf.mxu0
        %v4978 = vadd.f32 0.0, %v4977
        %v4979 = vpop.f32.mrf.mxu0
        %4980 = vmatprep.mubr.f32.mxu0 0.0
        %4981 = vmatmul.mubr.f32.gmra.mxu0 %v4771
        %v4982 = vpop.f32.mrf.mxu0
        %v4983 = vadd.f32 0.0, %v4982
        %v4984 = vpop.f32.mrf.mxu0
        %4985 = vmatprep.mubr.f32.mxu0 0.0
        %4986 = vmatmul.mubr.f32.gmra.mxu0 %v4774
        %v4987 = vpop.f32.mrf.mxu0
        %v4988 = vadd.f32 0.0, %v4987
        %v4989 = vpop.f32.mrf.mxu0
        %4990 = vmatprep.mubr.f32.mxu0 0.0
        %4991 = vmatmul.mubr.f32.gmra.mxu0 %v4777
        %v4992 = vpop.f32.mrf.mxu0
        %v4993 = vadd.f32 0.0, %v4992
        %v4994 = vpop.f32.mrf.mxu0
        %4995 = vmatprep.mubr.f32.mxu0 0.0
        %4996 = vmatmul.mubr.f32.gmra.mxu0 %v4780
        %v4997 = vpop.f32.mrf.mxu0
        %v4998 = vadd.f32 0.0, %v4997
        %v4999 = vpop.f32.mrf.mxu0
        %5000 = vmatprep.mubr.f32.mxu0 0.0
        %5001 = vmatmul.mubr.f32.gmra.mxu0 %v4783
        %v5002 = vpop.f32.mrf.mxu0
        %v5003 = vadd.f32 0.0, %v5002
        %v5004 = vpop.f32.mrf.mxu0
        %5005 = vmatprep.mubr.f32.mxu0 0.0
        %5006 = vmatmul.mubr.f32.gmra.mxu0 %v4786
        %v5007 = vpop.f32.mrf.mxu0
        %v5008 = vadd.f32 0.0, %v5007
        %v5009 = vpop.f32.mrf.mxu0
        %5010 = vmatprep.mubr.f32.mxu0 0.0
        %5011 = vmatmul.mubr.f32.gmra.mxu0 %v4789
        %v5012 = vpop.f32.mrf.mxu0
        %v5013 = vadd.f32 0.0, %v5012
        %v5014 = vpop.f32.mrf.mxu0
        %5015 = vdwg.mxu0
        %v5016 = vadd.f32 %v3351, %v4858
        %v5017 = vadd.f32 %v3356, %v4863
        %v5018 = vadd.f32 %v3361, %v4868
        %v5019 = vadd.f32 %v3366, %v4873
        %v5020 = vadd.f32 %v3371, %v4878
        %v5021 = vadd.f32 %v3376, %v4883
        %v5022 = vadd.f32 %v3381, %v4888
        %v5023 = vadd.f32 %v3386, %v4893
        %v5024 = vadd.f32 %v3391, %v4898
        %v5025 = vadd.f32 %v3396, %v4903
        %v5026 = vadd.f32 %v3401, %v4908
        %v5027 = vadd.f32 %v3406, %v4913
        %v5028 = vadd.f32 %v3411, %v4918
        %v5029 = vadd.f32 %v3416, %v4923
        %v5030 = vadd.f32 %v3421, %v4928
        %v5031 = vadd.f32 %v3426, %v4933
        %v5032 = vadd.f32 %v3431, %v4938
        %v5033 = vadd.f32 %v3436, %v4943
        %v5034 = vadd.f32 %v3441, %v4948
        %v5035 = vadd.f32 %v3446, %v4953
        %v5036 = vadd.f32 %v3451, %v4958
        %v5037 = vadd.f32 %v3456, %v4963
        %v5038 = vadd.f32 %v3461, %v4968
        %v5039 = vadd.f32 %v3466, %v4973
        %v5040 = vadd.f32 %v3471, %v4978
        %v5041 = vadd.f32 %v3476, %v4983
        %v5042 = vadd.f32 %v3481, %v4988
        %v5043 = vadd.f32 %v3486, %v4993
        %v5044 = vadd.f32 %v3491, %v4998
        %v5045 = vadd.f32 %v3496, %v5003
        %v5046 = vadd.f32 %v3501, %v5008
        %v5047 = vadd.f32 %v3506, %v5013
        %5048 = vxpose.xlu0.b32.start [1/16] %v442, 128
        %5049 = vxpose.xlu0.b32.cont [2/16] 0.0, 128
        %5050 = vxpose.xlu0.b32.cont [3/16] 0.0, 128
        %5051 = vxpose.xlu0.b32.cont [4/16] 0.0, 128
        %5052 = vxpose.xlu0.b32.cont [5/16] 0.0, 128
        %5053 = vxpose.xlu0.b32.cont [6/16] 0.0, 128
        %5054 = vxpose.xlu0.b32.cont [7/16] 0.0, 128
        %5055 = vxpose.xlu0.b32.cont [8/16] 0.0, 128
        %5056 = vxpose.xlu0.b32.cont [9/16] 0.0, 128
        %5057 = vxpose.xlu0.b32.cont [10/16] 0.0, 128
        %5058 = vxpose.xlu0.b32.cont [11/16] 0.0, 128
        %5059 = vxpose.xlu0.b32.cont [12/16] 0.0, 128
        %5060 = vxpose.xlu0.b32.cont [13/16] 0.0, 128
        %5061 = vxpose.xlu0.b32.cont [14/16] 0.0, 128
        %5062 = vxpose.xlu0.b32.cont [15/16] 0.0, 128
        %5063 = vxpose.xlu0.b32.end [16/16] 0.0, 128
        %v5064 = vpop.trf.xlu0
        %v5065 = vpop.trf.xlu0
        %v5066 = vpop.trf.xlu0
        %v5067 = vpop.trf.xlu0
        %v5068 = vpop.trf.xlu0
        %v5069 = vpop.trf.xlu0
        %v5070 = vpop.trf.xlu0
        %v5071 = vpop.trf.xlu0
        %v5072 = vpop.trf.xlu0
        %v5073 = vpop.trf.xlu0
        %v5074 = vpop.trf.xlu0
        %v5075 = vpop.trf.xlu0
        %v5076 = vpop.trf.xlu0
        %v5077 = vpop.trf.xlu0
        %v5078 = vpop.trf.xlu0
        %v5079 = vpop.trf.xlu0
        %5080 = vxpose.xlu0.b32.start [1/16] %v444, 128
        %5081 = vxpose.xlu0.b32.cont [2/16] 0.0, 128
        %5082 = vxpose.xlu0.b32.cont [3/16] 0.0, 128
        %5083 = vxpose.xlu0.b32.cont [4/16] 0.0, 128
        %5084 = vxpose.xlu0.b32.cont [5/16] 0.0, 128
        %5085 = vxpose.xlu0.b32.cont [6/16] 0.0, 128
        %5086 = vxpose.xlu0.b32.cont [7/16] 0.0, 128
        %5087 = vxpose.xlu0.b32.cont [8/16] 0.0, 128
        %5088 = vxpose.xlu0.b32.cont [9/16] 0.0, 128
        %5089 = vxpose.xlu0.b32.cont [10/16] 0.0, 128
        %5090 = vxpose.xlu0.b32.cont [11/16] 0.0, 128
        %5091 = vxpose.xlu0.b32.cont [12/16] 0.0, 128
        %5092 = vxpose.xlu0.b32.cont [13/16] 0.0, 128
        %5093 = vxpose.xlu0.b32.cont [14/16] 0.0, 128
        %5094 = vxpose.xlu0.b32.cont [15/16] 0.0, 128
        %5095 = vxpose.xlu0.b32.end [16/16] 0.0, 128
        %v5096 = vpop.trf.xlu0
        %v5097 = vpop.trf.xlu0
        %v5098 = vpop.trf.xlu0
        %v5099 = vpop.trf.xlu0
        %v5100 = vpop.trf.xlu0
        %v5101 = vpop.trf.xlu0
        %v5102 = vpop.trf.xlu0
        %v5103 = vpop.trf.xlu0
        %v5104 = vpop.trf.xlu0
        %v5105 = vpop.trf.xlu0
        %v5106 = vpop.trf.xlu0
        %v5107 = vpop.trf.xlu0
        %v5108 = vpop.trf.xlu0
        %v5109 = vpop.trf.xlu0
        %v5110 = vpop.trf.xlu0
        %v5111 = vpop.trf.xlu0
        %v5113 = vsel %vm558, %v5064, 0
        %v5116 = vsel %vm558, %v5065, 0
        %v5119 = vsel %vm558, %v5066, 0
        %v5122 = vsel %vm558, %v5067, 0
        %v5125 = vsel %vm558, %v5068, 0
        %v5128 = vsel %vm558, %v5069, 0
        %v5131 = vsel %vm558, %v5070, 0
        %v5134 = vsel %vm558, %v5071, 0
        %v5137 = vsel %vm558, %v5072, 0
        %v5140 = vsel %vm558, %v5073, 0
        %v5143 = vsel %vm558, %v5074, 0
        %v5146 = vsel %vm558, %v5075, 0
        %v5149 = vsel %vm558, %v5076, 0
        %v5152 = vsel %vm558, %v5077, 0
        %v5155 = vsel %vm558, %v5078, 0
        %v5158 = vsel %vm558, %v5079, 0
        %v5161 = vsel %vm558, %v5096, 0
        %v5164 = vsel %vm558, %v5097, 0
        %v5167 = vsel %vm558, %v5098, 0
        %v5170 = vsel %vm558, %v5099, 0
        %v5173 = vsel %vm558, %v5100, 0
        %v5176 = vsel %vm558, %v5101, 0
        %v5179 = vsel %vm558, %v5102, 0
        %v5182 = vsel %vm558, %v5103, 0
        %v5185 = vsel %vm558, %v5104, 0
        %v5188 = vsel %vm558, %v5105, 0
        %v5191 = vsel %vm558, %v5106, 0
        %v5194 = vsel %vm558, %v5107, 0
        %v5197 = vsel %vm558, %v5108, 0
        %v5200 = vsel %vm558, %v5109, 0
        %v5203 = vsel %vm558, %v5110, 0
        %v5206 = vsel %vm558, %v5111, 0
        %5208 = vmatprep.subr.mxu0 0.0
        %5209 = vmatpush1.msra.mxu0 0.0
        %5210 = vmatprep.subr.mxu0 0.0
        %5211 = vmatpush1.msra.mxu0 0.0
        %5212 = vmatprep.subr.mxu0 0.0
        %5213 = vmatpush1.msra.mxu0 0.0
        %5214 = vmatprep.subr.mxu0 0.0
        %5215 = vmatpush1.msra.mxu0 0.0
        %5216 = vmatprep.subr.mxu0 0.0
        %5217 = vmatpush1.msra.mxu0 0.0
        %5218 = vmatprep.subr.mxu0 0.0
        %5219 = vmatpush1.msra.mxu0 0.0
        %5220 = vmatprep.subr.mxu0 0.0
        %5221 = vmatpush1.msra.mxu0 0.0
        %5222 = vmatprep.subr.mxu0 0.0
        %5223 = vmatpush1.msra.mxu0 0.0
        %5224 = vmatprep.subr.mxu0 0.0
        %5225 = vmatpush1.msra.mxu0 0.0
        %5226 = vmatprep.subr.mxu0 0.0
        %5227 = vmatpush1.msra.mxu0 0.0
        %5228 = vmatprep.subr.mxu0 0.0
        %5229 = vmatpush1.msra.mxu0 0.0
        %5230 = vmatprep.subr.mxu0 0.0
        %5231 = vmatpush1.msra.mxu0 0.0
        %5232 = vmatprep.subr.mxu0 0.0
        %5233 = vmatpush1.msra.mxu0 0.0
        %5234 = vmatprep.subr.mxu0 0.0
        %5235 = vmatpush1.msra.mxu0 0.0
        %5236 = vmatprep.subr.mxu0 0.0
        %5237 = vmatpush1.msra.mxu0 0.0
        %5238 = vmatprep.subr.mxu0 %v468
        %5239 = vmatpush1.msra.mxu0 %v466
        %5240 = vmatprep.subr.mxu0 0.0
        %5241 = vmatpush2.msra.mxu0 0.0
        %5242 = vmatprep.subr.mxu0 0.0
        %5243 = vmatpush2.msra.mxu0 0.0
        %5244 = vmatprep.subr.mxu0 0.0
        %5245 = vmatpush2.msra.mxu0 0.0
        %5246 = vmatprep.subr.mxu0 0.0
        %5247 = vmatpush2.msra.mxu0 0.0
        %5248 = vmatprep.subr.mxu0 0.0
        %5249 = vmatpush2.msra.mxu0 0.0
        %5250 = vmatprep.subr.mxu0 0.0
        %5251 = vmatpush2.msra.mxu0 0.0
        %5252 = vmatprep.subr.mxu0 0.0
        %5253 = vmatpush2.msra.mxu0 0.0
        %5254 = vmatprep.subr.mxu0 0.0
        %5255 = vmatpush2.msra.mxu0 0.0
        %5256 = vmatprep.subr.mxu0 0.0
        %5257 = vmatpush2.msra.mxu0 0.0
        %5258 = vmatprep.subr.mxu0 0.0
        %5259 = vmatpush2.msra.mxu0 0.0
        %5260 = vmatprep.subr.mxu0 0.0
        %5261 = vmatpush2.msra.mxu0 0.0
        %5262 = vmatprep.subr.mxu0 0.0
        %5263 = vmatpush2.msra.mxu0 0.0
        %5264 = vmatprep.subr.mxu0 0.0
        %5265 = vmatpush2.msra.mxu0 0.0
        %5266 = vmatprep.subr.mxu0 0.0
        %5267 = vmatpush2.msra.mxu0 0.0
        %5268 = vmatprep.subr.mxu0 0.0
        %5269 = vmatpush2.msra.mxu0 0.0
        %5270 = vmatprep.subr.mxu0 0.0
        %5271 = vmatpush2.msra.mxu0 0.0
        %5272 = vmatprep.mubr.f32.mxu0 0.0
        %5273 = vmatmul.mubr.f32.gmra.mxu0 %v5113
        %v5274 = vpop.f32.mrf.mxu0
        %v5275 = vadd.f32 0.0, %v5274
        %v5276 = vpop.f32.mrf.mxu0
        %v5277 = vadd.f32 0.0, %v5276
        %5278 = vmatprep.mubr.f32.mxu0 0.0
        %5279 = vmatmul.mubr.f32.gmra.mxu0 %v5116
        %v5280 = vpop.f32.mrf.mxu0
        %v5281 = vadd.f32 0.0, %v5280
        %v5282 = vpop.f32.mrf.mxu0
        %v5283 = vadd.f32 0.0, %v5282
        %5284 = vmatprep.mubr.f32.mxu0 0.0
        %5285 = vmatmul.mubr.f32.gmra.mxu0 %v5119
        %v5286 = vpop.f32.mrf.mxu0
        %v5287 = vadd.f32 0.0, %v5286
        %v5288 = vpop.f32.mrf.mxu0
        %v5289 = vadd.f32 0.0, %v5288
        %5290 = vmatprep.mubr.f32.mxu0 0.0
        %5291 = vmatmul.mubr.f32.gmra.mxu0 %v5122
        %v5292 = vpop.f32.mrf.mxu0
        %v5293 = vadd.f32 0.0, %v5292
        %v5294 = vpop.f32.mrf.mxu0
        %v5295 = vadd.f32 0.0, %v5294
        %5296 = vmatprep.mubr.f32.mxu0 0.0
        %5297 = vmatmul.mubr.f32.gmra.mxu0 %v5125
        %v5298 = vpop.f32.mrf.mxu0
        %v5299 = vadd.f32 0.0, %v5298
        %v5300 = vpop.f32.mrf.mxu0
        %v5301 = vadd.f32 0.0, %v5300
        %5302 = vmatprep.mubr.f32.mxu0 0.0
        %5303 = vmatmul.mubr.f32.gmra.mxu0 %v5128
        %v5304 = vpop.f32.mrf.mxu0
        %v5305 = vadd.f32 0.0, %v5304
        %v5306 = vpop.f32.mrf.mxu0
        %v5307 = vadd.f32 0.0, %v5306
        %5308 = vmatprep.mubr.f32.mxu0 0.0
        %5309 = vmatmul.mubr.f32.gmra.mxu0 %v5131
        %v5310 = vpop.f32.mrf.mxu0
        %v5311 = vadd.f32 0.0, %v5310
        %v5312 = vpop.f32.mrf.mxu0
        %v5313 = vadd.f32 0.0, %v5312
        %5314 = vmatprep.mubr.f32.mxu0 0.0
        %5315 = vmatmul.mubr.f32.gmra.mxu0 %v5134
        %v5316 = vpop.f32.mrf.mxu0
        %v5317 = vadd.f32 0.0, %v5316
        %v5318 = vpop.f32.mrf.mxu0
        %v5319 = vadd.f32 0.0, %v5318
        %5320 = vmatprep.mubr.f32.mxu0 0.0
        %5321 = vmatmul.mubr.f32.gmra.mxu0 %v5137
        %v5322 = vpop.f32.mrf.mxu0
        %v5323 = vadd.f32 0.0, %v5322
        %v5324 = vpop.f32.mrf.mxu0
        %v5325 = vadd.f32 0.0, %v5324
        %5326 = vmatprep.mubr.f32.mxu0 0.0
        %5327 = vmatmul.mubr.f32.gmra.mxu0 %v5140
        %v5328 = vpop.f32.mrf.mxu0
        %v5329 = vadd.f32 0.0, %v5328
        %v5330 = vpop.f32.mrf.mxu0
        %v5331 = vadd.f32 0.0, %v5330
        %5332 = vmatprep.mubr.f32.mxu0 0.0
        %5333 = vmatmul.mubr.f32.gmra.mxu0 %v5143
        %v5334 = vpop.f32.mrf.mxu0
        %v5335 = vadd.f32 0.0, %v5334
        %v5336 = vpop.f32.mrf.mxu0
        %v5337 = vadd.f32 0.0, %v5336
        %5338 = vmatprep.mubr.f32.mxu0 0.0
        %5339 = vmatmul.mubr.f32.gmra.mxu0 %v5146
        %v5340 = vpop.f32.mrf.mxu0
        %v5341 = vadd.f32 0.0, %v5340
        %v5342 = vpop.f32.mrf.mxu0
        %v5343 = vadd.f32 0.0, %v5342
        %5344 = vmatprep.mubr.f32.mxu0 0.0
        %5345 = vmatmul.mubr.f32.gmra.mxu0 %v5149
        %v5346 = vpop.f32.mrf.mxu0
        %v5347 = vadd.f32 0.0, %v5346
        %v5348 = vpop.f32.mrf.mxu0
        %v5349 = vadd.f32 0.0, %v5348
        %5350 = vmatprep.mubr.f32.mxu0 0.0
        %5351 = vmatmul.mubr.f32.gmra.mxu0 %v5152
        %v5352 = vpop.f32.mrf.mxu0
        %v5353 = vadd.f32 0.0, %v5352
        %v5354 = vpop.f32.mrf.mxu0
        %v5355 = vadd.f32 0.0, %v5354
        %5356 = vmatprep.mubr.f32.mxu0 0.0
        %5357 = vmatmul.mubr.f32.gmra.mxu0 %v5155
        %v5358 = vpop.f32.mrf.mxu0
        %v5359 = vadd.f32 0.0, %v5358
        %v5360 = vpop.f32.mrf.mxu0
        %v5361 = vadd.f32 0.0, %v5360
        %5362 = vmatprep.mubr.f32.mxu0 0.0
        %5363 = vmatmul.mubr.f32.gmra.mxu0 %v5158
        %v5364 = vpop.f32.mrf.mxu0
        %v5365 = vadd.f32 0.0, %v5364
        %v5366 = vpop.f32.mrf.mxu0
        %v5367 = vadd.f32 0.0, %v5366
        %5368 = vmatprep.mubr.f32.mxu0 0.0
        %5369 = vmatmul.mubr.f32.gmra.mxu0 %v5161
        %v5370 = vpop.f32.mrf.mxu0
        %v5371 = vadd.f32 0.0, %v5370
        %v5372 = vpop.f32.mrf.mxu0
        %v5373 = vadd.f32 0.0, %v5372
        %5374 = vmatprep.mubr.f32.mxu0 0.0
        %5375 = vmatmul.mubr.f32.gmra.mxu0 %v5164
        %v5376 = vpop.f32.mrf.mxu0
        %v5377 = vadd.f32 0.0, %v5376
        %v5378 = vpop.f32.mrf.mxu0
        %v5379 = vadd.f32 0.0, %v5378
        %5380 = vmatprep.mubr.f32.mxu0 0.0
        %5381 = vmatmul.mubr.f32.gmra.mxu0 %v5167
        %v5382 = vpop.f32.mrf.mxu0
        %v5383 = vadd.f32 0.0, %v5382
        %v5384 = vpop.f32.mrf.mxu0
        %v5385 = vadd.f32 0.0, %v5384
        %5386 = vmatprep.mubr.f32.mxu0 0.0
        %5387 = vmatmul.mubr.f32.gmra.mxu0 %v5170
        %v5388 = vpop.f32.mrf.mxu0
        %v5389 = vadd.f32 0.0, %v5388
        %v5390 = vpop.f32.mrf.mxu0
        %v5391 = vadd.f32 0.0, %v5390
        %5392 = vmatprep.mubr.f32.mxu0 0.0
        %5393 = vmatmul.mubr.f32.gmra.mxu0 %v5173
        %v5394 = vpop.f32.mrf.mxu0
        %v5395 = vadd.f32 0.0, %v5394
        %v5396 = vpop.f32.mrf.mxu0
        %v5397 = vadd.f32 0.0, %v5396
        %5398 = vmatprep.mubr.f32.mxu0 0.0
        %5399 = vmatmul.mubr.f32.gmra.mxu0 %v5176
        %v5400 = vpop.f32.mrf.mxu0
        %v5401 = vadd.f32 0.0, %v5400
        %v5402 = vpop.f32.mrf.mxu0
        %v5403 = vadd.f32 0.0, %v5402
        %5404 = vmatprep.mubr.f32.mxu0 0.0
        %5405 = vmatmul.mubr.f32.gmra.mxu0 %v5179
        %v5406 = vpop.f32.mrf.mxu0
        %v5407 = vadd.f32 0.0, %v5406
        %v5408 = vpop.f32.mrf.mxu0
        %v5409 = vadd.f32 0.0, %v5408
        %5410 = vmatprep.mubr.f32.mxu0 0.0
        %5411 = vmatmul.mubr.f32.gmra.mxu0 %v5182
        %v5412 = vpop.f32.mrf.mxu0
        %v5413 = vadd.f32 0.0, %v5412
        %v5414 = vpop.f32.mrf.mxu0
        %v5415 = vadd.f32 0.0, %v5414
        %5416 = vmatprep.mubr.f32.mxu0 0.0
        %5417 = vmatmul.mubr.f32.gmra.mxu0 %v5185
        %v5418 = vpop.f32.mrf.mxu0
        %v5419 = vadd.f32 0.0, %v5418
        %v5420 = vpop.f32.mrf.mxu0
        %v5421 = vadd.f32 0.0, %v5420
        %5422 = vmatprep.mubr.f32.mxu0 0.0
        %5423 = vmatmul.mubr.f32.gmra.mxu0 %v5188
        %v5424 = vpop.f32.mrf.mxu0
        %v5425 = vadd.f32 0.0, %v5424
        %v5426 = vpop.f32.mrf.mxu0
        %v5427 = vadd.f32 0.0, %v5426
        %5428 = vmatprep.mubr.f32.mxu0 0.0
        %5429 = vmatmul.mubr.f32.gmra.mxu0 %v5191
        %v5430 = vpop.f32.mrf.mxu0
        %v5431 = vadd.f32 0.0, %v5430
        %v5432 = vpop.f32.mrf.mxu0
        %v5433 = vadd.f32 0.0, %v5432
        %5434 = vmatprep.mubr.f32.mxu0 0.0
        %5435 = vmatmul.mubr.f32.gmra.mxu0 %v5194
        %v5436 = vpop.f32.mrf.mxu0
        %v5437 = vadd.f32 0.0, %v5436
        %v5438 = vpop.f32.mrf.mxu0
        %v5439 = vadd.f32 0.0, %v5438
        %5440 = vmatprep.mubr.f32.mxu0 0.0
        %5441 = vmatmul.mubr.f32.gmra.mxu0 %v5197
        %v5442 = vpop.f32.mrf.mxu0
        %v5443 = vadd.f32 0.0, %v5442
        %v5444 = vpop.f32.mrf.mxu0
        %v5445 = vadd.f32 0.0, %v5444
        %5446 = vmatprep.mubr.f32.mxu0 0.0
        %5447 = vmatmul.mubr.f32.gmra.mxu0 %v5200
        %v5448 = vpop.f32.mrf.mxu0
        %v5449 = vadd.f32 0.0, %v5448
        %v5450 = vpop.f32.mrf.mxu0
        %v5451 = vadd.f32 0.0, %v5450
        %5452 = vmatprep.mubr.f32.mxu0 0.0
        %5453 = vmatmul.mubr.f32.gmra.mxu0 %v5203
        %v5454 = vpop.f32.mrf.mxu0
        %v5455 = vadd.f32 0.0, %v5454
        %v5456 = vpop.f32.mrf.mxu0
        %v5457 = vadd.f32 0.0, %v5456
        %5458 = vmatprep.mubr.f32.mxu0 0.0
        %5459 = vmatmul.mubr.f32.gmra.mxu0 %v5206
        %v5460 = vpop.f32.mrf.mxu0
        %v5461 = vadd.f32 0.0, %v5460
        %v5462 = vpop.f32.mrf.mxu0
        %v5463 = vadd.f32 0.0, %v5462
        %5464 = vdwg.mxu0
        %v5465 = vmax.f32 %v5275, %v5277
        %5466 = vmax.xlane.f32.xlu0 %v5465
        %v5467 = vpop.xlane.xlu0 %5466
        %v5468 = vmax.f32 %v5281, %v5283
        %5469 = vmax.xlane.f32.xlu0 %v5468
        %v5470 = vpop.xlane.xlu0 %5469
        %v5471 = vmax.f32 %v5287, %v5289
        %5472 = vmax.xlane.f32.xlu0 %v5471
        %v5473 = vpop.xlane.xlu0 %5472
        %v5474 = vmax.f32 %v5293, %v5295
        %5475 = vmax.xlane.f32.xlu0 %v5474
        %v5476 = vpop.xlane.xlu0 %5475
        %v5477 = vmax.f32 %v5299, %v5301
        %5478 = vmax.xlane.f32.xlu0 %v5477
        %v5479 = vpop.xlane.xlu0 %5478
        %v5480 = vmax.f32 %v5305, %v5307
        %5481 = vmax.xlane.f32.xlu0 %v5480
        %v5482 = vpop.xlane.xlu0 %5481
        %v5483 = vmax.f32 %v5311, %v5313
        %5484 = vmax.xlane.f32.xlu0 %v5483
        %v5485 = vpop.xlane.xlu0 %5484
        %v5486 = vmax.f32 %v5317, %v5319
        %5487 = vmax.xlane.f32.xlu0 %v5486
        %v5488 = vpop.xlane.xlu0 %5487
        %v5489 = vmax.f32 %v5323, %v5325
        %5490 = vmax.xlane.f32.xlu0 %v5489
        %v5491 = vpop.xlane.xlu0 %5490
        %v5492 = vmax.f32 %v5329, %v5331
        %5493 = vmax.xlane.f32.xlu0 %v5492
        %v5494 = vpop.xlane.xlu0 %5493
        %v5495 = vmax.f32 %v5335, %v5337
        %5496 = vmax.xlane.f32.xlu0 %v5495
        %v5497 = vpop.xlane.xlu0 %5496
        %v5498 = vmax.f32 %v5341, %v5343
        %5499 = vmax.xlane.f32.xlu0 %v5498
        %v5500 = vpop.xlane.xlu0 %5499
        %v5501 = vmax.f32 %v5347, %v5349
        %5502 = vmax.xlane.f32.xlu0 %v5501
        %v5503 = vpop.xlane.xlu0 %5502
        %v5504 = vmax.f32 %v5353, %v5355
        %5505 = vmax.xlane.f32.xlu0 %v5504
        %v5506 = vpop.xlane.xlu0 %5505
        %v5507 = vmax.f32 %v5359, %v5361
        %5508 = vmax.xlane.f32.xlu0 %v5507
        %v5509 = vpop.xlane.xlu0 %5508
        %v5510 = vmax.f32 %v5365, %v5367
        %5511 = vmax.xlane.f32.xlu0 %v5510
        %v5512 = vpop.xlane.xlu0 %5511
        %v5513 = vmax.f32 %v5371, %v5373
        %5514 = vmax.xlane.f32.xlu0 %v5513
        %v5515 = vpop.xlane.xlu0 %5514
        %v5516 = vmax.f32 %v5377, %v5379
        %5517 = vmax.xlane.f32.xlu0 %v5516
        %v5518 = vpop.xlane.xlu0 %5517
        %v5519 = vmax.f32 %v5383, %v5385
        %5520 = vmax.xlane.f32.xlu0 %v5519
        %v5521 = vpop.xlane.xlu0 %5520
        %v5522 = vmax.f32 %v5389, %v5391
        %5523 = vmax.xlane.f32.xlu0 %v5522
        %v5524 = vpop.xlane.xlu0 %5523
        %v5525 = vmax.f32 %v5395, %v5397
        %5526 = vmax.xlane.f32.xlu0 %v5525
        %v5527 = vpop.xlane.xlu0 %5526
        %v5528 = vmax.f32 %v5401, %v5403
        %5529 = vmax.xlane.f32.xlu0 %v5528
        %v5530 = vpop.xlane.xlu0 %5529
        %v5531 = vmax.f32 %v5407, %v5409
        %5532 = vmax.xlane.f32.xlu0 %v5531
        %v5533 = vpop.xlane.xlu0 %5532
        %v5534 = vmax.f32 %v5413, %v5415
        %5535 = vmax.xlane.f32.xlu0 %v5534
        %v5536 = vpop.xlane.xlu0 %5535
        %v5537 = vmax.f32 %v5419, %v5421
        %5538 = vmax.xlane.f32.xlu0 %v5537
        %v5539 = vpop.xlane.xlu0 %5538
        %v5540 = vmax.f32 %v5425, %v5427
        %5541 = vmax.xlane.f32.xlu0 %v5540
        %v5542 = vpop.xlane.xlu0 %5541
        %v5543 = vmax.f32 %v5431, %v5433
        %5544 = vmax.xlane.f32.xlu0 %v5543
        %v5545 = vpop.xlane.xlu0 %5544
        %v5546 = vmax.f32 %v5437, %v5439
        %5547 = vmax.xlane.f32.xlu0 %v5546
        %v5548 = vpop.xlane.xlu0 %5547
        %v5549 = vmax.f32 %v5443, %v5445
        %5550 = vmax.xlane.f32.xlu0 %v5549
        %v5551 = vpop.xlane.xlu0 %5550
        %v5552 = vmax.f32 %v5449, %v5451
        %5553 = vmax.xlane.f32.xlu0 %v5552
        %v5554 = vpop.xlane.xlu0 %5553
        %v5555 = vmax.f32 %v5455, %v5457
        %5556 = vmax.xlane.f32.xlu0 %v5555
        %v5557 = vpop.xlane.xlu0 %5556
        %v5558 = vmax.f32 %v5461, %v5463
        %5559 = vmax.xlane.f32.xlu0 %v5558
        %v5560 = vpop.xlane.xlu0 %5559
        %v5561 = vsub.f32 %v5275, %v5467
        %v5562 = vsub.f32 %v5277, %v5467
        %v5563 = vsub.f32 %v5281, %v5470
        %v5564 = vsub.f32 %v5283, %v5470
        %v5565 = vsub.f32 %v5287, %v5473
        %v5566 = vsub.f32 %v5289, %v5473
        %v5567 = vsub.f32 %v5293, %v5476
        %v5568 = vsub.f32 %v5295, %v5476
        %v5569 = vsub.f32 %v5299, %v5479
        %v5570 = vsub.f32 %v5301, %v5479
        %v5571 = vsub.f32 %v5305, %v5482
        %v5572 = vsub.f32 %v5307, %v5482
        %v5573 = vsub.f32 %v5311, %v5485
        %v5574 = vsub.f32 %v5313, %v5485
        %v5575 = vsub.f32 %v5317, %v5488
        %v5576 = vsub.f32 %v5319, %v5488
        %v5577 = vsub.f32 %v5323, %v5491
        %v5578 = vsub.f32 %v5325, %v5491
        %v5579 = vsub.f32 %v5329, %v5494
        %v5580 = vsub.f32 %v5331, %v5494
        %v5581 = vsub.f32 %v5335, %v5497
        %v5582 = vsub.f32 %v5337, %v5497
        %v5583 = vsub.f32 %v5341, %v5500
        %v5584 = vsub.f32 %v5343, %v5500
        %v5585 = vsub.f32 %v5347, %v5503
        %v5586 = vsub.f32 %v5349, %v5503
        %v5587 = vsub.f32 %v5353, %v5506
        %v5588 = vsub.f32 %v5355, %v5506
        %v5589 = vsub.f32 %v5359, %v5509
        %v5590 = vsub.f32 %v5361, %v5509
        %v5591 = vsub.f32 %v5365, %v5512
        %v5592 = vsub.f32 %v5367, %v5512
        %v5593 = vsub.f32 %v5371, %v5515
        %v5594 = vsub.f32 %v5373, %v5515
        %v5595 = vsub.f32 %v5377, %v5518
        %v5596 = vsub.f32 %v5379, %v5518
        %v5597 = vsub.f32 %v5383, %v5521
        %v5598 = vsub.f32 %v5385, %v5521
        %v5599 = vsub.f32 %v5389, %v5524
        %v5600 = vsub.f32 %v5391, %v5524
        %v5601 = vsub.f32 %v5395, %v5527
        %v5602 = vsub.f32 %v5397, %v5527
        %v5603 = vsub.f32 %v5401, %v5530
        %v5604 = vsub.f32 %v5403, %v5530
        %v5605 = vsub.f32 %v5407, %v5533
        %v5606 = vsub.f32 %v5409, %v5533
        %v5607 = vsub.f32 %v5413, %v5536
        %v5608 = vsub.f32 %v5415, %v5536
        %v5609 = vsub.f32 %v5419, %v5539
        %v5610 = vsub.f32 %v5421, %v5539
        %v5611 = vsub.f32 %v5425, %v5542
        %v5612 = vsub.f32 %v5427, %v5542
        %v5613 = vsub.f32 %v5431, %v5545
        %v5614 = vsub.f32 %v5433, %v5545
        %v5615 = vsub.f32 %v5437, %v5548
        %v5616 = vsub.f32 %v5439, %v5548
        %v5617 = vsub.f32 %v5443, %v5551
        %v5618 = vsub.f32 %v5445, %v5551
        %v5619 = vsub.f32 %v5449, %v5554
        %v5620 = vsub.f32 %v5451, %v5554
        %v5621 = vsub.f32 %v5455, %v5557
        %v5622 = vsub.f32 %v5457, %v5557
        %v5623 = vsub.f32 %v5461, %v5560
        %v5624 = vsub.f32 %v5463, %v5560
        %v5625 = vmul.f32 %v5561, 1.442695
        %v5626 = vpow.pop %v5625
        %v5627 = vmul.f32 %v5562, 1.442695
        %v5628 = vpow.pop %v5627
        %v5629 = vmul.f32 %v5563, 1.442695
        %v5630 = vpow.pop %v5629
        %v5631 = vmul.f32 %v5564, 1.442695
        %v5632 = vpow.pop %v5631
        %v5633 = vmul.f32 %v5565, 1.442695
        %v5634 = vpow.pop %v5633
        %v5635 = vmul.f32 %v5566, 1.442695
        %v5636 = vpow.pop %v5635
        %v5637 = vmul.f32 %v5567, 1.442695
        %v5638 = vpow.pop %v5637
        %v5639 = vmul.f32 %v5568, 1.442695
        %v5640 = vpow.pop %v5639
        %v5641 = vmul.f32 %v5569, 1.442695
        %v5642 = vpow.pop %v5641
        %v5643 = vmul.f32 %v5570, 1.442695
        %v5644 = vpow.pop %v5643
        %v5645 = vmul.f32 %v5571, 1.442695
        %v5646 = vpow.pop %v5645
        %v5647 = vmul.f32 %v5572, 1.442695
        %v5648 = vpow.pop %v5647
        %v5649 = vmul.f32 %v5573, 1.442695
        %v5650 = vpow.pop %v5649
        %v5651 = vmul.f32 %v5574, 1.442695
        %v5652 = vpow.pop %v5651
        %v5653 = vmul.f32 %v5575, 1.442695
        %v5654 = vpow.pop %v5653
        %v5655 = vmul.f32 %v5576, 1.442695
        %v5656 = vpow.pop %v5655
        %v5657 = vmul.f32 %v5577, 1.442695
        %v5658 = vpow.pop %v5657
        %v5659 = vmul.f32 %v5578, 1.442695
        %v5660 = vpow.pop %v5659
        %v5661 = vmul.f32 %v5579, 1.442695
        %v5662 = vpow.pop %v5661
        %v5663 = vmul.f32 %v5580, 1.442695
        %v5664 = vpow.pop %v5663
        %v5665 = vmul.f32 %v5581, 1.442695
        %v5666 = vpow.pop %v5665
        %v5667 = vmul.f32 %v5582, 1.442695
        %v5668 = vpow.pop %v5667
        %v5669 = vmul.f32 %v5583, 1.442695
        %v5670 = vpow.pop %v5669
        %v5671 = vmul.f32 %v5584, 1.442695
        %v5672 = vpow.pop %v5671
        %v5673 = vmul.f32 %v5585, 1.442695
        %v5674 = vpow.pop %v5673
        %v5675 = vmul.f32 %v5586, 1.442695
        %v5676 = vpow.pop %v5675
        %v5677 = vmul.f32 %v5587, 1.442695
        %v5678 = vpow.pop %v5677
        %v5679 = vmul.f32 %v5588, 1.442695
        %v5680 = vpow.pop %v5679
        %v5681 = vmul.f32 %v5589, 1.442695
        %v5682 = vpow.pop %v5681
        %v5683 = vmul.f32 %v5590, 1.442695
        %v5684 = vpow.pop %v5683
        %v5685 = vmul.f32 %v5591, 1.442695
        %v5686 = vpow.pop %v5685
        %v5687 = vmul.f32 %v5592, 1.442695
        %v5688 = vpow.pop %v5687
        %v5689 = vmul.f32 %v5593, 1.442695
        %v5690 = vpow.pop %v5689
        %v5691 = vmul.f32 %v5594, 1.442695
        %v5692 = vpow.pop %v5691
        %v5693 = vmul.f32 %v5595, 1.442695
        %v5694 = vpow.pop %v5693
        %v5695 = vmul.f32 %v5596, 1.442695
        %v5696 = vpow.pop %v5695
        %v5697 = vmul.f32 %v5597, 1.442695
        %v5698 = vpow.pop %v5697
        %v5699 = vmul.f32 %v5598, 1.442695
        %v5700 = vpow.pop %v5699
        %v5701 = vmul.f32 %v5599, 1.442695
        %v5702 = vpow.pop %v5701
        %v5703 = vmul.f32 %v5600, 1.442695
        %v5704 = vpow.pop %v5703
        %v5705 = vmul.f32 %v5601, 1.442695
        %v5706 = vpow.pop %v5705
        %v5707 = vmul.f32 %v5602, 1.442695
        %v5708 = vpow.pop %v5707
        %v5709 = vmul.f32 %v5603, 1.442695
        %v5710 = vpow.pop %v5709
        %v5711 = vmul.f32 %v5604, 1.442695
        %v5712 = vpow.pop %v5711
        %v5713 = vmul.f32 %v5605, 1.442695
        %v5714 = vpow.pop %v5713
        %v5715 = vmul.f32 %v5606, 1.442695
        %v5716 = vpow.pop %v5715
        %v5717 = vmul.f32 %v5607, 1.442695
        %v5718 = vpow.pop %v5717
        %v5719 = vmul.f32 %v5608, 1.442695
        %v5720 = vpow.pop %v5719
        %v5721 = vmul.f32 %v5609, 1.442695
        %v5722 = vpow.pop %v5721
        %v5723 = vmul.f32 %v5610, 1.442695
        %v5724 = vpow.pop %v5723
        %v5725 = vmul.f32 %v5611, 1.442695
        %v5726 = vpow.pop %v5725
        %v5727 = vmul.f32 %v5612, 1.442695
        %v5728 = vpow.pop %v5727
        %v5729 = vmul.f32 %v5613, 1.442695
        %v5730 = vpow.pop %v5729
        %v5731 = vmul.f32 %v5614, 1.442695
        %v5732 = vpow.pop %v5731
        %v5733 = vmul.f32 %v5615, 1.442695
        %v5734 = vpow.pop %v5733
        %v5735 = vmul.f32 %v5616, 1.442695
        %v5736 = vpow.pop %v5735
        %v5737 = vmul.f32 %v5617, 1.442695
        %v5738 = vpow.pop %v5737
        %v5739 = vmul.f32 %v5618, 1.442695
        %v5740 = vpow.pop %v5739
        %v5741 = vmul.f32 %v5619, 1.442695
        %v5742 = vpow.pop %v5741
        %v5743 = vmul.f32 %v5620, 1.442695
        %v5744 = vpow.pop %v5743
        %v5745 = vmul.f32 %v5621, 1.442695
        %v5746 = vpow.pop %v5745
        %v5747 = vmul.f32 %v5622, 1.442695
        %v5748 = vpow.pop %v5747
        %v5749 = vmul.f32 %v5623, 1.442695
        %v5750 = vpow.pop %v5749
        %v5751 = vmul.f32 %v5624, 1.442695
        %v5752 = vpow.pop %v5751
        %v5753 = vadd.f32 %v5626, %v5628
        %5754 = vadd.xlane.f32.xlu0 %v5753
        %v5755 = vpop.xlane.xlu0 %5754
        %v5756 = vadd.f32 %v5630, %v5632
        %5757 = vadd.xlane.f32.xlu0 %v5756
        %v5758 = vpop.xlane.xlu0 %5757
        %v5759 = vadd.f32 %v5634, %v5636
        %5760 = vadd.xlane.f32.xlu0 %v5759
        %v5761 = vpop.xlane.xlu0 %5760
        %v5762 = vadd.f32 %v5638, %v5640
        %5763 = vadd.xlane.f32.xlu0 %v5762
        %v5764 = vpop.xlane.xlu0 %5763
        %v5765 = vadd.f32 %v5642, %v5644
        %5766 = vadd.xlane.f32.xlu0 %v5765
        %v5767 = vpop.xlane.xlu0 %5766
        %v5768 = vadd.f32 %v5646, %v5648
        %5769 = vadd.xlane.f32.xlu0 %v5768
        %v5770 = vpop.xlane.xlu0 %5769
        %v5771 = vadd.f32 %v5650, %v5652
        %5772 = vadd.xlane.f32.xlu0 %v5771
        %v5773 = vpop.xlane.xlu0 %5772
        %v5774 = vadd.f32 %v5654, %v5656
        %5775 = vadd.xlane.f32.xlu0 %v5774
        %v5776 = vpop.xlane.xlu0 %5775
        %v5777 = vadd.f32 %v5658, %v5660
        %5778 = vadd.xlane.f32.xlu0 %v5777
        %v5779 = vpop.xlane.xlu0 %5778
        %v5780 = vadd.f32 %v5662, %v5664
        %5781 = vadd.xlane.f32.xlu0 %v5780
        %v5782 = vpop.xlane.xlu0 %5781
        %v5783 = vadd.f32 %v5666, %v5668
        %5784 = vadd.xlane.f32.xlu0 %v5783
        %v5785 = vpop.xlane.xlu0 %5784
        %v5786 = vadd.f32 %v5670, %v5672
        %5787 = vadd.xlane.f32.xlu0 %v5786
        %v5788 = vpop.xlane.xlu0 %5787
        %v5789 = vadd.f32 %v5674, %v5676
        %5790 = vadd.xlane.f32.xlu0 %v5789
        %v5791 = vpop.xlane.xlu0 %5790
        %v5792 = vadd.f32 %v5678, %v5680
        %5793 = vadd.xlane.f32.xlu0 %v5792
        %v5794 = vpop.xlane.xlu0 %5793
        %v5795 = vadd.f32 %v5682, %v5684
        %5796 = vadd.xlane.f32.xlu0 %v5795
        %v5797 = vpop.xlane.xlu0 %5796
        %v5798 = vadd.f32 %v5686, %v5688
        %5799 = vadd.xlane.f32.xlu0 %v5798
        %v5800 = vpop.xlane.xlu0 %5799
        %v5801 = vadd.f32 %v5690, %v5692
        %5802 = vadd.xlane.f32.xlu0 %v5801
        %v5803 = vpop.xlane.xlu0 %5802
        %v5804 = vadd.f32 %v5694, %v5696
        %5805 = vadd.xlane.f32.xlu0 %v5804
        %v5806 = vpop.xlane.xlu0 %5805
        %v5807 = vadd.f32 %v5698, %v5700
        %5808 = vadd.xlane.f32.xlu0 %v5807
        %v5809 = vpop.xlane.xlu0 %5808
        %v5810 = vadd.f32 %v5702, %v5704
        %5811 = vadd.xlane.f32.xlu0 %v5810
        %v5812 = vpop.xlane.xlu0 %5811
        %v5813 = vadd.f32 %v5706, %v5708
        %5814 = vadd.xlane.f32.xlu0 %v5813
        %v5815 = vpop.xlane.xlu0 %5814
        %v5816 = vadd.f32 %v5710, %v5712
        %5817 = vadd.xlane.f32.xlu0 %v5816
        %v5818 = vpop.xlane.xlu0 %5817
        %v5819 = vadd.f32 %v5714, %v5716
        %5820 = vadd.xlane.f32.xlu0 %v5819
        %v5821 = vpop.xlane.xlu0 %5820
        %v5822 = vadd.f32 %v5718, %v5720
        %5823 = vadd.xlane.f32.xlu0 %v5822
        %v5824 = vpop.xlane.xlu0 %5823
        %v5825 = vadd.f32 %v5722, %v5724
        %5826 = vadd.xlane.f32.xlu0 %v5825
        %v5827 = vpop.xlane.xlu0 %5826
        %v5828 = vadd.f32 %v5726, %v5728
        %5829 = vadd.xlane.f32.xlu0 %v5828
        %v5830 = vpop.xlane.xlu0 %5829
        %v5831 = vadd.f32 %v5730, %v5732
        %5832 = vadd.xlane.f32.xlu0 %v5831
        %v5833 = vpop.xlane.xlu0 %5832
        %v5834 = vadd.f32 %v5734, %v5736
        %5835 = vadd.xlane.f32.xlu0 %v5834
        %v5836 = vpop.xlane.xlu0 %5835
        %v5837 = vadd.f32 %v5738, %v5740
        %5838 = vadd.xlane.f32.xlu0 %v5837
        %v5839 = vpop.xlane.xlu0 %5838
        %v5840 = vadd.f32 %v5742, %v5744
        %5841 = vadd.xlane.f32.xlu0 %v5840
        %v5842 = vpop.xlane.xlu0 %5841
        %v5843 = vadd.f32 %v5746, %v5748
        %5844 = vadd.xlane.f32.xlu0 %v5843
        %v5845 = vpop.xlane.xlu0 %5844
        %v5846 = vadd.f32 %v5750, %v5752
        %5847 = vadd.xlane.f32.xlu0 %v5846
        %v5848 = vpop.xlane.xlu0 %5847
        %v5849 = vrcp.pop %v5755
        %v5850 = vrcp.pop %v5758
        %v5851 = vrcp.pop %v5761
        %v5852 = vrcp.pop %v5764
        %v5853 = vrcp.pop %v5767
        %v5854 = vrcp.pop %v5770
        %v5855 = vrcp.pop %v5773
        %v5856 = vrcp.pop %v5776
        %v5857 = vrcp.pop %v5779
        %v5858 = vrcp.pop %v5782
        %v5859 = vrcp.pop %v5785
        %v5860 = vrcp.pop %v5788
        %v5861 = vrcp.pop %v5791
        %v5862 = vrcp.pop %v5794
        %v5863 = vrcp.pop %v5797
        %v5864 = vrcp.pop %v5800
        %v5865 = vrcp.pop %v5803
        %v5866 = vrcp.pop %v5806
        %v5867 = vrcp.pop %v5809
        %v5868 = vrcp.pop %v5812
        %v5869 = vrcp.pop %v5815
        %v5870 = vrcp.pop %v5818
        %v5871 = vrcp.pop %v5821
        %v5872 = vrcp.pop %v5824
        %v5873 = vrcp.pop %v5827
        %v5874 = vrcp.pop %v5830
        %v5875 = vrcp.pop %v5833
        %v5876 = vrcp.pop %v5836
        %v5877 = vrcp.pop %v5839
        %v5878 = vrcp.pop %v5842
        %v5879 = vrcp.pop %v5845
        %v5880 = vrcp.pop %v5848
        %v5881 = vmul.f32 %v5755, %v5849
        %v5882 = vmul.f32 %v5758, %v5850
        %v5883 = vmul.f32 %v5761, %v5851
        %v5884 = vmul.f32 %v5764, %v5852
        %v5885 = vmul.f32 %v5767, %v5853
        %v5886 = vmul.f32 %v5770, %v5854
        %v5887 = vmul.f32 %v5773, %v5855
        %v5888 = vmul.f32 %v5776, %v5856
        %v5889 = vmul.f32 %v5779, %v5857
        %v5890 = vmul.f32 %v5782, %v5858
        %v5891 = vmul.f32 %v5785, %v5859
        %v5892 = vmul.f32 %v5788, %v5860
        %v5893 = vmul.f32 %v5791, %v5861
        %v5894 = vmul.f32 %v5794, %v5862
        %v5895 = vmul.f32 %v5797, %v5863
        %v5896 = vmul.f32 %v5800, %v5864
        %v5897 = vmul.f32 %v5803, %v5865
        %v5898 = vmul.f32 %v5806, %v5866
        %v5899 = vmul.f32 %v5809, %v5867
        %v5900 = vmul.f32 %v5812, %v5868
        %v5901 = vmul.f32 %v5815, %v5869
        %v5902 = vmul.f32 %v5818, %v5870
        %v5903 = vmul.f32 %v5821, %v5871
        %v5904 = vmul.f32 %v5824, %v5872
        %v5905 = vmul.f32 %v5827, %v5873
        %v5906 = vmul.f32 %v5830, %v5874
        %v5907 = vmul.f32 %v5833, %v5875
        %v5908 = vmul.f32 %v5836, %v5876
        %v5909 = vmul.f32 %v5839, %v5877
        %v5910 = vmul.f32 %v5842, %v5878
        %v5911 = vmul.f32 %v5845, %v5879
        %v5912 = vmul.f32 %v5848, %v5880
        %v5913 = vsub.f32 2.0, %v5881
        %v5914 = vsub.f32 2.0, %v5882
        %v5915 = vsub.f32 2.0, %v5883
        %v5916 = vsub.f32 2.0, %v5884
        %v5917 = vsub.f32 2.0, %v5885
        %v5918 = vsub.f32 2.0, %v5886
        %v5919 = vsub.f32 2.0, %v5887
        %v5920 = vsub.f32 2.0, %v5888
        %v5921 = vsub.f32 2.0, %v5889
        %v5922 = vsub.f32 2.0, %v5890
        %v5923 = vsub.f32 2.0, %v5891
        %v5924 = vsub.f32 2.0, %v5892
        %v5925 = vsub.f32 2.0, %v5893
        %v5926 = vsub.f32 2.0, %v5894
        %v5927 = vsub.f32 2.0, %v5895
        %v5928 = vsub.f32 2.0, %v5896
        %v5929 = vsub.f32 2.0, %v5897
        %v5930 = vsub.f32 2.0, %v5898
        %v5931 = vsub.f32 2.0, %v5899
        %v5932 = vsub.f32 2.0, %v5900
        %v5933 = vsub.f32 2.0, %v5901
        %v5934 = vsub.f32 2.0, %v5902
        %v5935 = vsub.f32 2.0, %v5903
        %v5936 = vsub.f32 2.0, %v5904
        %v5937 = vsub.f32 2.0, %v5905
        %v5938 = vsub.f32 2.0, %v5906
        %v5939 = vsub.f32 2.0, %v5907
        %v5940 = vsub.f32 2.0, %v5908
        %v5941 = vsub.f32 2.0, %v5909
        %v5942 = vsub.f32 2.0, %v5910
        %v5943 = vsub.f32 2.0, %v5911
        %v5944 = vsub.f32 2.0, %v5912
        %v5945 = vmul.f32 %v5849, %v5913
        %v5946 = vmul.f32 %v5850, %v5914
        %v5947 = vmul.f32 %v5851, %v5915
        %v5948 = vmul.f32 %v5852, %v5916
        %v5949 = vmul.f32 %v5853, %v5917
        %v5950 = vmul.f32 %v5854, %v5918
        %v5951 = vmul.f32 %v5855, %v5919
        %v5952 = vmul.f32 %v5856, %v5920
        %v5953 = vmul.f32 %v5857, %v5921
        %v5954 = vmul.f32 %v5858, %v5922
        %v5955 = vmul.f32 %v5859, %v5923
        %v5956 = vmul.f32 %v5860, %v5924
        %v5957 = vmul.f32 %v5861, %v5925
        %v5958 = vmul.f32 %v5862, %v5926
        %v5959 = vmul.f32 %v5863, %v5927
        %v5960 = vmul.f32 %v5864, %v5928
        %v5961 = vmul.f32 %v5865, %v5929
        %v5962 = vmul.f32 %v5866, %v5930
        %v5963 = vmul.f32 %v5867, %v5931
        %v5964 = vmul.f32 %v5868, %v5932
        %v5965 = vmul.f32 %v5869, %v5933
        %v5966 = vmul.f32 %v5870, %v5934
        %v5967 = vmul.f32 %v5871, %v5935
        %v5968 = vmul.f32 %v5872, %v5936
        %v5969 = vmul.f32 %v5873, %v5937
        %v5970 = vmul.f32 %v5874, %v5938
        %v5971 = vmul.f32 %v5875, %v5939
        %v5972 = vmul.f32 %v5876, %v5940
        %v5973 = vmul.f32 %v5877, %v5941
        %v5974 = vmul.f32 %v5878, %v5942
        %v5975 = vmul.f32 %v5879, %v5943
        %v5976 = vmul.f32 %v5880, %v5944
        %5977 = vmatprep.subr.mxu0 0.0
        %5978 = vmatpush1.xpose.msra.mxu0 0.0
        %5979 = vmatprep.subr.mxu0 0.0
        %5980 = vmatpush1.xpose.msra.mxu0 0.0
        %5981 = vmatprep.subr.mxu0 0.0
        %5982 = vmatpush1.xpose.msra.mxu0 0.0
        %5983 = vmatprep.subr.mxu0 0.0
        %5984 = vmatpush1.xpose.msra.mxu0 0.0
        %5985 = vmatprep.subr.mxu0 0.0
        %5986 = vmatpush1.xpose.msra.mxu0 0.0
        %5987 = vmatprep.subr.mxu0 0.0
        %5988 = vmatpush1.xpose.msra.mxu0 0.0
        %5989 = vmatprep.subr.mxu0 0.0
        %5990 = vmatpush1.xpose.msra.mxu0 0.0
        %5991 = vmatprep.subr.mxu0 0.0
        %5992 = vmatpush1.xpose.msra.mxu0 0.0
        %5993 = vmatprep.subr.mxu0 0.0
        %5994 = vmatpush1.xpose.msra.mxu0 0.0
        %5995 = vmatprep.subr.mxu0 0.0
        %5996 = vmatpush1.xpose.msra.mxu0 0.0
        %5997 = vmatprep.subr.mxu0 0.0
        %5998 = vmatpush1.xpose.msra.mxu0 0.0
        %5999 = vmatprep.subr.mxu0 0.0
        %6000 = vmatpush1.xpose.msra.mxu0 0.0
        %6001 = vmatprep.subr.mxu0 0.0
        %6002 = vmatpush1.xpose.msra.mxu0 0.0
        %6003 = vmatprep.subr.mxu0 0.0
        %6004 = vmatpush1.xpose.msra.mxu0 0.0
        %6005 = vmatprep.subr.mxu0 0.0
        %6006 = vmatpush1.xpose.msra.mxu0 0.0
        %6007 = vmatprep.subr.mxu0 %v492
        %6008 = vmatpush1.xpose.msra.mxu0 %v490
        %6009 = vmatprep.subr.mxu0 0.0
        %6010 = vmatpush2.xpose.msra.mxu0 0.0
        %6011 = vmatprep.subr.mxu0 0.0
        %6012 = vmatpush2.xpose.msra.mxu0 0.0
        %6013 = vmatprep.subr.mxu0 0.0
        %6014 = vmatpush2.xpose.msra.mxu0 0.0
        %6015 = vmatprep.subr.mxu0 0.0
        %6016 = vmatpush2.xpose.msra.mxu0 0.0
        %6017 = vmatprep.subr.mxu0 0.0
        %6018 = vmatpush2.xpose.msra.mxu0 0.0
        %6019 = vmatprep.subr.mxu0 0.0
        %6020 = vmatpush2.xpose.msra.mxu0 0.0
        %6021 = vmatprep.subr.mxu0 0.0
        %6022 = vmatpush2.xpose.msra.mxu0 0.0
        %6023 = vmatprep.subr.mxu0 0.0
        %6024 = vmatpush2.xpose.msra.mxu0 0.0
        %6025 = vmatprep.subr.mxu0 0.0
        %6026 = vmatpush2.xpose.msra.mxu0 0.0
        %6027 = vmatprep.subr.mxu0 0.0
        %6028 = vmatpush2.xpose.msra.mxu0 0.0
        %6029 = vmatprep.subr.mxu0 0.0
        %6030 = vmatpush2.xpose.msra.mxu0 0.0
        %6031 = vmatprep.subr.mxu0 0.0
        %6032 = vmatpush2.xpose.msra.mxu0 0.0
        %6033 = vmatprep.subr.mxu0 0.0
        %6034 = vmatpush2.xpose.msra.mxu0 0.0
        %6035 = vmatprep.subr.mxu0 0.0
        %6036 = vmatpush2.xpose.msra.mxu0 0.0
        %6037 = vmatprep.subr.mxu0 0.0
        %6038 = vmatpush2.xpose.msra.mxu0 0.0
        %6039 = vmatprep.subr.mxu0 0.0
        %6040 = vmatpush2.xpose.msra.mxu0 0.0
        %6041 = vmatprep.mubr.f32.mxu0 %v5628
        %6042 = vmatmul.mubr.f32.gmra.mxu0 %v5626
        %v6043 = vpop.f32.mrf.mxu0
        %v6044 = vadd.f32 0.0, %v6043
        %v6045 = vpop.f32.mrf.mxu0
        %6046 = vmatprep.mubr.f32.mxu0 %v5632
        %6047 = vmatmul.mubr.f32.gmra.mxu0 %v5630
        %v6048 = vpop.f32.mrf.mxu0
        %v6049 = vadd.f32 0.0, %v6048
        %v6050 = vpop.f32.mrf.mxu0
        %6051 = vmatprep.mubr.f32.mxu0 %v5636
        %6052 = vmatmul.mubr.f32.gmra.mxu0 %v5634
        %v6053 = vpop.f32.mrf.mxu0
        %v6054 = vadd.f32 0.0, %v6053
        %v6055 = vpop.f32.mrf.mxu0
        %6056 = vmatprep.mubr.f32.mxu0 %v5640
        %6057 = vmatmul.mubr.f32.gmra.mxu0 %v5638
        %v6058 = vpop.f32.mrf.mxu0
        %v6059 = vadd.f32 0.0, %v6058
        %v6060 = vpop.f32.mrf.mxu0
        %6061 = vmatprep.mubr.f32.mxu0 %v5644
        %6062 = vmatmul.mubr.f32.gmra.mxu0 %v5642
        %v6063 = vpop.f32.mrf.mxu0
        %v6064 = vadd.f32 0.0, %v6063
        %v6065 = vpop.f32.mrf.mxu0
        %6066 = vmatprep.mubr.f32.mxu0 %v5648
        %6067 = vmatmul.mubr.f32.gmra.mxu0 %v5646
        %v6068 = vpop.f32.mrf.mxu0
        %v6069 = vadd.f32 0.0, %v6068
        %v6070 = vpop.f32.mrf.mxu0
        %6071 = vmatprep.mubr.f32.mxu0 %v5652
        %6072 = vmatmul.mubr.f32.gmra.mxu0 %v5650
        %v6073 = vpop.f32.mrf.mxu0
        %v6074 = vadd.f32 0.0, %v6073
        %v6075 = vpop.f32.mrf.mxu0
        %6076 = vmatprep.mubr.f32.mxu0 %v5656
        %6077 = vmatmul.mubr.f32.gmra.mxu0 %v5654
        %v6078 = vpop.f32.mrf.mxu0
        %v6079 = vadd.f32 0.0, %v6078
        %v6080 = vpop.f32.mrf.mxu0
        %6081 = vmatprep.mubr.f32.mxu0 %v5660
        %6082 = vmatmul.mubr.f32.gmra.mxu0 %v5658
        %v6083 = vpop.f32.mrf.mxu0
        %v6084 = vadd.f32 0.0, %v6083
        %v6085 = vpop.f32.mrf.mxu0
        %6086 = vmatprep.mubr.f32.mxu0 %v5664
        %6087 = vmatmul.mubr.f32.gmra.mxu0 %v5662
        %v6088 = vpop.f32.mrf.mxu0
        %v6089 = vadd.f32 0.0, %v6088
        %v6090 = vpop.f32.mrf.mxu0
        %6091 = vmatprep.mubr.f32.mxu0 %v5668
        %6092 = vmatmul.mubr.f32.gmra.mxu0 %v5666
        %v6093 = vpop.f32.mrf.mxu0
        %v6094 = vadd.f32 0.0, %v6093
        %v6095 = vpop.f32.mrf.mxu0
        %6096 = vmatprep.mubr.f32.mxu0 %v5672
        %6097 = vmatmul.mubr.f32.gmra.mxu0 %v5670
        %v6098 = vpop.f32.mrf.mxu0
        %v6099 = vadd.f32 0.0, %v6098
        %v6100 = vpop.f32.mrf.mxu0
        %6101 = vmatprep.mubr.f32.mxu0 %v5676
        %6102 = vmatmul.mubr.f32.gmra.mxu0 %v5674
        %v6103 = vpop.f32.mrf.mxu0
        %v6104 = vadd.f32 0.0, %v6103
        %v6105 = vpop.f32.mrf.mxu0
        %6106 = vmatprep.mubr.f32.mxu0 %v5680
        %6107 = vmatmul.mubr.f32.gmra.mxu0 %v5678
        %v6108 = vpop.f32.mrf.mxu0
        %v6109 = vadd.f32 0.0, %v6108
        %v6110 = vpop.f32.mrf.mxu0
        %6111 = vmatprep.mubr.f32.mxu0 %v5684
        %6112 = vmatmul.mubr.f32.gmra.mxu0 %v5682
        %v6113 = vpop.f32.mrf.mxu0
        %v6114 = vadd.f32 0.0, %v6113
        %v6115 = vpop.f32.mrf.mxu0
        %6116 = vmatprep.mubr.f32.mxu0 %v5688
        %6117 = vmatmul.mubr.f32.gmra.mxu0 %v5686
        %v6118 = vpop.f32.mrf.mxu0
        %v6119 = vadd.f32 0.0, %v6118
        %v6120 = vpop.f32.mrf.mxu0
        %6121 = vmatprep.mubr.f32.mxu0 %v5692
        %6122 = vmatmul.mubr.f32.gmra.mxu0 %v5690
        %v6123 = vpop.f32.mrf.mxu0
        %v6124 = vadd.f32 0.0, %v6123
        %v6125 = vpop.f32.mrf.mxu0
        %6126 = vmatprep.mubr.f32.mxu0 %v5696
        %6127 = vmatmul.mubr.f32.gmra.mxu0 %v5694
        %v6128 = vpop.f32.mrf.mxu0
        %v6129 = vadd.f32 0.0, %v6128
        %v6130 = vpop.f32.mrf.mxu0
        %6131 = vmatprep.mubr.f32.mxu0 %v5700
        %6132 = vmatmul.mubr.f32.gmra.mxu0 %v5698
        %v6133 = vpop.f32.mrf.mxu0
        %v6134 = vadd.f32 0.0, %v6133
        %v6135 = vpop.f32.mrf.mxu0
        %6136 = vmatprep.mubr.f32.mxu0 %v5704
        %6137 = vmatmul.mubr.f32.gmra.mxu0 %v5702
        %v6138 = vpop.f32.mrf.mxu0
        %v6139 = vadd.f32 0.0, %v6138
        %v6140 = vpop.f32.mrf.mxu0
        %6141 = vmatprep.mubr.f32.mxu0 %v5708
        %6142 = vmatmul.mubr.f32.gmra.mxu0 %v5706
        %v6143 = vpop.f32.mrf.mxu0
        %v6144 = vadd.f32 0.0, %v6143
        %v6145 = vpop.f32.mrf.mxu0
        %6146 = vmatprep.mubr.f32.mxu0 %v5712
        %6147 = vmatmul.mubr.f32.gmra.mxu0 %v5710
        %v6148 = vpop.f32.mrf.mxu0
        %v6149 = vadd.f32 0.0, %v6148
        %v6150 = vpop.f32.mrf.mxu0
        %6151 = vmatprep.mubr.f32.mxu0 %v5716
        %6152 = vmatmul.mubr.f32.gmra.mxu0 %v5714
        %v6153 = vpop.f32.mrf.mxu0
        %v6154 = vadd.f32 0.0, %v6153
        %v6155 = vpop.f32.mrf.mxu0
        %6156 = vmatprep.mubr.f32.mxu0 %v5720
        %6157 = vmatmul.mubr.f32.gmra.mxu0 %v5718
        %v6158 = vpop.f32.mrf.mxu0
        %v6159 = vadd.f32 0.0, %v6158
        %v6160 = vpop.f32.mrf.mxu0
        %6161 = vmatprep.mubr.f32.mxu0 %v5724
        %6162 = vmatmul.mubr.f32.gmra.mxu0 %v5722
        %v6163 = vpop.f32.mrf.mxu0
        %v6164 = vadd.f32 0.0, %v6163
        %v6165 = vpop.f32.mrf.mxu0
        %6166 = vmatprep.mubr.f32.mxu0 %v5728
        %6167 = vmatmul.mubr.f32.gmra.mxu0 %v5726
        %v6168 = vpop.f32.mrf.mxu0
        %v6169 = vadd.f32 0.0, %v6168
        %v6170 = vpop.f32.mrf.mxu0
        %6171 = vmatprep.mubr.f32.mxu0 %v5732
        %6172 = vmatmul.mubr.f32.gmra.mxu0 %v5730
        %v6173 = vpop.f32.mrf.mxu0
        %v6174 = vadd.f32 0.0, %v6173
        %v6175 = vpop.f32.mrf.mxu0
        %6176 = vmatprep.mubr.f32.mxu0 %v5736
        %6177 = vmatmul.mubr.f32.gmra.mxu0 %v5734
        %v6178 = vpop.f32.mrf.mxu0
        %v6179 = vadd.f32 0.0, %v6178
        %v6180 = vpop.f32.mrf.mxu0
        %6181 = vmatprep.mubr.f32.mxu0 %v5740
        %6182 = vmatmul.mubr.f32.gmra.mxu0 %v5738
        %v6183 = vpop.f32.mrf.mxu0
        %v6184 = vadd.f32 0.0, %v6183
        %v6185 = vpop.f32.mrf.mxu0
        %6186 = vmatprep.mubr.f32.mxu0 %v5744
        %6187 = vmatmul.mubr.f32.gmra.mxu0 %v5742
        %v6188 = vpop.f32.mrf.mxu0
        %v6189 = vadd.f32 0.0, %v6188
        %v6190 = vpop.f32.mrf.mxu0
        %6191 = vmatprep.mubr.f32.mxu0 %v5748
        %6192 = vmatmul.mubr.f32.gmra.mxu0 %v5746
        %v6193 = vpop.f32.mrf.mxu0
        %v6194 = vadd.f32 0.0, %v6193
        %v6195 = vpop.f32.mrf.mxu0
        %6196 = vmatprep.mubr.f32.mxu0 %v5752
        %6197 = vmatmul.mubr.f32.gmra.mxu0 %v5750
        %v6198 = vpop.f32.mrf.mxu0
        %v6199 = vadd.f32 0.0, %v6198
        %v6200 = vpop.f32.mrf.mxu0
        %6201 = vdwg.mxu0
        %v6202 = vmul.f32 %v6044, %v5945
        %v6203 = vmul.f32 %v6049, %v5946
        %v6204 = vmul.f32 %v6054, %v5947
        %v6205 = vmul.f32 %v6059, %v5948
        %v6206 = vmul.f32 %v6064, %v5949
        %v6207 = vmul.f32 %v6069, %v5950
        %v6208 = vmul.f32 %v6074, %v5951
        %v6209 = vmul.f32 %v6079, %v5952
        %v6210 = vmul.f32 %v6084, %v5953
        %v6211 = vmul.f32 %v6089, %v5954
        %v6212 = vmul.f32 %v6094, %v5955
        %v6213 = vmul.f32 %v6099, %v5956
        %v6214 = vmul.f32 %v6104, %v5957
        %v6215 = vmul.f32 %v6109, %v5958
        %v6216 = vmul.f32 %v6114, %v5959
        %v6217 = vmul.f32 %v6119, %v5960
        %v6218 = vmul.f32 %v6124, %v5961
        %v6219 = vmul.f32 %v6129, %v5962
        %v6220 = vmul.f32 %v6134, %v5963
        %v6221 = vmul.f32 %v6139, %v5964
        %v6222 = vmul.f32 %v6144, %v5965
        %v6223 = vmul.f32 %v6149, %v5966
        %v6224 = vmul.f32 %v6154, %v5967
        %v6225 = vmul.f32 %v6159, %v5968
        %v6226 = vmul.f32 %v6164, %v5969
        %v6227 = vmul.f32 %v6169, %v5970
        %v6228 = vmul.f32 %v6174, %v5971
        %v6229 = vmul.f32 %v6179, %v5972
        %v6230 = vmul.f32 %v6184, %v5973
        %v6231 = vmul.f32 %v6189, %v5974
        %v6232 = vmul.f32 %v6194, %v5975
        %v6233 = vmul.f32 %v6199, %v5976
        %v6235 = vsel %vm558, %v6202, 0
        %v6238 = vsel %vm558, %v6203, 0
        %v6241 = vsel %vm558, %v6204, 0
        %v6244 = vsel %vm558, %v6205, 0
        %v6247 = vsel %vm558, %v6206, 0
        %v6250 = vsel %vm558, %v6207, 0
        %v6253 = vsel %vm558, %v6208, 0
        %v6256 = vsel %vm558, %v6209, 0
        %v6259 = vsel %vm558, %v6210, 0
        %v6262 = vsel %vm558, %v6211, 0
        %v6265 = vsel %vm558, %v6212, 0
        %v6268 = vsel %vm558, %v6213, 0
        %v6271 = vsel %vm558, %v6214, 0
        %v6274 = vsel %vm558, %v6215, 0
        %v6277 = vsel %vm558, %v6216, 0
        %v6280 = vsel %vm558, %v6217, 0
        %v6283 = vsel %vm558, %v6218, 0
        %v6286 = vsel %vm558, %v6219, 0
        %v6289 = vsel %vm558, %v6220, 0
        %v6292 = vsel %vm558, %v6221, 0
        %v6295 = vsel %vm558, %v6222, 0
        %v6298 = vsel %vm558, %v6223, 0
        %v6301 = vsel %vm558, %v6224, 0
        %v6304 = vsel %vm558, %v6225, 0
        %v6307 = vsel %vm558, %v6226, 0
        %v6310 = vsel %vm558, %v6227, 0
        %v6313 = vsel %vm558, %v6228, 0
        %v6316 = vsel %vm558, %v6229, 0
        %v6319 = vsel %vm558, %v6230, 0
        %v6322 = vsel %vm558, %v6231, 0
        %v6325 = vsel %vm558, %v6232, 0
        %v6328 = vsel %vm558, %v6233, 0
        %6330 = vmatprep.subr.mxu0 0.0
        %6331 = vmatpush1.msra.mxu0 0.0
        %6332 = vmatprep.subr.mxu0 0.0
        %6333 = vmatpush1.msra.mxu0 0.0
        %6334 = vmatprep.subr.mxu0 0.0
        %6335 = vmatpush1.msra.mxu0 0.0
        %6336 = vmatprep.subr.mxu0 0.0
        %6337 = vmatpush1.msra.mxu0 0.0
        %6338 = vmatprep.subr.mxu0 0.0
        %6339 = vmatpush1.msra.mxu0 0.0
        %6340 = vmatprep.subr.mxu0 0.0
        %6341 = vmatpush1.msra.mxu0 0.0
        %6342 = vmatprep.subr.mxu0 0.0
        %6343 = vmatpush1.msra.mxu0 0.0
        %6344 = vmatprep.subr.mxu0 0.0
        %6345 = vmatpush1.msra.mxu0 0.0
        %6346 = vmatprep.subr.mxu0 0.0
        %6347 = vmatpush1.msra.mxu0 0.0
        %6348 = vmatprep.subr.mxu0 0.0
        %6349 = vmatpush1.msra.mxu0 0.0
        %6350 = vmatprep.subr.mxu0 0.0
        %6351 = vmatpush1.msra.mxu0 0.0
        %6352 = vmatprep.subr.mxu0 0.0
        %6353 = vmatpush1.msra.mxu0 0.0
        %6354 = vmatprep.subr.mxu0 0.0
        %6355 = vmatpush1.msra.mxu0 0.0
        %6356 = vmatprep.subr.mxu0 0.0
        %6357 = vmatpush1.msra.mxu0 0.0
        %6358 = vmatprep.subr.mxu0 0.0
        %6359 = vmatpush1.msra.mxu0 0.0
        %6360 = vmatprep.subr.mxu0 0.0
        %6361 = vmatpush1.msra.mxu0 %v250
        %6362 = vmatprep.subr.mxu0 0.0
        %6363 = vmatpush2.msra.mxu0 0.0
        %6364 = vmatprep.subr.mxu0 0.0
        %6365 = vmatpush2.msra.mxu0 0.0
        %6366 = vmatprep.subr.mxu0 0.0
        %6367 = vmatpush2.msra.mxu0 0.0
        %6368 = vmatprep.subr.mxu0 0.0
        %6369 = vmatpush2.msra.mxu0 0.0
        %6370 = vmatprep.subr.mxu0 0.0
        %6371 = vmatpush2.msra.mxu0 0.0
        %6372 = vmatprep.subr.mxu0 0.0
        %6373 = vmatpush2.msra.mxu0 0.0
        %6374 = vmatprep.subr.mxu0 0.0
        %6375 = vmatpush2.msra.mxu0 0.0
        %6376 = vmatprep.subr.mxu0 0.0
        %6377 = vmatpush2.msra.mxu0 0.0
        %6378 = vmatprep.subr.mxu0 0.0
        %6379 = vmatpush2.msra.mxu0 0.0
        %6380 = vmatprep.subr.mxu0 0.0
        %6381 = vmatpush2.msra.mxu0 0.0
        %6382 = vmatprep.subr.mxu0 0.0
        %6383 = vmatpush2.msra.mxu0 0.0
        %6384 = vmatprep.subr.mxu0 0.0
        %6385 = vmatpush2.msra.mxu0 0.0
        %6386 = vmatprep.subr.mxu0 0.0
        %6387 = vmatpush2.msra.mxu0 0.0
        %6388 = vmatprep.subr.mxu0 0.0
        %6389 = vmatpush2.msra.mxu0 0.0
        %6390 = vmatprep.subr.mxu0 0.0
        %6391 = vmatpush2.msra.mxu0 0.0
        %6392 = vmatprep.subr.mxu0 0.0
        %6393 = vmatpush2.msra.mxu0 0.0
        %6394 = vmatprep.mubr.f32.mxu0 0.0
        %6395 = vmatmul.mubr.f32.gmra.mxu0 %v6235
        %v6396 = vpop.f32.mrf.mxu0
        %v6397 = vadd.f32 0.0, %v6396
        %v6398 = vpop.f32.mrf.mxu0
        %6399 = vmatprep.mubr.f32.mxu0 0.0
        %6400 = vmatmul.mubr.f32.gmra.mxu0 %v6238
        %v6401 = vpop.f32.mrf.mxu0
        %v6402 = vadd.f32 0.0, %v6401
        %v6403 = vpop.f32.mrf.mxu0
        %6404 = vmatprep.mubr.f32.mxu0 0.0
        %6405 = vmatmul.mubr.f32.gmra.mxu0 %v6241
        %v6406 = vpop.f32.mrf.mxu0
        %v6407 = vadd.f32 0.0, %v6406
        %v6408 = vpop.f32.mrf.mxu0
        %6409 = vmatprep.mubr.f32.mxu0 0.0
        %6410 = vmatmul.mubr.f32.gmra.mxu0 %v6244
        %v6411 = vpop.f32.mrf.mxu0
        %v6412 = vadd.f32 0.0, %v6411
        %v6413 = vpop.f32.mrf.mxu0
        %6414 = vmatprep.mubr.f32.mxu0 0.0
        %6415 = vmatmul.mubr.f32.gmra.mxu0 %v6247
        %v6416 = vpop.f32.mrf.mxu0
        %v6417 = vadd.f32 0.0, %v6416
        %v6418 = vpop.f32.mrf.mxu0
        %6419 = vmatprep.mubr.f32.mxu0 0.0
        %6420 = vmatmul.mubr.f32.gmra.mxu0 %v6250
        %v6421 = vpop.f32.mrf.mxu0
        %v6422 = vadd.f32 0.0, %v6421
        %v6423 = vpop.f32.mrf.mxu0
        %6424 = vmatprep.mubr.f32.mxu0 0.0
        %6425 = vmatmul.mubr.f32.gmra.mxu0 %v6253
        %v6426 = vpop.f32.mrf.mxu0
        %v6427 = vadd.f32 0.0, %v6426
        %v6428 = vpop.f32.mrf.mxu0
        %6429 = vmatprep.mubr.f32.mxu0 0.0
        %6430 = vmatmul.mubr.f32.gmra.mxu0 %v6256
        %v6431 = vpop.f32.mrf.mxu0
        %v6432 = vadd.f32 0.0, %v6431
        %v6433 = vpop.f32.mrf.mxu0
        %6434 = vmatprep.mubr.f32.mxu0 0.0
        %6435 = vmatmul.mubr.f32.gmra.mxu0 %v6259
        %v6436 = vpop.f32.mrf.mxu0
        %v6437 = vadd.f32 0.0, %v6436
        %v6438 = vpop.f32.mrf.mxu0
        %6439 = vmatprep.mubr.f32.mxu0 0.0
        %6440 = vmatmul.mubr.f32.gmra.mxu0 %v6262
        %v6441 = vpop.f32.mrf.mxu0
        %v6442 = vadd.f32 0.0, %v6441
        %v6443 = vpop.f32.mrf.mxu0
        %6444 = vmatprep.mubr.f32.mxu0 0.0
        %6445 = vmatmul.mubr.f32.gmra.mxu0 %v6265
        %v6446 = vpop.f32.mrf.mxu0
        %v6447 = vadd.f32 0.0, %v6446
        %v6448 = vpop.f32.mrf.mxu0
        %6449 = vmatprep.mubr.f32.mxu0 0.0
        %6450 = vmatmul.mubr.f32.gmra.mxu0 %v6268
        %v6451 = vpop.f32.mrf.mxu0
        %v6452 = vadd.f32 0.0, %v6451
        %v6453 = vpop.f32.mrf.mxu0
        %6454 = vmatprep.mubr.f32.mxu0 0.0
        %6455 = vmatmul.mubr.f32.gmra.mxu0 %v6271
        %v6456 = vpop.f32.mrf.mxu0
        %v6457 = vadd.f32 0.0, %v6456
        %v6458 = vpop.f32.mrf.mxu0
        %6459 = vmatprep.mubr.f32.mxu0 0.0
        %6460 = vmatmul.mubr.f32.gmra.mxu0 %v6274
        %v6461 = vpop.f32.mrf.mxu0
        %v6462 = vadd.f32 0.0, %v6461
        %v6463 = vpop.f32.mrf.mxu0
        %6464 = vmatprep.mubr.f32.mxu0 0.0
        %6465 = vmatmul.mubr.f32.gmra.mxu0 %v6277
        %v6466 = vpop.f32.mrf.mxu0
        %v6467 = vadd.f32 0.0, %v6466
        %v6468 = vpop.f32.mrf.mxu0
        %6469 = vmatprep.mubr.f32.mxu0 0.0
        %6470 = vmatmul.mubr.f32.gmra.mxu0 %v6280
        %v6471 = vpop.f32.mrf.mxu0
        %v6472 = vadd.f32 0.0, %v6471
        %v6473 = vpop.f32.mrf.mxu0
        %6474 = vmatprep.mubr.f32.mxu0 0.0
        %6475 = vmatmul.mubr.f32.gmra.mxu0 %v6283
        %v6476 = vpop.f32.mrf.mxu0
        %v6477 = vadd.f32 0.0, %v6476
        %v6478 = vpop.f32.mrf.mxu0
        %6479 = vmatprep.mubr.f32.mxu0 0.0
        %6480 = vmatmul.mubr.f32.gmra.mxu0 %v6286
        %v6481 = vpop.f32.mrf.mxu0
        %v6482 = vadd.f32 0.0, %v6481
        %v6483 = vpop.f32.mrf.mxu0
        %6484 = vmatprep.mubr.f32.mxu0 0.0
        %6485 = vmatmul.mubr.f32.gmra.mxu0 %v6289
        %v6486 = vpop.f32.mrf.mxu0
        %v6487 = vadd.f32 0.0, %v6486
        %v6488 = vpop.f32.mrf.mxu0
        %6489 = vmatprep.mubr.f32.mxu0 0.0
        %6490 = vmatmul.mubr.f32.gmra.mxu0 %v6292
        %v6491 = vpop.f32.mrf.mxu0
        %v6492 = vadd.f32 0.0, %v6491
        %v6493 = vpop.f32.mrf.mxu0
        %6494 = vmatprep.mubr.f32.mxu0 0.0
        %6495 = vmatmul.mubr.f32.gmra.mxu0 %v6295
        %v6496 = vpop.f32.mrf.mxu0
        %v6497 = vadd.f32 0.0, %v6496
        %v6498 = vpop.f32.mrf.mxu0
        %6499 = vmatprep.mubr.f32.mxu0 0.0
        %6500 = vmatmul.mubr.f32.gmra.mxu0 %v6298
        %v6501 = vpop.f32.mrf.mxu0
        %v6502 = vadd.f32 0.0, %v6501
        %v6503 = vpop.f32.mrf.mxu0
        %6504 = vmatprep.mubr.f32.mxu0 0.0
        %6505 = vmatmul.mubr.f32.gmra.mxu0 %v6301
        %v6506 = vpop.f32.mrf.mxu0
        %v6507 = vadd.f32 0.0, %v6506
        %v6508 = vpop.f32.mrf.mxu0
        %6509 = vmatprep.mubr.f32.mxu0 0.0
        %6510 = vmatmul.mubr.f32.gmra.mxu0 %v6304
        %v6511 = vpop.f32.mrf.mxu0
        %v6512 = vadd.f32 0.0, %v6511
        %v6513 = vpop.f32.mrf.mxu0
        %6514 = vmatprep.mubr.f32.mxu0 0.0
        %6515 = vmatmul.mubr.f32.gmra.mxu0 %v6307
        %v6516 = vpop.f32.mrf.mxu0
        %v6517 = vadd.f32 0.0, %v6516
        %v6518 = vpop.f32.mrf.mxu0
        %6519 = vmatprep.mubr.f32.mxu0 0.0
        %6520 = vmatmul.mubr.f32.gmra.mxu0 %v6310
        %v6521 = vpop.f32.mrf.mxu0
        %v6522 = vadd.f32 0.0, %v6521
        %v6523 = vpop.f32.mrf.mxu0
        %6524 = vmatprep.mubr.f32.mxu0 0.0
        %6525 = vmatmul.mubr.f32.gmra.mxu0 %v6313
        %v6526 = vpop.f32.mrf.mxu0
        %v6527 = vadd.f32 0.0, %v6526
        %v6528 = vpop.f32.mrf.mxu0
        %6529 = vmatprep.mubr.f32.mxu0 0.0
        %6530 = vmatmul.mubr.f32.gmra.mxu0 %v6316
        %v6531 = vpop.f32.mrf.mxu0
        %v6532 = vadd.f32 0.0, %v6531
        %v6533 = vpop.f32.mrf.mxu0
        %6534 = vmatprep.mubr.f32.mxu0 0.0
        %6535 = vmatmul.mubr.f32.gmra.mxu0 %v6319
        %v6536 = vpop.f32.mrf.mxu0
        %v6537 = vadd.f32 0.0, %v6536
        %v6538 = vpop.f32.mrf.mxu0
        %6539 = vmatprep.mubr.f32.mxu0 0.0
        %6540 = vmatmul.mubr.f32.gmra.mxu0 %v6322
        %v6541 = vpop.f32.mrf.mxu0
        %v6542 = vadd.f32 0.0, %v6541
        %v6543 = vpop.f32.mrf.mxu0
        %6544 = vmatprep.mubr.f32.mxu0 0.0
        %6545 = vmatmul.mubr.f32.gmra.mxu0 %v6325
        %v6546 = vpop.f32.mrf.mxu0
        %v6547 = vadd.f32 0.0, %v6546
        %v6548 = vpop.f32.mrf.mxu0
        %6549 = vmatprep.mubr.f32.mxu0 0.0
        %6550 = vmatmul.mubr.f32.gmra.mxu0 %v6328
        %v6551 = vpop.f32.mrf.mxu0
        %v6552 = vadd.f32 0.0, %v6551
        %v6553 = vpop.f32.mrf.mxu0
        %6554 = vdwg.mxu0
        %v6555 = vadd.f32 %v5016, %v6397
        %v6556 = vadd.f32 %v5017, %v6402
        %v6557 = vadd.f32 %v5018, %v6407
        %v6558 = vadd.f32 %v5019, %v6412
        %v6559 = vadd.f32 %v5020, %v6417
        %v6560 = vadd.f32 %v5021, %v6422
        %v6561 = vadd.f32 %v5022, %v6427
        %v6562 = vadd.f32 %v5023, %v6432
        %v6563 = vadd.f32 %v5024, %v6437
        %v6564 = vadd.f32 %v5025, %v6442
        %v6565 = vadd.f32 %v5026, %v6447
        %v6566 = vadd.f32 %v5027, %v6452
        %v6567 = vadd.f32 %v5028, %v6457
        %v6568 = vadd.f32 %v5029, %v6462
        %v6569 = vadd.f32 %v5030, %v6467
        %v6570 = vadd.f32 %v5031, %v6472
        %v6571 = vadd.f32 %v5032, %v6477
        %v6572 = vadd.f32 %v5033, %v6482
        %v6573 = vadd.f32 %v5034, %v6487
        %v6574 = vadd.f32 %v5035, %v6492
        %v6575 = vadd.f32 %v5036, %v6497
        %v6576 = vadd.f32 %v5037, %v6502
        %v6577 = vadd.f32 %v5038, %v6507
        %v6578 = vadd.f32 %v5039, %v6512
        %v6579 = vadd.f32 %v5040, %v6517
        %v6580 = vadd.f32 %v5041, %v6522
        %v6581 = vadd.f32 %v5042, %v6527
        %v6582 = vadd.f32 %v5043, %v6532
        %v6583 = vadd.f32 %v5044, %v6537
        %v6584 = vadd.f32 %v5045, %v6542
        %v6585 = vadd.f32 %v5046, %v6547
        %v6586 = vadd.f32 %v5047, %v6552
        %v6588 = vlaneseq
        %v6589 = vshrl.u32 %v6588, 7
        %v6590 = vsub.s32 0, %v6589
        %v6591 = vrot.slane %v251, %v6590
        %v6593 = vadd.f32 %v6555, %v6591
        %v6594 = vadd.f32 %v6556, %v6591
        %v6595 = vadd.f32 %v6557, %v6591
        %v6596 = vadd.f32 %v6558, %v6591
        %v6597 = vadd.f32 %v6559, %v6591
        %v6598 = vadd.f32 %v6560, %v6591
        %v6599 = vadd.f32 %v6561, %v6591
        %v6600 = vadd.f32 %v6562, %v6591
        %v6601 = vadd.f32 %v6563, %v6591
        %v6602 = vadd.f32 %v6564, %v6591
        %v6603 = vadd.f32 %v6565, %v6591
        %v6604 = vadd.f32 %v6566, %v6591
        %v6605 = vadd.f32 %v6567, %v6591
        %v6606 = vadd.f32 %v6568, %v6591
        %v6607 = vadd.f32 %v6569, %v6591
        %v6608 = vadd.f32 %v6570, %v6591
        %v6609 = vadd.f32 %v6571, %v6591
        %v6610 = vadd.f32 %v6572, %v6591
        %v6611 = vadd.f32 %v6573, %v6591
        %v6612 = vadd.f32 %v6574, %v6591
        %v6613 = vadd.f32 %v6575, %v6591
        %v6614 = vadd.f32 %v6576, %v6591
        %v6615 = vadd.f32 %v6577, %v6591
        %v6616 = vadd.f32 %v6578, %v6591
        %v6617 = vadd.f32 %v6579, %v6591
        %v6618 = vadd.f32 %v6580, %v6591
        %v6619 = vadd.f32 %v6581, %v6591
        %v6620 = vadd.f32 %v6582, %v6591
        %v6621 = vadd.f32 %v6583, %v6591
        %v6622 = vadd.f32 %v6584, %v6591
        %v6623 = vadd.f32 %v6585, %v6591
        %v6624 = vadd.f32 %v6586, %v6591
        %6625 = vxpose.xlu0.b32.start [1/16] %v6593, 128
        %6626 = vxpose.xlu0.b32.cont [2/16] %v6594, 128
        %6627 = vxpose.xlu0.b32.cont [3/16] %v6595, 128
        %6628 = vxpose.xlu0.b32.cont [4/16] %v6596, 128
        %6629 = vxpose.xlu0.b32.cont [5/16] %v6597, 128
        %6630 = vxpose.xlu0.b32.cont [6/16] %v6598, 128
        %6631 = vxpose.xlu0.b32.cont [7/16] %v6599, 128
        %6632 = vxpose.xlu0.b32.cont [8/16] %v6600, 128
        %6633 = vxpose.xlu0.b32.cont [9/16] %v6601, 128
        %6634 = vxpose.xlu0.b32.cont [10/16] %v6602, 128
        %6635 = vxpose.xlu0.b32.cont [11/16] %v6603, 128
        %6636 = vxpose.xlu0.b32.cont [12/16] %v6604, 128
        %6637 = vxpose.xlu0.b32.cont [13/16] %v6605, 128
        %6638 = vxpose.xlu0.b32.cont [14/16] %v6606, 128
        %6639 = vxpose.xlu0.b32.cont [15/16] %v6607, 128
        %6640 = vxpose.xlu0.b32.end [16/16] %v6608, 128
        %v6641 = vpop.trf.xlu0
        %v6642 = vpop.trf.xlu0
        %v6643 = vpop.trf.xlu0
        %v6644 = vpop.trf.xlu0
        %v6645 = vpop.trf.xlu0
        %v6646 = vpop.trf.xlu0
        %v6647 = vpop.trf.xlu0
        %v6648 = vpop.trf.xlu0
        %v6649 = vpop.trf.xlu0
        %v6650 = vpop.trf.xlu0
        %v6651 = vpop.trf.xlu0
        %v6652 = vpop.trf.xlu0
        %v6653 = vpop.trf.xlu0
        %v6654 = vpop.trf.xlu0
        %v6655 = vpop.trf.xlu0
        %v6656 = vpop.trf.xlu0
        %6657 = vxpose.xlu0.b32.start [1/16] %v6609, 128
        %6658 = vxpose.xlu0.b32.cont [2/16] %v6610, 128
        %6659 = vxpose.xlu0.b32.cont [3/16] %v6611, 128
        %6660 = vxpose.xlu0.b32.cont [4/16] %v6612, 128
        %6661 = vxpose.xlu0.b32.cont [5/16] %v6613, 128
        %6662 = vxpose.xlu0.b32.cont [6/16] %v6614, 128
        %6663 = vxpose.xlu0.b32.cont [7/16] %v6615, 128
        %6664 = vxpose.xlu0.b32.cont [8/16] %v6616, 128
        %6665 = vxpose.xlu0.b32.cont [9/16] %v6617, 128
        %6666 = vxpose.xlu0.b32.cont [10/16] %v6618, 128
        %6667 = vxpose.xlu0.b32.cont [11/16] %v6619, 128
        %6668 = vxpose.xlu0.b32.cont [12/16] %v6620, 128
        %6669 = vxpose.xlu0.b32.cont [13/16] %v6621, 128
        %6670 = vxpose.xlu0.b32.cont [14/16] %v6622, 128
        %6671 = vxpose.xlu0.b32.cont [15/16] %v6623, 128
        %6672 = vxpose.xlu0.b32.end [16/16] %v6624, 128
        %v6673 = vpop.trf.xlu0
        %v6674 = vpop.trf.xlu0
        %v6675 = vpop.trf.xlu0
        %v6676 = vpop.trf.xlu0
        %v6677 = vpop.trf.xlu0
        %v6678 = vpop.trf.xlu0
        %v6679 = vpop.trf.xlu0
        %v6680 = vpop.trf.xlu0
        %v6681 = vpop.trf.xlu0
        %v6682 = vpop.trf.xlu0
        %v6683 = vpop.trf.xlu0
        %v6684 = vpop.trf.xlu0
        %v6685 = vpop.trf.xlu0
        %v6686 = vpop.trf.xlu0
        %v6687 = vpop.trf.xlu0
        %v6688 = vpop.trf.xlu0
        %6689 = vst [vmem:[%s217] sm:$0xff] %v6641
        %6690 = vst [vmem:[%s217 + $0x8] sm:$0xff] %v6673
        %6691 = vst [vmem:[%s217 + $0x10] sm:$0xff] %v6642
        %6692 = vst [vmem:[%s217 + $0x18] sm:$0xff] %v6674
        %6693 = vst [vmem:[%s217 + $0x20] sm:$0xff] %v6643
        %6694 = vst [vmem:[%s217 + $0x28] sm:$0xff] %v6675
        %6695 = vst [vmem:[%s217 + $0x30] sm:$0xff] %v6644
        %6696 = vst [vmem:[%s217 + $0x38] sm:$0xff] %v6676
        %s6697 = sand.u32 %s137, 1
        %s6698 = scalar_lea.sflag [#allocation3], %s6697
        %s6699 = sand.u32 %s137, 1
        %s6700 = smul.addr %s6699, 64
        %s6701 = scalar_lea.vmem [#allocation2], %s6700
        // Predicated region
        $region41: #{tpu_custom_call.1} parent=39 // pred_check
          %p6702 = pneg %p147
        $region42: #{tpu_custom_call.1} parent=39 // pred_check_branch
          %6704 = sbr.rel (%p6702) target = $region44
        $region43: #{tpu_custom_call.1} parent=39 // pred_region
          %s6706 = ssub.s32 1024, 1024
          %6707 = vsyncadd %s6698, %s6706
          %s6708 = smul.addr %s19, 8
          %s6709 = smul.addr %s6708, 128
          %s6710 = scalar_lea.hbm %s5, %s6709
          %s6711 = sshll.u32 %s6701, 4
          %s6712 = int_to_ptr.vmem [resolvable:$true] %s6711
          %6717 = dma.vmem_to_hbm [thread:$0]  %s6712, 1024, %s6710, %s6698, 256, 256, 16
        $region44: #{tpu_custom_call.1} parent=39 // pred_fallthru
          _
      $region40: #{tpu_custom_call.1} parent=5 // pred_fallthru
        _
      %p6718 = scmp.le.s32.totalorder 2, %s14
      // Predicated region
      $region45: #{tpu_custom_call.1} parent=5 // pred_check
        %p6719 = pneg %p6718
      $region46: #{tpu_custom_call.1} parent=5 // pred_check_branch
        %6721 = sbr.rel (%p6719) target = $region48
      $region47: #{tpu_custom_call.1} parent=5 // pred_region
        %s6722 = ssub.s32 %s14, 2
        // Predicated region
        $region49: #{tpu_custom_call.1} parent=47 // pred_check
          %p6723 = pneg %p153
        $region50: #{tpu_custom_call.1} parent=47 // pred_check_branch
          %6725 = sbr.rel (%p6723) target = $region52
        $region51: #{tpu_custom_call.1} parent=47 // pred_region
          %s6726 = sand.u32 %s138, 1
          %s6727 = scalar_lea.sflag [#allocation3], %s6726
          %s6728 = sand.u32 %s138, 1
          %s6729 = smul.addr %s6728, 64
          %s6730 = scalar_lea.vmem [#allocation2], %s6729
          %6731 = dma.done %s6727, 1024
        $region52: #{tpu_custom_call.1} parent=47 // pred_fallthru
          _
      $region48: #{tpu_custom_call.1} parent=5 // pred_fallthru
        _
    $region6: #{tpu_custom_call.1} parent=1 // loop_footer
      %s18 = sadd.s32 1, %s14
    $region7: #{tpu_custom_call.1} parent=1 // loop_footer_branch
      %13 = sbr.rel target = $region3
    $region8: #{tpu_custom_call.1} parent=1 // loop_exit
      _
    %6732 = vsyncpa [#allocation3], 1
    %s6733 = scalar_lea.sflag [#allocation3], 1
    %6734 = vsyncpa %s6733, 1

</llo_original>
